<compile_context>
chip_gen: v5e
topology: v5e:2x2
jax: 0.10.0
libtpu: 0.0.40
codegen_flags: <defaults>
</compile_context>

<pallas_src>
import functools

import jax
import jax.numpy as jnp
from jax import lax
from jax.experimental import pallas as pl
from jax.experimental.pallas import tpu as pltpu

BN_EPS = 1e-5


# ---------------------------------------------------------------------------
# Fused whole-DenseBlock kernel (one batch image per grid step)
# ---------------------------------------------------------------------------
def _dense_block_kernel(*refs, H, W, C0, K, C4, L):
    """refs = (x, [s1, b1, w1, s2, b2, w2] * L, out).

    x   : (1, C0, HW) f32   block input, channels on sublanes, HW on lanes
    s1  : (C, 1)  f32       folded BN1 scale  (C = C0 + l*K, live prefix only)
    b1  : (C, 1)  f32       folded BN1 bias
    w1  : (C4, C) bf16      1x1 conv weight (PyTorch conv1.weight squeezed)
    s2  : (C4, 1) f32       folded BN2 scale
    b2  : (C4, 1) f32       folded BN2 bias
    w2  : (9, K, C4) bf16   3x3 conv weight, tap-major (dy*3+dx, out, in)
    out : (1, CT, HW) f32   channel slab; doubles as the VMEM-resident working
                            buffer for the whole block (read back each layer)
    """
    x_ref = refs[0]
    o_ref = refs[1 + 6 * L]
    HW = H * W
    # Zero-pad width for the flattened spatial axis: >= W+1 and lane-aligned so
    # the concatenate below is pure vreg stacking.
    PAD = ((W + 1 + 127) // 128) * 128

    # Seed the slab with the input's C0 channels (dense 256-lane rows).
    o_ref[0, :C0, :] = x_ref[0]

    # Lane masks fixing the w-direction wrap of the +/-1 column shifts.
    col = lax.broadcasted_iota(jnp.int32, (1, HW), 1) % W
    mask_left = (col != 0).astype(jnp.float32)        # tap needs w-1 >= 0
    mask_right = (col != W - 1).astype(jnp.float32)   # tap needs w+1 <  W

    for l in range(L):
        s1, b1, w1, s2, b2, w2 = refs[1 + 6 * l: 1 + 6 * (l + 1)]
        C = C0 + l * K                                 # live channels

        # BN1 + ReLU on the live channel prefix of the slab (f32 VPU math).
        x_live = o_ref[0, :C, :]                       # (C, HW)
        t = jnp.maximum(x_live * s1[...] + b1[...], 0.0)

        # 1x1 conv == MXU matmul over exactly the live channels.
        b = jnp.dot(w1[...], t.astype(jnp.bfloat16),
                    preferred_element_type=jnp.float32)        # (C4, HW) f32

        # BN2 + ReLU.
        u = jnp.maximum(b * s2[...] + b2[...], 0.0)            # (C4, HW) f32

        # 3x3 conv (stride 1, pad 1) as 9 shift-and-accumulate matmuls.
        # Flattened spatial index o = h*W + w; tap (dy, dx) needs
        # u[:, o + (dy-1)*W + (dx-1)] with zeros outside the image.  The h
        # boundary is handled by the zero padding; the w boundary by the two
        # lane masks (applied to the small (K, HW) tap output — equivalent to
        # masking the input lanes since the dot contracts only over channels).
        zpad = jnp.zeros((C4, PAD), jnp.float32)
        upad = jnp.concatenate([zpad, u, zpad], axis=1)        # (C4, HW + 2*PAD)
        acc = jnp.zeros((K, HW), jnp.float32)
        for dy in range(3):
            for dx in range(3):
                start = PAD + (dy - 1) * W + (dx - 1)
                tap = upad[:, start:start + HW]                # (C4, HW)
                part = jnp.dot(w2[dy * 3 + dx], tap.astype(jnp.bfloat16),
                               preferred_element_type=jnp.float32)  # (K, HW)
                if dx == 0:
                    part = part * mask_left
                elif dx == 2:
                    part = part * mask_right
                acc = acc + part

        # Dense concat for free: write the K new channels at this layer's
        # (static) channel offset as K full 256-lane rows.
        o_ref[0, C:C + K, :] = acc.astype(o_ref.dtype)
        # TODO(synk): F.dropout(p=0.2) is training-only; inference == identity.


def _dense_block_call(x, flat_params, *, C0, K, C4, L, H, W):
    N = x.shape[0]
    HW = H * W
    CT = C0 + L * K

    in_specs = [pl.BlockSpec((1, C0, HW), lambda n: (n, 0, 0))]
    for l in range(L):
        C = C0 + l * K
        in_specs += [
            pl.BlockSpec((C, 1), lambda n: (0, 0)),            # s1
            pl.BlockSpec((C, 1), lambda n: (0, 0)),            # b1
            pl.BlockSpec((C4, C), lambda n: (0, 0)),           # w1
            pl.BlockSpec((C4, 1), lambda n: (0, 0)),           # s2
            pl.BlockSpec((C4, 1), lambda n: (0, 0)),           # b2
            pl.BlockSpec((9, K, C4), lambda n: (0, 0, 0)),     # w2
        ]

    flops = 2 * N * HW * sum((C0 + l * K) * C4 + 9 * C4 * K for l in range(L))
    bytes_accessed = 4 * (x.size + N * CT * HW) + sum(
        int(p.size) * p.dtype.itemsize for p in flat_params)

    kernel = functools.partial(_dense_block_kernel,
                               H=H, W=W, C0=C0, K=K, C4=C4, L=L)
    return pl.pallas_call(
        kernel,
        out_shape=jax.ShapeDtypeStruct((N, CT, HW), jnp.float32),
        grid=(N,),
        in_specs=in_specs,
        out_specs=pl.BlockSpec((1, CT, HW), lambda n: (n, 0, 0)),
        compiler_params=pltpu.CompilerParams(
            dimension_semantics=("parallel",)),    # v7x: batch split over 2 TCs
        cost_estimate=pl.CostEstimate(flops=flops, transcendentals=0,
                                      bytes_accessed=bytes_accessed),
    )(x, *flat_params)


# ---------------------------------------------------------------------------
# DenseBlock forward
# ---------------------------------------------------------------------------
@functools.partial(jax.jit, static_argnames=("growth_rate",))
def dense_block_fwd(x_nchw, params, growth_rate):
    """DenseBlock.forward: cat([x, out_1, ..., out_L], channel dim). NCHW in/out."""
    N, C0, H, W = x_nchw.shape
    L = len(params)
    K = growth_rate
    C4 = 4 * K
    CT = C0 + L * K
    x = x_nchw.reshape(N, C0, H * W).astype(jnp.float32)   # NCHW -> (N, C, HW)
    flat = []
    for p in params:
        flat += [p["s1"], p["b1"], p["w1"], p["s2"], p["b2"], p["w2"]]
    out = _dense_block_call(x, flat, C0=C0, K=K, C4=C4, L=L, H=H, W=W)
    return out.reshape(N, CT, H, W)                        # (N, C, HW) -> NCHW


# ---------------------------------------------------------------------------
# Pure-JAX reference (f32, lax.conv) for a correctness check
# ---------------------------------------------------------------------------
def dense_block_ref(x_nchw, params, growth_rate):
    K = growth_rate
    C4 = 4 * K
    feats = x_nchw.astype(jnp.float32)
    for p in params:
        s1 = p["s1"][:, 0][None, :, None, None]
        b1 = p["b1"][:, 0][None, :, None, None]
        t = jnp.maximum(feats * s1 + b1, 0.0)
        b = jnp.einsum("nchw,dc->ndhw", t, p["w1"].astype(jnp.float32))
        s2 = p["s2"][:, 0][None, :, None, None]
        b2 = p["b2"][:, 0][None, :, None, None]
        u = jnp.maximum(b * s2 + b2, 0.0)
        w2 = p["w2"].astype(jnp.float32).reshape(3, 3, K, C4)   # (dy, dx, K, C4)
        w2 = jnp.transpose(w2, (2, 3, 0, 1))                     # OIHW
        out = lax.conv_general_dilated(
            u, w2, window_strides=(1, 1), padding=((1, 1), (1, 1)),
            dimension_numbers=("NCHW", "OIHW", "NCHW"))
        feats = jnp.concatenate([feats, out], axis=1)
    return feats


# ---------------------------------------------------------------------------
# Deterministic synthetic parameters (match DenseLayer shapes, BN folded)
# ---------------------------------------------------------------------------
def init_dense_block_params(key, n_layers, in_c, growth_rate):
    """When loading real PyTorch weights:
       conv1.weight (C4, C, 1, 1) -> squeeze last two dims          -> w1 (C4, C)
       conv2.weight (K, C4, 3, 3) -> permute(2,3,0,1).reshape(9,K,C4) -> w2
       norm*: scale = gamma/sqrt(var+eps), bias = beta - mean*scale, as (C, 1)."""
    params = []
    K = growth_rate
    C4 = 4 * K
    for l in range(n_layers):
        C = in_c + l * K
        ks = jax.random.split(jax.random.fold_in(key, l), 10)

        # BatchNorm1 (inference): fold gamma/beta/running stats into scale/bias.
        g1 = jax.random.uniform(ks[0], (C,), minval=0.5, maxval=1.5)
        be1 = jax.random.normal(ks[1], (C,)) * 0.1
        m1 = jax.random.normal(ks[2], (C,)) * 0.1
        v1 = jax.random.uniform(ks[3], (C,), minval=0.5, maxval=1.5)
        s1 = g1 / jnp.sqrt(v1 + BN_EPS)
        b1 = be1 - m1 * s1

        w1 = jax.random.normal(ks[4], (C4, C)) * (1.0 / jnp.sqrt(C))

        # BatchNorm2.
        g2 = jax.random.uniform(ks[5], (C4,), minval=0.5, maxval=1.5)
        be2 = jax.random.normal(ks[6], (C4,)) * 0.1
        m2 = jax.random.normal(ks[7], (C4,)) * 0.1
        v2 = jax.random.uniform(ks[8], (C4,), minval=0.5, maxval=1.5)
        s2 = g2 / jnp.sqrt(v2 + BN_EPS)
        b2 = be2 - m2 * s2

        w2 = jax.random.normal(ks[9], (3, 3, K, C4)) * (1.0 / jnp.sqrt(9 * C4))

        params.append(dict(
            s1=s1.reshape(C, 1).astype(jnp.float32),
            b1=b1.reshape(C, 1).astype(jnp.float32),
            w1=w1.astype(jnp.bfloat16),
            s2=s2.reshape(C4, 1).astype(jnp.float32),
            b2=b2.reshape(C4, 1).astype(jnp.float32),
            w2=w2.reshape(9, K, C4).astype(jnp.bfloat16),
        ))
    return params


# ---------------------------------------------------------------------------
if __name__ == "__main__":
    key = jax.random.PRNGKey(0)

    # Small shapes consistent with DenseBlock(n_layers, in_c, growth_rate).
    N, C0, H, W = 2, 12, 16, 16
    growth_rate, n_layers = 12, 3

    x = jax.random.normal(jax.random.fold_in(key, 123), (N, C0, H, W),
                          dtype=jnp.float32)
    params = init_dense_block_params(key, n_layers, C0, growth_rate)

    y = dense_block_fwd(x, params, growth_rate=growth_rate)
    y = jax.block_until_ready(y)

    expected_channels = C0 + n_layers * growth_rate
    assert y.shape == (N, expected_channels, H, W), y.shape
    assert bool(jnp.all(jnp.isfinite(y)))

    # Correctness vs pure-JAX reference.  The only difference is bf16 rounding
    # of the matmul activations (weights are identical bf16 values, accumulation
    # is f32 in both), so a 5e-2 normalized tolerance is comfortably tight.
    y_ref = dense_block_ref(x, params, growth_rate)
    err = float(jnp.max(jnp.abs(y - y_ref) / (1.0 + jnp.abs(y_ref))))
    assert err < 0.05, err

    print("KERNEL_OK")
</pallas_src>

<mosaic_0001>
module attributes {stable_mosaic.version = 11 : i64} {
  func.func @_dense_block_kernel(%arg0: i32, %arg1: memref<1x12x256xf32, #tpu.memory_space<vmem>>, %arg2: memref<12x1xf32, #tpu.memory_space<vmem>>, %arg3: memref<12x1xf32, #tpu.memory_space<vmem>>, %arg4: memref<48x12xbf16, #tpu.memory_space<vmem>>, %arg5: memref<48x1xf32, #tpu.memory_space<vmem>>, %arg6: memref<48x1xf32, #tpu.memory_space<vmem>>, %arg7: memref<9x12x48xbf16, #tpu.memory_space<vmem>>, %arg8: memref<24x1xf32, #tpu.memory_space<vmem>>, %arg9: memref<24x1xf32, #tpu.memory_space<vmem>>, %arg10: memref<48x24xbf16, #tpu.memory_space<vmem>>, %arg11: memref<48x1xf32, #tpu.memory_space<vmem>>, %arg12: memref<48x1xf32, #tpu.memory_space<vmem>>, %arg13: memref<9x12x48xbf16, #tpu.memory_space<vmem>>, %arg14: memref<36x1xf32, #tpu.memory_space<vmem>>, %arg15: memref<36x1xf32, #tpu.memory_space<vmem>>, %arg16: memref<48x36xbf16, #tpu.memory_space<vmem>>, %arg17: memref<48x1xf32, #tpu.memory_space<vmem>>, %arg18: memref<48x1xf32, #tpu.memory_space<vmem>>, %arg19: memref<9x12x48xbf16, #tpu.memory_space<vmem>>, %arg20: memref<1x48x256xf32, #tpu.memory_space<vmem>>) attributes {dimension_semantics = [#tpu.dimension_semantics<parallel>], iteration_bounds = array<i64: 2>, scalar_prefetch = 0 : i64, scratch_operands = 0 : i64, tpu.core_type = #tpu.core_type<tc>, window_params = [{transform_indices = @transform_0, window_bounds = array<i64: 1, 12, 256>}, {pipeline_mode = #tpu.pipeline_mode<synchronous>, transform_indices = @transform_1, window_bounds = array<i64: 12, 1>}, {pipeline_mode = #tpu.pipeline_mode<synchronous>, transform_indices = @transform_2, window_bounds = array<i64: 12, 1>}, {pipeline_mode = #tpu.pipeline_mode<synchronous>, transform_indices = @transform_3, window_bounds = array<i64: 48, 12>}, {pipeline_mode = #tpu.pipeline_mode<synchronous>, transform_indices = @transform_4, window_bounds = array<i64: 48, 1>}, {pipeline_mode = #tpu.pipeline_mode<synchronous>, transform_indices = @transform_5, window_bounds = array<i64: 48, 1>}, {pipeline_mode = #tpu.pipeline_mode<synchronous>, transform_indices = @transform_6, window_bounds = array<i64: 9, 12, 48>}, {pipeline_mode = #tpu.pipeline_mode<synchronous>, transform_indices = @transform_7, window_bounds = array<i64: 24, 1>}, {pipeline_mode = #tpu.pipeline_mode<synchronous>, transform_indices = @transform_8, window_bounds = array<i64: 24, 1>}, {pipeline_mode = #tpu.pipeline_mode<synchronous>, transform_indices = @transform_9, window_bounds = array<i64: 48, 24>}, {pipeline_mode = #tpu.pipeline_mode<synchronous>, transform_indices = @transform_10, window_bounds = array<i64: 48, 1>}, {pipeline_mode = #tpu.pipeline_mode<synchronous>, transform_indices = @transform_11, window_bounds = array<i64: 48, 1>}, {pipeline_mode = #tpu.pipeline_mode<synchronous>, transform_indices = @transform_12, window_bounds = array<i64: 9, 12, 48>}, {pipeline_mode = #tpu.pipeline_mode<synchronous>, transform_indices = @transform_13, window_bounds = array<i64: 36, 1>}, {pipeline_mode = #tpu.pipeline_mode<synchronous>, transform_indices = @transform_14, window_bounds = array<i64: 36, 1>}, {pipeline_mode = #tpu.pipeline_mode<synchronous>, transform_indices = @transform_15, window_bounds = array<i64: 48, 36>}, {pipeline_mode = #tpu.pipeline_mode<synchronous>, transform_indices = @transform_16, window_bounds = array<i64: 48, 1>}, {pipeline_mode = #tpu.pipeline_mode<synchronous>, transform_indices = @transform_17, window_bounds = array<i64: 48, 1>}, {pipeline_mode = #tpu.pipeline_mode<synchronous>, transform_indices = @transform_18, window_bounds = array<i64: 9, 12, 48>}, {transform_indices = @transform_19, window_bounds = array<i64: 1, 48, 256>}]} {
    %c0 = arith.constant 0 : index
    %c0_0 = arith.constant 0 : index
    %c0_1 = arith.constant 0 : index
    %0 = vector.load %arg1[%c0, %c0_0, %c0_1] : memref<1x12x256xf32, #tpu.memory_space<vmem>>, vector<1x12x256xf32>
    %1 = vector.shape_cast %0 : vector<1x12x256xf32> to vector<12x256xf32>
    %c0_2 = arith.constant 0 : index
    %c0_3 = arith.constant 0 : index
    %c0_4 = arith.constant 0 : index
    %2 = vector.load %arg20[%c0_2, %c0_3, %c0_4] : memref<1x48x256xf32, #tpu.memory_space<vmem>>, vector<1x12x256xf32>
    %3 = vector.shape_cast %2 : vector<1x12x256xf32> to vector<12x256xf32>
    %4 = vector.shape_cast %1 : vector<12x256xf32> to vector<1x12x256xf32>
    tpu.vector_store %arg20[%c0_2, %c0_3, %c0_4], %4 {strides = array<i32>} : memref<1x48x256xf32, #tpu.memory_space<vmem>>, vector<1x12x256xf32>,
    %5 = tpu.iota {dimensions = array<i32: 1>} : vector<1x256xi32>
    %c16_i32 = arith.constant 16 : i32
    %c0_i32 = arith.constant 0 : i32
    %6 = arith.cmpi eq, %c16_i32, %c0_i32 : i32
    %c1_i32 = arith.constant 1 : i32
    %7 = arith.select %6, %c1_i32, %c16_i32 : i32
    %8 = vector.broadcast %7 : i32 to vector<1x256xi32>
    %9 = arith.remsi %5, %8 : vector<1x256xi32>
    %c0_i32_5 = arith.constant 0 : i32
    %10 = vector.broadcast %c0_i32_5 : i32 to vector<1x256xi32>
    %11 = arith.cmpi ne, %9, %10 : vector<1x256xi32>
    %c0_i32_6 = arith.constant 0 : i32
    %12 = vector.broadcast %c0_i32_6 : i32 to vector<1x256xi32>
    %13 = arith.cmpi slt, %9, %12 : vector<1x256xi32>
    %c0_i32_7 = arith.constant 0 : i32
    %14 = arith.cmpi slt, %7, %c0_i32_7 : i32
    %15 = vector.broadcast %14 : i1 to vector<1x256xi1>
    %16 = vector.broadcast %15 : vector<1x256xi1> to vector<1x256xi1>
    %17 = arith.xori %13, %16 : vector<1x256xi1>
    %18 = arith.andi %17, %11 : vector<1x256xi1>
    %19 = vector.broadcast %7 : i32 to vector<1x256xi32>
    %20 = arith.addi %9, %19 : vector<1x256xi32>
    %21 = arith.select %18, %20, %9 : vector<1x256xi1>, vector<1x256xi32>
    %c0_i32_8 = arith.constant 0 : i32
    %22 = vector.broadcast %c0_i32_8 : i32 to vector<1x256xi32>
    %23 = arith.cmpi ne, %21, %22 : vector<1x256xi32>
    %24 = arith.extui %23 : vector<1x256xi1> to vector<1x256xi32>
    %25 = arith.sitofp %24 : vector<1x256xi32> to vector<1x256xf32>
    %c15_i32 = arith.constant 15 : i32
    %26 = vector.broadcast %c15_i32 : i32 to vector<1x256xi32>
    %27 = arith.cmpi ne, %21, %26 : vector<1x256xi32>
    %28 = arith.extui %27 : vector<1x256xi1> to vector<1x256xi32>
    %29 = arith.sitofp %28 : vector<1x256xi32> to vector<1x256xf32>
    %c0_9 = arith.constant 0 : index
    %c0_10 = arith.constant 0 : index
    %c0_11 = arith.constant 0 : index
    %30 = vector.load %arg20[%c0_9, %c0_10, %c0_11] : memref<1x48x256xf32, #tpu.memory_space<vmem>>, vector<1x12x256xf32>
    %31 = vector.shape_cast %30 : vector<1x12x256xf32> to vector<12x256xf32>
    %c0_12 = arith.constant 0 : index
    %c0_13 = arith.constant 0 : index
    %32 = vector.load %arg2[%c0_12, %c0_13] : memref<12x1xf32, #tpu.memory_space<vmem>>, vector<12x1xf32>
    %33 = vector.broadcast %32 : vector<12x1xf32> to vector<12x256xf32>
    %34 = arith.mulf %31, %33 : vector<12x256xf32>
    %c0_14 = arith.constant 0 : index
    %c0_15 = arith.constant 0 : index
    %35 = vector.load %arg3[%c0_14, %c0_15] : memref<12x1xf32, #tpu.memory_space<vmem>>, vector<12x1xf32>
    %36 = vector.broadcast %35 : vector<12x1xf32> to vector<12x256xf32>
    %37 = arith.addf %34, %36 : vector<12x256xf32>
    %cst = arith.constant 0.000000e+00 : f32
    %38 = vector.broadcast %cst : f32 to vector<12x256xf32>
    %39 = arith.maximumf %37, %38 : vector<12x256xf32>
    %c0_16 = arith.constant 0 : index
    %c0_17 = arith.constant 0 : index
    %40 = vector.load %arg4[%c0_16, %c0_17] : memref<48x12xbf16, #tpu.memory_space<vmem>>, vector<48x12xbf16>
    %41 = arith.truncf %39 : vector<12x256xf32> to vector<12x256xbf16>
    %cst_18 = arith.constant dense<0.000000e+00> : vector<48x256xf32>
    %42 = tpu.matmul %40, %41, %cst_18 {dimension_numbers = #tpu.dot_dimension_numbers<[1], [0], [0], [1], [0, 0, 1, 1], [], []>} : vector<48x12xbf16>, vector<12x256xbf16>, vector<48x256xf32> -> vector<48x256xf32>
    %c0_19 = arith.constant 0 : index
    %c0_20 = arith.constant 0 : index
    %43 = vector.load %arg5[%c0_19, %c0_20] : memref<48x1xf32, #tpu.memory_space<vmem>>, vector<48x1xf32>
    %44 = vector.broadcast %43 : vector<48x1xf32> to vector<48x256xf32>
    %45 = arith.mulf %42, %44 : vector<48x256xf32>
    %c0_21 = arith.constant 0 : index
    %c0_22 = arith.constant 0 : index
    %46 = vector.load %arg6[%c0_21, %c0_22] : memref<48x1xf32, #tpu.memory_space<vmem>>, vector<48x1xf32>
    %47 = vector.broadcast %46 : vector<48x1xf32> to vector<48x256xf32>
    %48 = arith.addf %45, %47 : vector<48x256xf32>
    %cst_23 = arith.constant 0.000000e+00 : f32
    %49 = vector.broadcast %cst_23 : f32 to vector<48x256xf32>
    %50 = arith.maximumf %48, %49 : vector<48x256xf32>
    %cst_24 = arith.constant 0.000000e+00 : f32
    %51 = vector.broadcast %cst_24 : f32 to vector<48x128xf32>
    %52 = tpu.concatenate %51, %50, %51 in 1 : vector<48x128xf32>, vector<48x256xf32>, vector<48x128xf32> -> vector<48x512xf32>
    %cst_25 = arith.constant 0.000000e+00 : f32
    %53 = vector.broadcast %cst_25 : f32 to vector<12x256xf32>
    %54 = vector.extract_strided_slice %52 {offsets = [0, 111], sizes = [48, 256], strides = [1, 1]} : vector<48x512xf32> to vector<48x256xf32>
    %c0_26 = arith.constant 0 : index
    %c0_27 = arith.constant 0 : index
    %c0_28 = arith.constant 0 : index
    %55 = vector.load %arg7[%c0_26, %c0_27, %c0_28] : memref<9x12x48xbf16, #tpu.memory_space<vmem>>, vector<1x12x48xbf16>
    %56 = vector.shape_cast %55 : vector<1x12x48xbf16> to vector<12x48xbf16>
    %57 = arith.truncf %54 : vector<48x256xf32> to vector<48x256xbf16>
    %cst_29 = arith.constant dense<0.000000e+00> : vector<12x256xf32>
    %58 = tpu.matmul %56, %57, %cst_29 {dimension_numbers = #tpu.dot_dimension_numbers<[1], [0], [0], [1], [0, 0, 1, 1], [], []>} : vector<12x48xbf16>, vector<48x256xbf16>, vector<12x256xf32> -> vector<12x256xf32>
    %59 = vector.broadcast %25 : vector<1x256xf32> to vector<12x256xf32>
    %60 = arith.mulf %58, %59 : vector<12x256xf32>
    %61 = arith.addf %53, %60 : vector<12x256xf32>
    %62 = vector.extract_strided_slice %52 {offsets = [0, 112], sizes = [48, 256], strides = [1, 1]} : vector<48x512xf32> to vector<48x256xf32>
    %c1 = arith.constant 1 : index
    %c0_30 = arith.constant 0 : index
    %c0_31 = arith.constant 0 : index
    %63 = vector.load %arg7[%c1, %c0_30, %c0_31] : memref<9x12x48xbf16, #tpu.memory_space<vmem>>, vector<1x12x48xbf16>
    %64 = vector.shape_cast %63 : vector<1x12x48xbf16> to vector<12x48xbf16>
    %65 = arith.truncf %62 : vector<48x256xf32> to vector<48x256xbf16>
    %cst_32 = arith.constant dense<0.000000e+00> : vector<12x256xf32>
    %66 = tpu.matmul %64, %65, %cst_32 {dimension_numbers = #tpu.dot_dimension_numbers<[1], [0], [0], [1], [0, 0, 1, 1], [], []>} : vector<12x48xbf16>, vector<48x256xbf16>, vector<12x256xf32> -> vector<12x256xf32>
    %67 = arith.addf %61, %66 : vector<12x256xf32>
    %68 = vector.extract_strided_slice %52 {offsets = [0, 113], sizes = [48, 256], strides = [1, 1]} : vector<48x512xf32> to vector<48x256xf32>
    %c2 = arith.constant 2 : index
    %c0_33 = arith.constant 0 : index
    %c0_34 = arith.constant 0 : index
    %69 = vector.load %arg7[%c2, %c0_33, %c0_34] : memref<9x12x48xbf16, #tpu.memory_space<vmem>>, vector<1x12x48xbf16>
    %70 = vector.shape_cast %69 : vector<1x12x48xbf16> to vector<12x48xbf16>
    %71 = arith.truncf %68 : vector<48x256xf32> to vector<48x256xbf16>
    %cst_35 = arith.constant dense<0.000000e+00> : vector<12x256xf32>
    %72 = tpu.matmul %70, %71, %cst_35 {dimension_numbers = #tpu.dot_dimension_numbers<[1], [0], [0], [1], [0, 0, 1, 1], [], []>} : vector<12x48xbf16>, vector<48x256xbf16>, vector<12x256xf32> -> vector<12x256xf32>
    %73 = vector.broadcast %29 : vector<1x256xf32> to vector<12x256xf32>
    %74 = arith.mulf %72, %73 : vector<12x256xf32>
    %75 = arith.addf %67, %74 : vector<12x256xf32>
    %76 = vector.extract_strided_slice %52 {offsets = [0, 127], sizes = [48, 256], strides = [1, 1]} : vector<48x512xf32> to vector<48x256xf32>
    %c3 = arith.constant 3 : index
    %c0_36 = arith.constant 0 : index
    %c0_37 = arith.constant 0 : index
    %77 = vector.load %arg7[%c3, %c0_36, %c0_37] : memref<9x12x48xbf16, #tpu.memory_space<vmem>>, vector<1x12x48xbf16>
    %78 = vector.shape_cast %77 : vector<1x12x48xbf16> to vector<12x48xbf16>
    %79 = arith.truncf %76 : vector<48x256xf32> to vector<48x256xbf16>
    %cst_38 = arith.constant dense<0.000000e+00> : vector<12x256xf32>
    %80 = tpu.matmul %78, %79, %cst_38 {dimension_numbers = #tpu.dot_dimension_numbers<[1], [0], [0], [1], [0, 0, 1, 1], [], []>} : vector<12x48xbf16>, vector<48x256xbf16>, vector<12x256xf32> -> vector<12x256xf32>
    %81 = vector.broadcast %25 : vector<1x256xf32> to vector<12x256xf32>
    %82 = arith.mulf %80, %81 : vector<12x256xf32>
    %83 = arith.addf %75, %82 : vector<12x256xf32>
    %84 = vector.extract_strided_slice %52 {offsets = [0, 128], sizes = [48, 256], strides = [1, 1]} : vector<48x512xf32> to vector<48x256xf32>
    %c4 = arith.constant 4 : index
    %c0_39 = arith.constant 0 : index
    %c0_40 = arith.constant 0 : index
    %85 = vector.load %arg7[%c4, %c0_39, %c0_40] : memref<9x12x48xbf16, #tpu.memory_space<vmem>>, vector<1x12x48xbf16>
    %86 = vector.shape_cast %85 : vector<1x12x48xbf16> to vector<12x48xbf16>
    %87 = arith.truncf %84 : vector<48x256xf32> to vector<48x256xbf16>
    %cst_41 = arith.constant dense<0.000000e+00> : vector<12x256xf32>
    %88 = tpu.matmul %86, %87, %cst_41 {dimension_numbers = #tpu.dot_dimension_numbers<[1], [0], [0], [1], [0, 0, 1, 1], [], []>} : vector<12x48xbf16>, vector<48x256xbf16>, vector<12x256xf32> -> vector<12x256xf32>
    %89 = arith.addf %83, %88 : vector<12x256xf32>
    %90 = vector.extract_strided_slice %52 {offsets = [0, 129], sizes = [48, 256], strides = [1, 1]} : vector<48x512xf32> to vector<48x256xf32>
    %c5 = arith.constant 5 : index
    %c0_42 = arith.constant 0 : index
    %c0_43 = arith.constant 0 : index
    %91 = vector.load %arg7[%c5, %c0_42, %c0_43] : memref<9x12x48xbf16, #tpu.memory_space<vmem>>, vector<1x12x48xbf16>
    %92 = vector.shape_cast %91 : vector<1x12x48xbf16> to vector<12x48xbf16>
    %93 = arith.truncf %90 : vector<48x256xf32> to vector<48x256xbf16>
    %cst_44 = arith.constant dense<0.000000e+00> : vector<12x256xf32>
    %94 = tpu.matmul %92, %93, %cst_44 {dimension_numbers = #tpu.dot_dimension_numbers<[1], [0], [0], [1], [0, 0, 1, 1], [], []>} : vector<12x48xbf16>, vector<48x256xbf16>, vector<12x256xf32> -> vector<12x256xf32>
    %95 = vector.broadcast %29 : vector<1x256xf32> to vector<12x256xf32>
    %96 = arith.mulf %94, %95 : vector<12x256xf32>
    %97 = arith.addf %89, %96 : vector<12x256xf32>
    %98 = vector.extract_strided_slice %52 {offsets = [0, 143], sizes = [48, 256], strides = [1, 1]} : vector<48x512xf32> to vector<48x256xf32>
    %c6 = arith.constant 6 : index
    %c0_45 = arith.constant 0 : index
    %c0_46 = arith.constant 0 : index
    %99 = vector.load %arg7[%c6, %c0_45, %c0_46] : memref<9x12x48xbf16, #tpu.memory_space<vmem>>, vector<1x12x48xbf16>
    %100 = vector.shape_cast %99 : vector<1x12x48xbf16> to vector<12x48xbf16>
    %101 = arith.truncf %98 : vector<48x256xf32> to vector<48x256xbf16>
    %cst_47 = arith.constant dense<0.000000e+00> : vector<12x256xf32>
    %102 = tpu.matmul %100, %101, %cst_47 {dimension_numbers = #tpu.dot_dimension_numbers<[1], [0], [0], [1], [0, 0, 1, 1], [], []>} : vector<12x48xbf16>, vector<48x256xbf16>, vector<12x256xf32> -> vector<12x256xf32>
    %103 = vector.broadcast %25 : vector<1x256xf32> to vector<12x256xf32>
    %104 = arith.mulf %102, %103 : vector<12x256xf32>
    %105 = arith.addf %97, %104 : vector<12x256xf32>
    %106 = vector.extract_strided_slice %52 {offsets = [0, 144], sizes = [48, 256], strides = [1, 1]} : vector<48x512xf32> to vector<48x256xf32>
    %c7 = arith.constant 7 : index
    %c0_48 = arith.constant 0 : index
    %c0_49 = arith.constant 0 : index
    %107 = vector.load %arg7[%c7, %c0_48, %c0_49] : memref<9x12x48xbf16, #tpu.memory_space<vmem>>, vector<1x12x48xbf16>
    %108 = vector.shape_cast %107 : vector<1x12x48xbf16> to vector<12x48xbf16>
    %109 = arith.truncf %106 : vector<48x256xf32> to vector<48x256xbf16>
    %cst_50 = arith.constant dense<0.000000e+00> : vector<12x256xf32>
    %110 = tpu.matmul %108, %109, %cst_50 {dimension_numbers = #tpu.dot_dimension_numbers<[1], [0], [0], [1], [0, 0, 1, 1], [], []>} : vector<12x48xbf16>, vector<48x256xbf16>, vector<12x256xf32> -> vector<12x256xf32>
    %111 = arith.addf %105, %110 : vector<12x256xf32>
    %112 = vector.extract_strided_slice %52 {offsets = [0, 145], sizes = [48, 256], strides = [1, 1]} : vector<48x512xf32> to vector<48x256xf32>
    %c8 = arith.constant 8 : index
    %c0_51 = arith.constant 0 : index
    %c0_52 = arith.constant 0 : index
    %113 = vector.load %arg7[%c8, %c0_51, %c0_52] : memref<9x12x48xbf16, #tpu.memory_space<vmem>>, vector<1x12x48xbf16>
    %114 = vector.shape_cast %113 : vector<1x12x48xbf16> to vector<12x48xbf16>
    %115 = arith.truncf %112 : vector<48x256xf32> to vector<48x256xbf16>
    %cst_53 = arith.constant dense<0.000000e+00> : vector<12x256xf32>
    %116 = tpu.matmul %114, %115, %cst_53 {dimension_numbers = #tpu.dot_dimension_numbers<[1], [0], [0], [1], [0, 0, 1, 1], [], []>} : vector<12x48xbf16>, vector<48x256xbf16>, vector<12x256xf32> -> vector<12x256xf32>
    %117 = vector.broadcast %29 : vector<1x256xf32> to vector<12x256xf32>
    %118 = arith.mulf %116, %117 : vector<12x256xf32>
    %119 = arith.addf %111, %118 : vector<12x256xf32>
    %c0_54 = arith.constant 0 : index
    %c12 = arith.constant 12 : index
    %c0_55 = arith.constant 0 : index
    %120 = vector.load %arg20[%c0_54, %c12, %c0_55] : memref<1x48x256xf32, #tpu.memory_space<vmem>>, vector<1x12x256xf32>
    %121 = vector.shape_cast %120 : vector<1x12x256xf32> to vector<12x256xf32>
    %122 = vector.shape_cast %119 : vector<12x256xf32> to vector<1x12x256xf32>
    tpu.vector_store %arg20[%c0_54, %c12, %c0_55], %122 {strides = array<i32>} : memref<1x48x256xf32, #tpu.memory_space<vmem>>, vector<1x12x256xf32>,
    %c0_56 = arith.constant 0 : index
    %c0_57 = arith.constant 0 : index
    %c0_58 = arith.constant 0 : index
    %123 = vector.load %arg20[%c0_56, %c0_57, %c0_58] : memref<1x48x256xf32, #tpu.memory_space<vmem>>, vector<1x24x256xf32>
    %124 = vector.shape_cast %123 : vector<1x24x256xf32> to vector<24x256xf32>
    %c0_59 = arith.constant 0 : index
    %c0_60 = arith.constant 0 : index
    %125 = vector.load %arg8[%c0_59, %c0_60] : memref<24x1xf32, #tpu.memory_space<vmem>>, vector<24x1xf32>
    %126 = vector.broadcast %125 : vector<24x1xf32> to vector<24x256xf32>
    %127 = arith.mulf %124, %126 : vector<24x256xf32>
    %c0_61 = arith.constant 0 : index
    %c0_62 = arith.constant 0 : index
    %128 = vector.load %arg9[%c0_61, %c0_62] : memref<24x1xf32, #tpu.memory_space<vmem>>, vector<24x1xf32>
    %129 = vector.broadcast %128 : vector<24x1xf32> to vector<24x256xf32>
    %130 = arith.addf %127, %129 : vector<24x256xf32>
    %cst_63 = arith.constant 0.000000e+00 : f32
    %131 = vector.broadcast %cst_63 : f32 to vector<24x256xf32>
    %132 = arith.maximumf %130, %131 : vector<24x256xf32>
    %c0_64 = arith.constant 0 : index
    %c0_65 = arith.constant 0 : index
    %133 = vector.load %arg10[%c0_64, %c0_65] : memref<48x24xbf16, #tpu.memory_space<vmem>>, vector<48x24xbf16>
    %134 = arith.truncf %132 : vector<24x256xf32> to vector<24x256xbf16>
    %cst_66 = arith.constant dense<0.000000e+00> : vector<48x256xf32>
    %135 = tpu.matmul %133, %134, %cst_66 {dimension_numbers = #tpu.dot_dimension_numbers<[1], [0], [0], [1], [0, 0, 1, 1], [], []>} : vector<48x24xbf16>, vector<24x256xbf16>, vector<48x256xf32> -> vector<48x256xf32>
    %c0_67 = arith.constant 0 : index
    %c0_68 = arith.constant 0 : index
    %136 = vector.load %arg11[%c0_67, %c0_68] : memref<48x1xf32, #tpu.memory_space<vmem>>, vector<48x1xf32>
    %137 = vector.broadcast %136 : vector<48x1xf32> to vector<48x256xf32>
    %138 = arith.mulf %135, %137 : vector<48x256xf32>
    %c0_69 = arith.constant 0 : index
    %c0_70 = arith.constant 0 : index
    %139 = vector.load %arg12[%c0_69, %c0_70] : memref<48x1xf32, #tpu.memory_space<vmem>>, vector<48x1xf32>
    %140 = vector.broadcast %139 : vector<48x1xf32> to vector<48x256xf32>
    %141 = arith.addf %138, %140 : vector<48x256xf32>
    %cst_71 = arith.constant 0.000000e+00 : f32
    %142 = vector.broadcast %cst_71 : f32 to vector<48x256xf32>
    %143 = arith.maximumf %141, %142 : vector<48x256xf32>
    %cst_72 = arith.constant 0.000000e+00 : f32
    %144 = vector.broadcast %cst_72 : f32 to vector<48x128xf32>
    %145 = tpu.concatenate %144, %143, %144 in 1 : vector<48x128xf32>, vector<48x256xf32>, vector<48x128xf32> -> vector<48x512xf32>
    %cst_73 = arith.constant 0.000000e+00 : f32
    %146 = vector.broadcast %cst_73 : f32 to vector<12x256xf32>
    %147 = vector.extract_strided_slice %145 {offsets = [0, 111], sizes = [48, 256], strides = [1, 1]} : vector<48x512xf32> to vector<48x256xf32>
    %c0_74 = arith.constant 0 : index
    %c0_75 = arith.constant 0 : index
    %c0_76 = arith.constant 0 : index
    %148 = vector.load %arg13[%c0_74, %c0_75, %c0_76] : memref<9x12x48xbf16, #tpu.memory_space<vmem>>, vector<1x12x48xbf16>
    %149 = vector.shape_cast %148 : vector<1x12x48xbf16> to vector<12x48xbf16>
    %150 = arith.truncf %147 : vector<48x256xf32> to vector<48x256xbf16>
    %cst_77 = arith.constant dense<0.000000e+00> : vector<12x256xf32>
    %151 = tpu.matmul %149, %150, %cst_77 {dimension_numbers = #tpu.dot_dimension_numbers<[1], [0], [0], [1], [0, 0, 1, 1], [], []>} : vector<12x48xbf16>, vector<48x256xbf16>, vector<12x256xf32> -> vector<12x256xf32>
    %152 = vector.broadcast %25 : vector<1x256xf32> to vector<12x256xf32>
    %153 = arith.mulf %151, %152 : vector<12x256xf32>
    %154 = arith.addf %146, %153 : vector<12x256xf32>
    %155 = vector.extract_strided_slice %145 {offsets = [0, 112], sizes = [48, 256], strides = [1, 1]} : vector<48x512xf32> to vector<48x256xf32>
    %c1_78 = arith.constant 1 : index
    %c0_79 = arith.constant 0 : index
    %c0_80 = arith.constant 0 : index
    %156 = vector.load %arg13[%c1_78, %c0_79, %c0_80] : memref<9x12x48xbf16, #tpu.memory_space<vmem>>, vector<1x12x48xbf16>
    %157 = vector.shape_cast %156 : vector<1x12x48xbf16> to vector<12x48xbf16>
    %158 = arith.truncf %155 : vector<48x256xf32> to vector<48x256xbf16>
    %cst_81 = arith.constant dense<0.000000e+00> : vector<12x256xf32>
    %159 = tpu.matmul %157, %158, %cst_81 {dimension_numbers = #tpu.dot_dimension_numbers<[1], [0], [0], [1], [0, 0, 1, 1], [], []>} : vector<12x48xbf16>, vector<48x256xbf16>, vector<12x256xf32> -> vector<12x256xf32>
    %160 = arith.addf %154, %159 : vector<12x256xf32>
    %161 = vector.extract_strided_slice %145 {offsets = [0, 113], sizes = [48, 256], strides = [1, 1]} : vector<48x512xf32> to vector<48x256xf32>
    %c2_82 = arith.constant 2 : index
    %c0_83 = arith.constant 0 : index
    %c0_84 = arith.constant 0 : index
    %162 = vector.load %arg13[%c2_82, %c0_83, %c0_84] : memref<9x12x48xbf16, #tpu.memory_space<vmem>>, vector<1x12x48xbf16>
    %163 = vector.shape_cast %162 : vector<1x12x48xbf16> to vector<12x48xbf16>
    %164 = arith.truncf %161 : vector<48x256xf32> to vector<48x256xbf16>
    %cst_85 = arith.constant dense<0.000000e+00> : vector<12x256xf32>
    %165 = tpu.matmul %163, %164, %cst_85 {dimension_numbers = #tpu.dot_dimension_numbers<[1], [0], [0], [1], [0, 0, 1, 1], [], []>} : vector<12x48xbf16>, vector<48x256xbf16>, vector<12x256xf32> -> vector<12x256xf32>
    %166 = vector.broadcast %29 : vector<1x256xf32> to vector<12x256xf32>
    %167 = arith.mulf %165, %166 : vector<12x256xf32>
    %168 = arith.addf %160, %167 : vector<12x256xf32>
    %169 = vector.extract_strided_slice %145 {offsets = [0, 127], sizes = [48, 256], strides = [1, 1]} : vector<48x512xf32> to vector<48x256xf32>
    %c3_86 = arith.constant 3 : index
    %c0_87 = arith.constant 0 : index
    %c0_88 = arith.constant 0 : index
    %170 = vector.load %arg13[%c3_86, %c0_87, %c0_88] : memref<9x12x48xbf16, #tpu.memory_space<vmem>>, vector<1x12x48xbf16>
    %171 = vector.shape_cast %170 : vector<1x12x48xbf16> to vector<12x48xbf16>
    %172 = arith.truncf %169 : vector<48x256xf32> to vector<48x256xbf16>
    %cst_89 = arith.constant dense<0.000000e+00> : vector<12x256xf32>
    %173 = tpu.matmul %171, %172, %cst_89 {dimension_numbers = #tpu.dot_dimension_numbers<[1], [0], [0], [1], [0, 0, 1, 1], [], []>} : vector<12x48xbf16>, vector<48x256xbf16>, vector<12x256xf32> -> vector<12x256xf32>
    %174 = vector.broadcast %25 : vector<1x256xf32> to vector<12x256xf32>
    %175 = arith.mulf %173, %174 : vector<12x256xf32>
    %176 = arith.addf %168, %175 : vector<12x256xf32>
    %177 = vector.extract_strided_slice %145 {offsets = [0, 128], sizes = [48, 256], strides = [1, 1]} : vector<48x512xf32> to vector<48x256xf32>
    %c4_90 = arith.constant 4 : index
    %c0_91 = arith.constant 0 : index
    %c0_92 = arith.constant 0 : index
    %178 = vector.load %arg13[%c4_90, %c0_91, %c0_92] : memref<9x12x48xbf16, #tpu.memory_space<vmem>>, vector<1x12x48xbf16>
    %179 = vector.shape_cast %178 : vector<1x12x48xbf16> to vector<12x48xbf16>
    %180 = arith.truncf %177 : vector<48x256xf32> to vector<48x256xbf16>
    %cst_93 = arith.constant dense<0.000000e+00> : vector<12x256xf32>
    %181 = tpu.matmul %179, %180, %cst_93 {dimension_numbers = #tpu.dot_dimension_numbers<[1], [0], [0], [1], [0, 0, 1, 1], [], []>} : vector<12x48xbf16>, vector<48x256xbf16>, vector<12x256xf32> -> vector<12x256xf32>
    %182 = arith.addf %176, %181 : vector<12x256xf32>
    %183 = vector.extract_strided_slice %145 {offsets = [0, 129], sizes = [48, 256], strides = [1, 1]} : vector<48x512xf32> to vector<48x256xf32>
    %c5_94 = arith.constant 5 : index
    %c0_95 = arith.constant 0 : index
    %c0_96 = arith.constant 0 : index
    %184 = vector.load %arg13[%c5_94, %c0_95, %c0_96] : memref<9x12x48xbf16, #tpu.memory_space<vmem>>, vector<1x12x48xbf16>
    %185 = vector.shape_cast %184 : vector<1x12x48xbf16> to vector<12x48xbf16>
    %186 = arith.truncf %183 : vector<48x256xf32> to vector<48x256xbf16>
    %cst_97 = arith.constant dense<0.000000e+00> : vector<12x256xf32>
    %187 = tpu.matmul %185, %186, %cst_97 {dimension_numbers = #tpu.dot_dimension_numbers<[1], [0], [0], [1], [0, 0, 1, 1], [], []>} : vector<12x48xbf16>, vector<48x256xbf16>, vector<12x256xf32> -> vector<12x256xf32>
    %188 = vector.broadcast %29 : vector<1x256xf32> to vector<12x256xf32>
    %189 = arith.mulf %187, %188 : vector<12x256xf32>
    %190 = arith.addf %182, %189 : vector<12x256xf32>
    %191 = vector.extract_strided_slice %145 {offsets = [0, 143], sizes = [48, 256], strides = [1, 1]} : vector<48x512xf32> to vector<48x256xf32>
    %c6_98 = arith.constant 6 : index
    %c0_99 = arith.constant 0 : index
    %c0_100 = arith.constant 0 : index
    %192 = vector.load %arg13[%c6_98, %c0_99, %c0_100] : memref<9x12x48xbf16, #tpu.memory_space<vmem>>, vector<1x12x48xbf16>
    %193 = vector.shape_cast %192 : vector<1x12x48xbf16> to vector<12x48xbf16>
    %194 = arith.truncf %191 : vector<48x256xf32> to vector<48x256xbf16>
    %cst_101 = arith.constant dense<0.000000e+00> : vector<12x256xf32>
    %195 = tpu.matmul %193, %194, %cst_101 {dimension_numbers = #tpu.dot_dimension_numbers<[1], [0], [0], [1], [0, 0, 1, 1], [], []>} : vector<12x48xbf16>, vector<48x256xbf16>, vector<12x256xf32> -> vector<12x256xf32>
    %196 = vector.broadcast %25 : vector<1x256xf32> to vector<12x256xf32>
    %197 = arith.mulf %195, %196 : vector<12x256xf32>
    %198 = arith.addf %190, %197 : vector<12x256xf32>
    %199 = vector.extract_strided_slice %145 {offsets = [0, 144], sizes = [48, 256], strides = [1, 1]} : vector<48x512xf32> to vector<48x256xf32>
    %c7_102 = arith.constant 7 : index
    %c0_103 = arith.constant 0 : index
    %c0_104 = arith.constant 0 : index
    %200 = vector.load %arg13[%c7_102, %c0_103, %c0_104] : memref<9x12x48xbf16, #tpu.memory_space<vmem>>, vector<1x12x48xbf16>
    %201 = vector.shape_cast %200 : vector<1x12x48xbf16> to vector<12x48xbf16>
    %202 = arith.truncf %199 : vector<48x256xf32> to vector<48x256xbf16>
    %cst_105 = arith.constant dense<0.000000e+00> : vector<12x256xf32>
    %203 = tpu.matmul %201, %202, %cst_105 {dimension_numbers = #tpu.dot_dimension_numbers<[1], [0], [0], [1], [0, 0, 1, 1], [], []>} : vector<12x48xbf16>, vector<48x256xbf16>, vector<12x256xf32> -> vector<12x256xf32>
    %204 = arith.addf %198, %203 : vector<12x256xf32>
    %205 = vector.extract_strided_slice %145 {offsets = [0, 145], sizes = [48, 256], strides = [1, 1]} : vector<48x512xf32> to vector<48x256xf32>
    %c8_106 = arith.constant 8 : index
    %c0_107 = arith.constant 0 : index
    %c0_108 = arith.constant 0 : index
    %206 = vector.load %arg13[%c8_106, %c0_107, %c0_108] : memref<9x12x48xbf16, #tpu.memory_space<vmem>>, vector<1x12x48xbf16>
    %207 = vector.shape_cast %206 : vector<1x12x48xbf16> to vector<12x48xbf16>
    %208 = arith.truncf %205 : vector<48x256xf32> to vector<48x256xbf16>
    %cst_109 = arith.constant dense<0.000000e+00> : vector<12x256xf32>
    %209 = tpu.matmul %207, %208, %cst_109 {dimension_numbers = #tpu.dot_dimension_numbers<[1], [0], [0], [1], [0, 0, 1, 1], [], []>} : vector<12x48xbf16>, vector<48x256xbf16>, vector<12x256xf32> -> vector<12x256xf32>
    %210 = vector.broadcast %29 : vector<1x256xf32> to vector<12x256xf32>
    %211 = arith.mulf %209, %210 : vector<12x256xf32>
    %212 = arith.addf %204, %211 : vector<12x256xf32>
    %c0_110 = arith.constant 0 : index
    %c24 = arith.constant 24 : index
    %c0_111 = arith.constant 0 : index
    %213 = vector.load %arg20[%c0_110, %c24, %c0_111] : memref<1x48x256xf32, #tpu.memory_space<vmem>>, vector<1x12x256xf32>
    %214 = vector.shape_cast %213 : vector<1x12x256xf32> to vector<12x256xf32>
    %215 = vector.shape_cast %212 : vector<12x256xf32> to vector<1x12x256xf32>
    tpu.vector_store %arg20[%c0_110, %c24, %c0_111], %215 {strides = array<i32>} : memref<1x48x256xf32, #tpu.memory_space<vmem>>, vector<1x12x256xf32>,
    %c0_112 = arith.constant 0 : index
    %c0_113 = arith.constant 0 : index
    %c0_114 = arith.constant 0 : index
    %216 = vector.load %arg20[%c0_112, %c0_113, %c0_114] : memref<1x48x256xf32, #tpu.memory_space<vmem>>, vector<1x36x256xf32>
    %217 = vector.shape_cast %216 : vector<1x36x256xf32> to vector<36x256xf32>
    %c0_115 = arith.constant 0 : index
    %c0_116 = arith.constant 0 : index
    %218 = vector.load %arg14[%c0_115, %c0_116] : memref<36x1xf32, #tpu.memory_space<vmem>>, vector<36x1xf32>
    %219 = vector.broadcast %218 : vector<36x1xf32> to vector<36x256xf32>
    %220 = arith.mulf %217, %219 : vector<36x256xf32>
    %c0_117 = arith.constant 0 : index
    %c0_118 = arith.constant 0 : index
    %221 = vector.load %arg15[%c0_117, %c0_118] : memref<36x1xf32, #tpu.memory_space<vmem>>, vector<36x1xf32>
    %222 = vector.broadcast %221 : vector<36x1xf32> to vector<36x256xf32>
    %223 = arith.addf %220, %222 : vector<36x256xf32>
    %cst_119 = arith.constant 0.000000e+00 : f32
    %224 = vector.broadcast %cst_119 : f32 to vector<36x256xf32>
    %225 = arith.maximumf %223, %224 : vector<36x256xf32>
    %c0_120 = arith.constant 0 : index
    %c0_121 = arith.constant 0 : index
    %226 = vector.load %arg16[%c0_120, %c0_121] : memref<48x36xbf16, #tpu.memory_space<vmem>>, vector<48x36xbf16>
    %227 = arith.truncf %225 : vector<36x256xf32> to vector<36x256xbf16>
    %cst_122 = arith.constant dense<0.000000e+00> : vector<48x256xf32>
    %228 = tpu.matmul %226, %227, %cst_122 {dimension_numbers = #tpu.dot_dimension_numbers<[1], [0], [0], [1], [0, 0, 1, 1], [], []>} : vector<48x36xbf16>, vector<36x256xbf16>, vector<48x256xf32> -> vector<48x256xf32>
    %c0_123 = arith.constant 0 : index
    %c0_124 = arith.constant 0 : index
    %229 = vector.load %arg17[%c0_123, %c0_124] : memref<48x1xf32, #tpu.memory_space<vmem>>, vector<48x1xf32>
    %230 = vector.broadcast %229 : vector<48x1xf32> to vector<48x256xf32>
    %231 = arith.mulf %228, %230 : vector<48x256xf32>
    %c0_125 = arith.constant 0 : index
    %c0_126 = arith.constant 0 : index
    %232 = vector.load %arg18[%c0_125, %c0_126] : memref<48x1xf32, #tpu.memory_space<vmem>>, vector<48x1xf32>
    %233 = vector.broadcast %232 : vector<48x1xf32> to vector<48x256xf32>
    %234 = arith.addf %231, %233 : vector<48x256xf32>
    %cst_127 = arith.constant 0.000000e+00 : f32
    %235 = vector.broadcast %cst_127 : f32 to vector<48x256xf32>
    %236 = arith.maximumf %234, %235 : vector<48x256xf32>
    %cst_128 = arith.constant 0.000000e+00 : f32
    %237 = vector.broadcast %cst_128 : f32 to vector<48x128xf32>
    %238 = tpu.concatenate %237, %236, %237 in 1 : vector<48x128xf32>, vector<48x256xf32>, vector<48x128xf32> -> vector<48x512xf32>
    %cst_129 = arith.constant 0.000000e+00 : f32
    %239 = vector.broadcast %cst_129 : f32 to vector<12x256xf32>
    %240 = vector.extract_strided_slice %238 {offsets = [0, 111], sizes = [48, 256], strides = [1, 1]} : vector<48x512xf32> to vector<48x256xf32>
    %c0_130 = arith.constant 0 : index
    %c0_131 = arith.constant 0 : index
    %c0_132 = arith.constant 0 : index
    %241 = vector.load %arg19[%c0_130, %c0_131, %c0_132] : memref<9x12x48xbf16, #tpu.memory_space<vmem>>, vector<1x12x48xbf16>
    %242 = vector.shape_cast %241 : vector<1x12x48xbf16> to vector<12x48xbf16>
    %243 = arith.truncf %240 : vector<48x256xf32> to vector<48x256xbf16>
    %cst_133 = arith.constant dense<0.000000e+00> : vector<12x256xf32>
    %244 = tpu.matmul %242, %243, %cst_133 {dimension_numbers = #tpu.dot_dimension_numbers<[1], [0], [0], [1], [0, 0, 1, 1], [], []>} : vector<12x48xbf16>, vector<48x256xbf16>, vector<12x256xf32> -> vector<12x256xf32>
    %245 = vector.broadcast %25 : vector<1x256xf32> to vector<12x256xf32>
    %246 = arith.mulf %244, %245 : vector<12x256xf32>
    %247 = arith.addf %239, %246 : vector<12x256xf32>
    %248 = vector.extract_strided_slice %238 {offsets = [0, 112], sizes = [48, 256], strides = [1, 1]} : vector<48x512xf32> to vector<48x256xf32>
    %c1_134 = arith.constant 1 : index
    %c0_135 = arith.constant 0 : index
    %c0_136 = arith.constant 0 : index
    %249 = vector.load %arg19[%c1_134, %c0_135, %c0_136] : memref<9x12x48xbf16, #tpu.memory_space<vmem>>, vector<1x12x48xbf16>
    %250 = vector.shape_cast %249 : vector<1x12x48xbf16> to vector<12x48xbf16>
    %251 = arith.truncf %248 : vector<48x256xf32> to vector<48x256xbf16>
    %cst_137 = arith.constant dense<0.000000e+00> : vector<12x256xf32>
    %252 = tpu.matmul %250, %251, %cst_137 {dimension_numbers = #tpu.dot_dimension_numbers<[1], [0], [0], [1], [0, 0, 1, 1], [], []>} : vector<12x48xbf16>, vector<48x256xbf16>, vector<12x256xf32> -> vector<12x256xf32>
    %253 = arith.addf %247, %252 : vector<12x256xf32>
    %254 = vector.extract_strided_slice %238 {offsets = [0, 113], sizes = [48, 256], strides = [1, 1]} : vector<48x512xf32> to vector<48x256xf32>
    %c2_138 = arith.constant 2 : index
    %c0_139 = arith.constant 0 : index
    %c0_140 = arith.constant 0 : index
    %255 = vector.load %arg19[%c2_138, %c0_139, %c0_140] : memref<9x12x48xbf16, #tpu.memory_space<vmem>>, vector<1x12x48xbf16>
    %256 = vector.shape_cast %255 : vector<1x12x48xbf16> to vector<12x48xbf16>
    %257 = arith.truncf %254 : vector<48x256xf32> to vector<48x256xbf16>
    %cst_141 = arith.constant dense<0.000000e+00> : vector<12x256xf32>
    %258 = tpu.matmul %256, %257, %cst_141 {dimension_numbers = #tpu.dot_dimension_numbers<[1], [0], [0], [1], [0, 0, 1, 1], [], []>} : vector<12x48xbf16>, vector<48x256xbf16>, vector<12x256xf32> -> vector<12x256xf32>
    %259 = vector.broadcast %29 : vector<1x256xf32> to vector<12x256xf32>
    %260 = arith.mulf %258, %259 : vector<12x256xf32>
    %261 = arith.addf %253, %260 : vector<12x256xf32>
    %262 = vector.extract_strided_slice %238 {offsets = [0, 127], sizes = [48, 256], strides = [1, 1]} : vector<48x512xf32> to vector<48x256xf32>
    %c3_142 = arith.constant 3 : index
    %c0_143 = arith.constant 0 : index
    %c0_144 = arith.constant 0 : index
    %263 = vector.load %arg19[%c3_142, %c0_143, %c0_144] : memref<9x12x48xbf16, #tpu.memory_space<vmem>>, vector<1x12x48xbf16>
    %264 = vector.shape_cast %263 : vector<1x12x48xbf16> to vector<12x48xbf16>
    %265 = arith.truncf %262 : vector<48x256xf32> to vector<48x256xbf16>
    %cst_145 = arith.constant dense<0.000000e+00> : vector<12x256xf32>
    %266 = tpu.matmul %264, %265, %cst_145 {dimension_numbers = #tpu.dot_dimension_numbers<[1], [0], [0], [1], [0, 0, 1, 1], [], []>} : vector<12x48xbf16>, vector<48x256xbf16>, vector<12x256xf32> -> vector<12x256xf32>
    %267 = vector.broadcast %25 : vector<1x256xf32> to vector<12x256xf32>
    %268 = arith.mulf %266, %267 : vector<12x256xf32>
    %269 = arith.addf %261, %268 : vector<12x256xf32>
    %270 = vector.extract_strided_slice %238 {offsets = [0, 128], sizes = [48, 256], strides = [1, 1]} : vector<48x512xf32> to vector<48x256xf32>
    %c4_146 = arith.constant 4 : index
    %c0_147 = arith.constant 0 : index
    %c0_148 = arith.constant 0 : index
    %271 = vector.load %arg19[%c4_146, %c0_147, %c0_148] : memref<9x12x48xbf16, #tpu.memory_space<vmem>>, vector<1x12x48xbf16>
    %272 = vector.shape_cast %271 : vector<1x12x48xbf16> to vector<12x48xbf16>
    %273 = arith.truncf %270 : vector<48x256xf32> to vector<48x256xbf16>
    %cst_149 = arith.constant dense<0.000000e+00> : vector<12x256xf32>
    %274 = tpu.matmul %272, %273, %cst_149 {dimension_numbers = #tpu.dot_dimension_numbers<[1], [0], [0], [1], [0, 0, 1, 1], [], []>} : vector<12x48xbf16>, vector<48x256xbf16>, vector<12x256xf32> -> vector<12x256xf32>
    %275 = arith.addf %269, %274 : vector<12x256xf32>
    %276 = vector.extract_strided_slice %238 {offsets = [0, 129], sizes = [48, 256], strides = [1, 1]} : vector<48x512xf32> to vector<48x256xf32>
    %c5_150 = arith.constant 5 : index
    %c0_151 = arith.constant 0 : index
    %c0_152 = arith.constant 0 : index
    %277 = vector.load %arg19[%c5_150, %c0_151, %c0_152] : memref<9x12x48xbf16, #tpu.memory_space<vmem>>, vector<1x12x48xbf16>
    %278 = vector.shape_cast %277 : vector<1x12x48xbf16> to vector<12x48xbf16>
    %279 = arith.truncf %276 : vector<48x256xf32> to vector<48x256xbf16>
    %cst_153 = arith.constant dense<0.000000e+00> : vector<12x256xf32>
    %280 = tpu.matmul %278, %279, %cst_153 {dimension_numbers = #tpu.dot_dimension_numbers<[1], [0], [0], [1], [0, 0, 1, 1], [], []>} : vector<12x48xbf16>, vector<48x256xbf16>, vector<12x256xf32> -> vector<12x256xf32>
    %281 = vector.broadcast %29 : vector<1x256xf32> to vector<12x256xf32>
    %282 = arith.mulf %280, %281 : vector<12x256xf32>
    %283 = arith.addf %275, %282 : vector<12x256xf32>
    %284 = vector.extract_strided_slice %238 {offsets = [0, 143], sizes = [48, 256], strides = [1, 1]} : vector<48x512xf32> to vector<48x256xf32>
    %c6_154 = arith.constant 6 : index
    %c0_155 = arith.constant 0 : index
    %c0_156 = arith.constant 0 : index
    %285 = vector.load %arg19[%c6_154, %c0_155, %c0_156] : memref<9x12x48xbf16, #tpu.memory_space<vmem>>, vector<1x12x48xbf16>
    %286 = vector.shape_cast %285 : vector<1x12x48xbf16> to vector<12x48xbf16>
    %287 = arith.truncf %284 : vector<48x256xf32> to vector<48x256xbf16>
    %cst_157 = arith.constant dense<0.000000e+00> : vector<12x256xf32>
    %288 = tpu.matmul %286, %287, %cst_157 {dimension_numbers = #tpu.dot_dimension_numbers<[1], [0], [0], [1], [0, 0, 1, 1], [], []>} : vector<12x48xbf16>, vector<48x256xbf16>, vector<12x256xf32> -> vector<12x256xf32>
    %289 = vector.broadcast %25 : vector<1x256xf32> to vector<12x256xf32>
    %290 = arith.mulf %288, %289 : vector<12x256xf32>
    %291 = arith.addf %283, %290 : vector<12x256xf32>
    %292 = vector.extract_strided_slice %238 {offsets = [0, 144], sizes = [48, 256], strides = [1, 1]} : vector<48x512xf32> to vector<48x256xf32>
    %c7_158 = arith.constant 7 : index
    %c0_159 = arith.constant 0 : index
    %c0_160 = arith.constant 0 : index
    %293 = vector.load %arg19[%c7_158, %c0_159, %c0_160] : memref<9x12x48xbf16, #tpu.memory_space<vmem>>, vector<1x12x48xbf16>
    %294 = vector.shape_cast %293 : vector<1x12x48xbf16> to vector<12x48xbf16>
    %295 = arith.truncf %292 : vector<48x256xf32> to vector<48x256xbf16>
    %cst_161 = arith.constant dense<0.000000e+00> : vector<12x256xf32>
    %296 = tpu.matmul %294, %295, %cst_161 {dimension_numbers = #tpu.dot_dimension_numbers<[1], [0], [0], [1], [0, 0, 1, 1], [], []>} : vector<12x48xbf16>, vector<48x256xbf16>, vector<12x256xf32> -> vector<12x256xf32>
    %297 = arith.addf %291, %296 : vector<12x256xf32>
    %298 = vector.extract_strided_slice %238 {offsets = [0, 145], sizes = [48, 256], strides = [1, 1]} : vector<48x512xf32> to vector<48x256xf32>
    %c8_162 = arith.constant 8 : index
    %c0_163 = arith.constant 0 : index
    %c0_164 = arith.constant 0 : index
    %299 = vector.load %arg19[%c8_162, %c0_163, %c0_164] : memref<9x12x48xbf16, #tpu.memory_space<vmem>>, vector<1x12x48xbf16>
    %300 = vector.shape_cast %299 : vector<1x12x48xbf16> to vector<12x48xbf16>
    %301 = arith.truncf %298 : vector<48x256xf32> to vector<48x256xbf16>
    %cst_165 = arith.constant dense<0.000000e+00> : vector<12x256xf32>
    %302 = tpu.matmul %300, %301, %cst_165 {dimension_numbers = #tpu.dot_dimension_numbers<[1], [0], [0], [1], [0, 0, 1, 1], [], []>} : vector<12x48xbf16>, vector<48x256xbf16>, vector<12x256xf32> -> vector<12x256xf32>
    %303 = vector.broadcast %29 : vector<1x256xf32> to vector<12x256xf32>
    %304 = arith.mulf %302, %303 : vector<12x256xf32>
    %305 = arith.addf %297, %304 : vector<12x256xf32>
    %c0_166 = arith.constant 0 : index
    %c36 = arith.constant 36 : index
    %c0_167 = arith.constant 0 : index
    %306 = vector.load %arg20[%c0_166, %c36, %c0_167] : memref<1x48x256xf32, #tpu.memory_space<vmem>>, vector<1x12x256xf32>
    %307 = vector.shape_cast %306 : vector<1x12x256xf32> to vector<12x256xf32>
    %308 = vector.shape_cast %305 : vector<12x256xf32> to vector<1x12x256xf32>
    tpu.vector_store %arg20[%c0_166, %c36, %c0_167], %308 {strides = array<i32>} : memref<1x48x256xf32, #tpu.memory_space<vmem>>, vector<1x12x256xf32>,
    return
  }
  func.func @transform_0(%arg0: i32) -> (i32, i32, i32) {
    %c0_i32 = arith.constant 0 : i32
    %c0_i32_0 = arith.constant 0 : i32
    %c0_i32_1 = arith.constant 0 : i32
    return %arg0, %c0_i32, %c0_i32_0 : i32, i32, i32
  }
  func.func @transform_1(%arg0: i32) -> (i32, i32) {
    %c0_i32 = arith.constant 0 : i32
    %c0_i32_0 = arith.constant 0 : i32
    %c0_i32_1 = arith.constant 0 : i32
    return %c0_i32, %c0_i32_0 : i32, i32
  }
  func.func @transform_2(%arg0: i32) -> (i32, i32) {
    %c0_i32 = arith.constant 0 : i32
    %c0_i32_0 = arith.constant 0 : i32
    %c0_i32_1 = arith.constant 0 : i32
    return %c0_i32, %c0_i32_0 : i32, i32
  }
  func.func @transform_3(%arg0: i32) -> (i32, i32) {
    %c0_i32 = arith.constant 0 : i32
    %c0_i32_0 = arith.constant 0 : i32
    %c0_i32_1 = arith.constant 0 : i32
    return %c0_i32, %c0_i32_0 : i32, i32
  }
  func.func @transform_4(%arg0: i32) -> (i32, i32) {
    %c0_i32 = arith.constant 0 : i32
    %c0_i32_0 = arith.constant 0 : i32
    %c0_i32_1 = arith.constant 0 : i32
    return %c0_i32, %c0_i32_0 : i32, i32
  }
  func.func @transform_5(%arg0: i32) -> (i32, i32) {
    %c0_i32 = arith.constant 0 : i32
    %c0_i32_0 = arith.constant 0 : i32
    %c0_i32_1 = arith.constant 0 : i32
    return %c0_i32, %c0_i32_0 : i32, i32
  }
  func.func @transform_6(%arg0: i32) -> (i32, i32, i32) {
    %c0_i32 = arith.constant 0 : i32
    %c0_i32_0 = arith.constant 0 : i32
    %c0_i32_1 = arith.constant 0 : i32
    %c0_i32_2 = arith.constant 0 : i32
    return %c0_i32, %c0_i32_0, %c0_i32_1 : i32, i32, i32
  }
  func.func @transform_7(%arg0: i32) -> (i32, i32) {
    %c0_i32 = arith.constant 0 : i32
    %c0_i32_0 = arith.constant 0 : i32
    %c0_i32_1 = arith.constant 0 : i32
    return %c0_i32, %c0_i32_0 : i32, i32
  }
  func.func @transform_8(%arg0: i32) -> (i32, i32) {
    %c0_i32 = arith.constant 0 : i32
    %c0_i32_0 = arith.constant 0 : i32
    %c0_i32_1 = arith.constant 0 : i32
    return %c0_i32, %c0_i32_0 : i32, i32
  }
  func.func @transform_9(%arg0: i32) -> (i32, i32) {
    %c0_i32 = arith.constant 0 : i32
    %c0_i32_0 = arith.constant 0 : i32
    %c0_i32_1 = arith.constant 0 : i32
    return %c0_i32, %c0_i32_0 : i32, i32
  }
  func.func @transform_10(%arg0: i32) -> (i32, i32) {
    %c0_i32 = arith.constant 0 : i32
    %c0_i32_0 = arith.constant 0 : i32
    %c0_i32_1 = arith.constant 0 : i32
    return %c0_i32, %c0_i32_0 : i32, i32
  }
  func.func @transform_11(%arg0: i32) -> (i32, i32) {
    %c0_i32 = arith.constant 0 : i32
    %c0_i32_0 = arith.constant 0 : i32
    %c0_i32_1 = arith.constant 0 : i32
    return %c0_i32, %c0_i32_0 : i32, i32
  }
  func.func @transform_12(%arg0: i32) -> (i32, i32, i32) {
    %c0_i32 = arith.constant 0 : i32
    %c0_i32_0 = arith.constant 0 : i32
    %c0_i32_1 = arith.constant 0 : i32
    %c0_i32_2 = arith.constant 0 : i32
    return %c0_i32, %c0_i32_0, %c0_i32_1 : i32, i32, i32
  }
  func.func @transform_13(%arg0: i32) -> (i32, i32) {
    %c0_i32 = arith.constant 0 : i32
    %c0_i32_0 = arith.constant 0 : i32
    %c0_i32_1 = arith.constant 0 : i32
    return %c0_i32, %c0_i32_0 : i32, i32
  }
  func.func @transform_14(%arg0: i32) -> (i32, i32) {
    %c0_i32 = arith.constant 0 : i32
    %c0_i32_0 = arith.constant 0 : i32
    %c0_i32_1 = arith.constant 0 : i32
    return %c0_i32, %c0_i32_0 : i32, i32
  }
  func.func @transform_15(%arg0: i32) -> (i32, i32) {
    %c0_i32 = arith.constant 0 : i32
    %c0_i32_0 = arith.constant 0 : i32
    %c0_i32_1 = arith.constant 0 : i32
    return %c0_i32, %c0_i32_0 : i32, i32
  }
  func.func @transform_16(%arg0: i32) -> (i32, i32) {
    %c0_i32 = arith.constant 0 : i32
    %c0_i32_0 = arith.constant 0 : i32
    %c0_i32_1 = arith.constant 0 : i32
    return %c0_i32, %c0_i32_0 : i32, i32
  }
  func.func @transform_17(%arg0: i32) -> (i32, i32) {
    %c0_i32 = arith.constant 0 : i32
    %c0_i32_0 = arith.constant 0 : i32
    %c0_i32_1 = arith.constant 0 : i32
    return %c0_i32, %c0_i32_0 : i32, i32
  }
  func.func @transform_18(%arg0: i32) -> (i32, i32, i32) {
    %c0_i32 = arith.constant 0 : i32
    %c0_i32_0 = arith.constant 0 : i32
    %c0_i32_1 = arith.constant 0 : i32
    %c0_i32_2 = arith.constant 0 : i32
    return %c0_i32, %c0_i32_0, %c0_i32_1 : i32, i32, i32
  }
  func.func @transform_19(%arg0: i32) -> (i32, i32, i32) {
    %c0_i32 = arith.constant 0 : i32
    %c0_i32_0 = arith.constant 0 : i32
    %c0_i32_1 = arith.constant 0 : i32
    return %arg0, %c0_i32, %c0_i32_0 : i32, i32, i32
  }
}

</mosaic_0001>

<llo_original>
// kernel: dense_block_fwd.1
$region0: #{dense_block_fwd.1}
  #allocation0 [shape = 'u32[]', space=smem, size = 0x4, offset = 0x4, fixed_abs, tag = 'smem constant byte address 0x4 - core index']
  #allocation1 [shape = 'u32[72,128]{1,0:T(1,128)}', space=vmem, size = 0x9000, scoped, tag = 'internal scratch']
  %s0 = inlined_call_operand.vmem [shape: f32[2,12,256], index: 0, kind: input, shape index: {}]
  %s1 = inlined_call_operand.vmem [shape: f32[12,1], index: 1, kind: input, shape index: {}]
  %s2 = inlined_call_operand.vmem [shape: f32[12,1], index: 2, kind: input, shape index: {}]
  %s3 = inlined_call_operand.vmem [shape: bf16[48,12], index: 3, kind: input, shape index: {}]
  %s4 = inlined_call_operand.vmem [shape: f32[48,1], index: 4, kind: input, shape index: {}]
  %s5 = inlined_call_operand.vmem [shape: f32[48,1], index: 5, kind: input, shape index: {}]
  %s6 = inlined_call_operand.vmem [shape: bf16[9,12,48], index: 6, kind: input, shape index: {}]
  %s7 = inlined_call_operand.vmem [shape: f32[24,1], index: 7, kind: input, shape index: {}]
  %s8 = inlined_call_operand.vmem [shape: f32[24,1], index: 8, kind: input, shape index: {}]
  %s9 = inlined_call_operand.vmem [shape: bf16[48,24], index: 9, kind: input, shape index: {}]
  %s10 = inlined_call_operand.vmem [shape: f32[48,1], index: 10, kind: input, shape index: {}]
  %s11 = inlined_call_operand.vmem [shape: f32[48,1], index: 11, kind: input, shape index: {}]
  %s12 = inlined_call_operand.vmem [shape: bf16[9,12,48], index: 12, kind: input, shape index: {}]
  %s13 = inlined_call_operand.vmem [shape: f32[36,1], index: 13, kind: input, shape index: {}]
  %s14 = inlined_call_operand.vmem [shape: f32[36,1], index: 14, kind: input, shape index: {}]
  %s15 = inlined_call_operand.vmem [shape: bf16[48,36], index: 15, kind: input, shape index: {}]
  %s16 = inlined_call_operand.vmem [shape: f32[48,1], index: 16, kind: input, shape index: {}]
  %s17 = inlined_call_operand.vmem [shape: f32[48,1], index: 17, kind: input, shape index: {}]
  %s18 = inlined_call_operand.vmem [shape: bf16[9,12,48], index: 18, kind: input, shape index: {}]
  %s19 = inlined_call_operand.vmem [shape: f32[2,48,256], index: 19, kind: output, shape index: {}]
  %s20 = sld [smem:[#allocation0]]
  $region109: #{dense_block_fwd.1} parent=0
    _
  %s22 = ssub.s32 1, %s20
  %s23 = scalar_select 0, %s22, %s20
  loop: start=0, step=1, limit=4
  $region2: #{dense_block_fwd.1} parent=0 // loop_pre_header
    _
  $region3: #{dense_block_fwd.1} parent=0 // loop_header
    %s25 = sphi 0, %s29
    %p26 = scmp.ge.s32.totalorder %s25, 4
    %s35 = sphi 0, %s37
    %s38 = sphi 0, %s35
    %s39 = sphi 0, %s38
    %s55 = sphi 0, %s39
    %s59 = sphi 0, %s59
    %s61 = sphi 0, %s59
    %s62 = sphi 0, %s61
    %s76 = sphi 0, %s62
    %s80 = sphi 0, %s80
    %s82 = sphi 0, %s80
    %s83 = sphi 0, %s82
    %s97 = sphi 0, %s83
    %s101 = sphi 0, %s101
    %s103 = sphi 0, %s101
    %s104 = sphi 0, %s103
    %s118 = sphi 0, %s104
    %s122 = sphi 0, %s122
    %s124 = sphi 0, %s122
    %s125 = sphi 0, %s124
    %s139 = sphi 0, %s125
    %s143 = sphi 0, %s143
    %s145 = sphi 0, %s143
    %s146 = sphi 0, %s145
    %s160 = sphi 0, %s146
    %s164 = sphi 0, %s164
    %s166 = sphi 0, %s164
    %s167 = sphi 0, %s166
    %s181 = sphi 0, %s167
    %s185 = sphi 0, %s185
    %s187 = sphi 0, %s185
    %s188 = sphi 0, %s187
    %s202 = sphi 0, %s188
    %s206 = sphi 0, %s206
    %s208 = sphi 0, %s206
    %s209 = sphi 0, %s208
    %s223 = sphi 0, %s209
    %s227 = sphi 0, %s227
    %s229 = sphi 0, %s227
    %s230 = sphi 0, %s229
    %s244 = sphi 0, %s230
    %s248 = sphi 0, %s248
    %s250 = sphi 0, %s248
    %s251 = sphi 0, %s250
    %s265 = sphi 0, %s251
    %s269 = sphi 0, %s269
    %s271 = sphi 0, %s269
    %s272 = sphi 0, %s271
    %s286 = sphi 0, %s272
    %s290 = sphi 0, %s290
    %s292 = sphi 0, %s290
    %s293 = sphi 0, %s292
    %s307 = sphi 0, %s293
    %s311 = sphi 0, %s311
    %s313 = sphi 0, %s311
    %s314 = sphi 0, %s313
    %s328 = sphi 0, %s314
    %s332 = sphi 0, %s332
    %s334 = sphi 0, %s332
    %s335 = sphi 0, %s334
    %s349 = sphi 0, %s335
    %s353 = sphi 0, %s353
    %s355 = sphi 0, %s353
    %s356 = sphi 0, %s355
    %s370 = sphi 0, %s356
    %s374 = sphi 0, %s374
    %s376 = sphi 0, %s374
    %s377 = sphi 0, %s376
    %s391 = sphi 0, %s377
    %s395 = sphi 0, %s395
    %s397 = sphi 0, %s395
    %s398 = sphi 0, %s397
    %s412 = sphi 0, %s398
    %s416 = sphi 0, %s416
    %s418 = sphi 0, %s416
    %s419 = sphi 0, %s418
    %s433 = sphi 0, %s419
    %s439 = sphi 0, %s441
    %s442 = sphi 0, %s439
    %s443 = sphi 0, %s442
    %s459 = sphi 0, %s443
  $region4: #{dense_block_fwd.1} parent=0 // loop_header_branch
    %28 = sbr.rel (%p26) target = $region8
  $region5: #{dense_block_fwd.1} parent=0 // loop_body
    %s30 = ssub.s32 %s25, 1
    %s31 = ssub.s32 %s25, 2
    %s32 = sadd.s32 %s25, 1
    %s33 = ssub.s32 %s25, %s32
    %p34 = scmp.eq.s32.totalorder %s33, 0
    %s36 = sadd.s32 %s35, 1
    %s37 = scalar_select %p34, %s35, %s36
    %p40 = pneg %p34
    %p41 = scmp.eq.s32.totalorder %s25, 1
    %p42 = por %p40, %p41
    %p43 = scmp.ne.s32.totalorder %s35, %s38
    %p44 = scmp.eq.s32.totalorder %s25, 0
    %p45 = por %p43, %p44
    %p46 = scmp.ne.s32.totalorder %s35, %s38
    %p47 = scmp.eq.s32.totalorder %s30, 1
    %p48 = por %p46, %p47
    %p49 = scmp.ne.s32.totalorder %s38, %s39
    %p50 = scmp.eq.s32.totalorder %s30, 0
    %p51 = por %p49, %p50
    %p52 = scmp.ne.s32.totalorder %s38, %s39
    %p53 = scmp.eq.s32.totalorder %s31, 1
    %p54 = por %p52, %p53
    %p56 = scmp.ne.s32.totalorder %s39, %s55
    %p57 = scmp.eq.s32.totalorder %s31, 0
    %p58 = por %p56, %p57
    %s60 = sadd.s32 %s59, 1
    %p63 = scmp.eq.s32.totalorder %s25, 1
    %p64 = scmp.ne.s32.totalorder %s59, %s61
    %p65 = scmp.eq.s32.totalorder %s25, 0
    %p66 = por %p64, %p65
    %p67 = scmp.ne.s32.totalorder %s59, %s61
    %p68 = scmp.eq.s32.totalorder %s30, 1
    %p69 = por %p67, %p68
    %p70 = scmp.ne.s32.totalorder %s61, %s62
    %p71 = scmp.eq.s32.totalorder %s30, 0
    %p72 = por %p70, %p71
    %p73 = scmp.ne.s32.totalorder %s61, %s62
    %p74 = scmp.eq.s32.totalorder %s31, 1
    %p75 = por %p73, %p74
    %p77 = scmp.ne.s32.totalorder %s62, %s76
    %p78 = scmp.eq.s32.totalorder %s31, 0
    %p79 = por %p77, %p78
    %s81 = sadd.s32 %s80, 1
    %p84 = scmp.eq.s32.totalorder %s25, 1
    %p85 = scmp.ne.s32.totalorder %s80, %s82
    %p86 = scmp.eq.s32.totalorder %s25, 0
    %p87 = por %p85, %p86
    %p88 = scmp.ne.s32.totalorder %s80, %s82
    %p89 = scmp.eq.s32.totalorder %s30, 1
    %p90 = por %p88, %p89
    %p91 = scmp.ne.s32.totalorder %s82, %s83
    %p92 = scmp.eq.s32.totalorder %s30, 0
    %p93 = por %p91, %p92
    %p94 = scmp.ne.s32.totalorder %s82, %s83
    %p95 = scmp.eq.s32.totalorder %s31, 1
    %p96 = por %p94, %p95
    %p98 = scmp.ne.s32.totalorder %s83, %s97
    %p99 = scmp.eq.s32.totalorder %s31, 0
    %p100 = por %p98, %p99
    %s102 = sadd.s32 %s101, 1
    %p105 = scmp.eq.s32.totalorder %s25, 1
    %p106 = scmp.ne.s32.totalorder %s101, %s103
    %p107 = scmp.eq.s32.totalorder %s25, 0
    %p108 = por %p106, %p107
    %p109 = scmp.ne.s32.totalorder %s101, %s103
    %p110 = scmp.eq.s32.totalorder %s30, 1
    %p111 = por %p109, %p110
    %p112 = scmp.ne.s32.totalorder %s103, %s104
    %p113 = scmp.eq.s32.totalorder %s30, 0
    %p114 = por %p112, %p113
    %p115 = scmp.ne.s32.totalorder %s103, %s104
    %p116 = scmp.eq.s32.totalorder %s31, 1
    %p117 = por %p115, %p116
    %p119 = scmp.ne.s32.totalorder %s104, %s118
    %p120 = scmp.eq.s32.totalorder %s31, 0
    %p121 = por %p119, %p120
    %s123 = sadd.s32 %s122, 1
    %p126 = scmp.eq.s32.totalorder %s25, 1
    %p127 = scmp.ne.s32.totalorder %s122, %s124
    %p128 = scmp.eq.s32.totalorder %s25, 0
    %p129 = por %p127, %p128
    %p130 = scmp.ne.s32.totalorder %s122, %s124
    %p131 = scmp.eq.s32.totalorder %s30, 1
    %p132 = por %p130, %p131
    %p133 = scmp.ne.s32.totalorder %s124, %s125
    %p134 = scmp.eq.s32.totalorder %s30, 0
    %p135 = por %p133, %p134
    %p136 = scmp.ne.s32.totalorder %s124, %s125
    %p137 = scmp.eq.s32.totalorder %s31, 1
    %p138 = por %p136, %p137
    %p140 = scmp.ne.s32.totalorder %s125, %s139
    %p141 = scmp.eq.s32.totalorder %s31, 0
    %p142 = por %p140, %p141
    %s144 = sadd.s32 %s143, 1
    %p147 = scmp.eq.s32.totalorder %s25, 1
    %p148 = scmp.ne.s32.totalorder %s143, %s145
    %p149 = scmp.eq.s32.totalorder %s25, 0
    %p150 = por %p148, %p149
    %p151 = scmp.ne.s32.totalorder %s143, %s145
    %p152 = scmp.eq.s32.totalorder %s30, 1
    %p153 = por %p151, %p152
    %p154 = scmp.ne.s32.totalorder %s145, %s146
    %p155 = scmp.eq.s32.totalorder %s30, 0
    %p156 = por %p154, %p155
    %p157 = scmp.ne.s32.totalorder %s145, %s146
    %p158 = scmp.eq.s32.totalorder %s31, 1
    %p159 = por %p157, %p158
    %p161 = scmp.ne.s32.totalorder %s146, %s160
    %p162 = scmp.eq.s32.totalorder %s31, 0
    %p163 = por %p161, %p162
    %s165 = sadd.s32 %s164, 1
    %p168 = scmp.eq.s32.totalorder %s25, 1
    %p169 = scmp.ne.s32.totalorder %s164, %s166
    %p170 = scmp.eq.s32.totalorder %s25, 0
    %p171 = por %p169, %p170
    %p172 = scmp.ne.s32.totalorder %s164, %s166
    %p173 = scmp.eq.s32.totalorder %s30, 1
    %p174 = por %p172, %p173
    %p175 = scmp.ne.s32.totalorder %s166, %s167
    %p176 = scmp.eq.s32.totalorder %s30, 0
    %p177 = por %p175, %p176
    %p178 = scmp.ne.s32.totalorder %s166, %s167
    %p179 = scmp.eq.s32.totalorder %s31, 1
    %p180 = por %p178, %p179
    %p182 = scmp.ne.s32.totalorder %s167, %s181
    %p183 = scmp.eq.s32.totalorder %s31, 0
    %p184 = por %p182, %p183
    %s186 = sadd.s32 %s185, 1
    %p189 = scmp.eq.s32.totalorder %s25, 1
    %p190 = scmp.ne.s32.totalorder %s185, %s187
    %p191 = scmp.eq.s32.totalorder %s25, 0
    %p192 = por %p190, %p191
    %p193 = scmp.ne.s32.totalorder %s185, %s187
    %p194 = scmp.eq.s32.totalorder %s30, 1
    %p195 = por %p193, %p194
    %p196 = scmp.ne.s32.totalorder %s187, %s188
    %p197 = scmp.eq.s32.totalorder %s30, 0
    %p198 = por %p196, %p197
    %p199 = scmp.ne.s32.totalorder %s187, %s188
    %p200 = scmp.eq.s32.totalorder %s31, 1
    %p201 = por %p199, %p200
    %p203 = scmp.ne.s32.totalorder %s188, %s202
    %p204 = scmp.eq.s32.totalorder %s31, 0
    %p205 = por %p203, %p204
    %s207 = sadd.s32 %s206, 1
    %p210 = scmp.eq.s32.totalorder %s25, 1
    %p211 = scmp.ne.s32.totalorder %s206, %s208
    %p212 = scmp.eq.s32.totalorder %s25, 0
    %p213 = por %p211, %p212
    %p214 = scmp.ne.s32.totalorder %s206, %s208
    %p215 = scmp.eq.s32.totalorder %s30, 1
    %p216 = por %p214, %p215
    %p217 = scmp.ne.s32.totalorder %s208, %s209
    %p218 = scmp.eq.s32.totalorder %s30, 0
    %p219 = por %p217, %p218
    %p220 = scmp.ne.s32.totalorder %s208, %s209
    %p221 = scmp.eq.s32.totalorder %s31, 1
    %p222 = por %p220, %p221
    %p224 = scmp.ne.s32.totalorder %s209, %s223
    %p225 = scmp.eq.s32.totalorder %s31, 0
    %p226 = por %p224, %p225
    %s228 = sadd.s32 %s227, 1
    %p231 = scmp.eq.s32.totalorder %s25, 1
    %p232 = scmp.ne.s32.totalorder %s227, %s229
    %p233 = scmp.eq.s32.totalorder %s25, 0
    %p234 = por %p232, %p233
    %p235 = scmp.ne.s32.totalorder %s227, %s229
    %p236 = scmp.eq.s32.totalorder %s30, 1
    %p237 = por %p235, %p236
    %p238 = scmp.ne.s32.totalorder %s229, %s230
    %p239 = scmp.eq.s32.totalorder %s30, 0
    %p240 = por %p238, %p239
    %p241 = scmp.ne.s32.totalorder %s229, %s230
    %p242 = scmp.eq.s32.totalorder %s31, 1
    %p243 = por %p241, %p242
    %p245 = scmp.ne.s32.totalorder %s230, %s244
    %p246 = scmp.eq.s32.totalorder %s31, 0
    %p247 = por %p245, %p246
    %s249 = sadd.s32 %s248, 1
    %p252 = scmp.eq.s32.totalorder %s25, 1
    %p253 = scmp.ne.s32.totalorder %s248, %s250
    %p254 = scmp.eq.s32.totalorder %s25, 0
    %p255 = por %p253, %p254
    %p256 = scmp.ne.s32.totalorder %s248, %s250
    %p257 = scmp.eq.s32.totalorder %s30, 1
    %p258 = por %p256, %p257
    %p259 = scmp.ne.s32.totalorder %s250, %s251
    %p260 = scmp.eq.s32.totalorder %s30, 0
    %p261 = por %p259, %p260
    %p262 = scmp.ne.s32.totalorder %s250, %s251
    %p263 = scmp.eq.s32.totalorder %s31, 1
    %p264 = por %p262, %p263
    %p266 = scmp.ne.s32.totalorder %s251, %s265
    %p267 = scmp.eq.s32.totalorder %s31, 0
    %p268 = por %p266, %p267
    %s270 = sadd.s32 %s269, 1
    %p273 = scmp.eq.s32.totalorder %s25, 1
    %p274 = scmp.ne.s32.totalorder %s269, %s271
    %p275 = scmp.eq.s32.totalorder %s25, 0
    %p276 = por %p274, %p275
    %p277 = scmp.ne.s32.totalorder %s269, %s271
    %p278 = scmp.eq.s32.totalorder %s30, 1
    %p279 = por %p277, %p278
    %p280 = scmp.ne.s32.totalorder %s271, %s272
    %p281 = scmp.eq.s32.totalorder %s30, 0
    %p282 = por %p280, %p281
    %p283 = scmp.ne.s32.totalorder %s271, %s272
    %p284 = scmp.eq.s32.totalorder %s31, 1
    %p285 = por %p283, %p284
    %p287 = scmp.ne.s32.totalorder %s272, %s286
    %p288 = scmp.eq.s32.totalorder %s31, 0
    %p289 = por %p287, %p288
    %s291 = sadd.s32 %s290, 1
    %p294 = scmp.eq.s32.totalorder %s25, 1
    %p295 = scmp.ne.s32.totalorder %s290, %s292
    %p296 = scmp.eq.s32.totalorder %s25, 0
    %p297 = por %p295, %p296
    %p298 = scmp.ne.s32.totalorder %s290, %s292
    %p299 = scmp.eq.s32.totalorder %s30, 1
    %p300 = por %p298, %p299
    %p301 = scmp.ne.s32.totalorder %s292, %s293
    %p302 = scmp.eq.s32.totalorder %s30, 0
    %p303 = por %p301, %p302
    %p304 = scmp.ne.s32.totalorder %s292, %s293
    %p305 = scmp.eq.s32.totalorder %s31, 1
    %p306 = por %p304, %p305
    %p308 = scmp.ne.s32.totalorder %s293, %s307
    %p309 = scmp.eq.s32.totalorder %s31, 0
    %p310 = por %p308, %p309
    %s312 = sadd.s32 %s311, 1
    %p315 = scmp.eq.s32.totalorder %s25, 1
    %p316 = scmp.ne.s32.totalorder %s311, %s313
    %p317 = scmp.eq.s32.totalorder %s25, 0
    %p318 = por %p316, %p317
    %p319 = scmp.ne.s32.totalorder %s311, %s313
    %p320 = scmp.eq.s32.totalorder %s30, 1
    %p321 = por %p319, %p320
    %p322 = scmp.ne.s32.totalorder %s313, %s314
    %p323 = scmp.eq.s32.totalorder %s30, 0
    %p324 = por %p322, %p323
    %p325 = scmp.ne.s32.totalorder %s313, %s314
    %p326 = scmp.eq.s32.totalorder %s31, 1
    %p327 = por %p325, %p326
    %p329 = scmp.ne.s32.totalorder %s314, %s328
    %p330 = scmp.eq.s32.totalorder %s31, 0
    %p331 = por %p329, %p330
    %s333 = sadd.s32 %s332, 1
    %p336 = scmp.eq.s32.totalorder %s25, 1
    %p337 = scmp.ne.s32.totalorder %s332, %s334
    %p338 = scmp.eq.s32.totalorder %s25, 0
    %p339 = por %p337, %p338
    %p340 = scmp.ne.s32.totalorder %s332, %s334
    %p341 = scmp.eq.s32.totalorder %s30, 1
    %p342 = por %p340, %p341
    %p343 = scmp.ne.s32.totalorder %s334, %s335
    %p344 = scmp.eq.s32.totalorder %s30, 0
    %p345 = por %p343, %p344
    %p346 = scmp.ne.s32.totalorder %s334, %s335
    %p347 = scmp.eq.s32.totalorder %s31, 1
    %p348 = por %p346, %p347
    %p350 = scmp.ne.s32.totalorder %s335, %s349
    %p351 = scmp.eq.s32.totalorder %s31, 0
    %p352 = por %p350, %p351
    %s354 = sadd.s32 %s353, 1
    %p357 = scmp.eq.s32.totalorder %s25, 1
    %p358 = scmp.ne.s32.totalorder %s353, %s355
    %p359 = scmp.eq.s32.totalorder %s25, 0
    %p360 = por %p358, %p359
    %p361 = scmp.ne.s32.totalorder %s353, %s355
    %p362 = scmp.eq.s32.totalorder %s30, 1
    %p363 = por %p361, %p362
    %p364 = scmp.ne.s32.totalorder %s355, %s356
    %p365 = scmp.eq.s32.totalorder %s30, 0
    %p366 = por %p364, %p365
    %p367 = scmp.ne.s32.totalorder %s355, %s356
    %p368 = scmp.eq.s32.totalorder %s31, 1
    %p369 = por %p367, %p368
    %p371 = scmp.ne.s32.totalorder %s356, %s370
    %p372 = scmp.eq.s32.totalorder %s31, 0
    %p373 = por %p371, %p372
    %s375 = sadd.s32 %s374, 1
    %p378 = scmp.eq.s32.totalorder %s25, 1
    %p379 = scmp.ne.s32.totalorder %s374, %s376
    %p380 = scmp.eq.s32.totalorder %s25, 0
    %p381 = por %p379, %p380
    %p382 = scmp.ne.s32.totalorder %s374, %s376
    %p383 = scmp.eq.s32.totalorder %s30, 1
    %p384 = por %p382, %p383
    %p385 = scmp.ne.s32.totalorder %s376, %s377
    %p386 = scmp.eq.s32.totalorder %s30, 0
    %p387 = por %p385, %p386
    %p388 = scmp.ne.s32.totalorder %s376, %s377
    %p389 = scmp.eq.s32.totalorder %s31, 1
    %p390 = por %p388, %p389
    %p392 = scmp.ne.s32.totalorder %s377, %s391
    %p393 = scmp.eq.s32.totalorder %s31, 0
    %p394 = por %p392, %p393
    %s396 = sadd.s32 %s395, 1
    %p399 = scmp.eq.s32.totalorder %s25, 1
    %p400 = scmp.ne.s32.totalorder %s395, %s397
    %p401 = scmp.eq.s32.totalorder %s25, 0
    %p402 = por %p400, %p401
    %p403 = scmp.ne.s32.totalorder %s395, %s397
    %p404 = scmp.eq.s32.totalorder %s30, 1
    %p405 = por %p403, %p404
    %p406 = scmp.ne.s32.totalorder %s397, %s398
    %p407 = scmp.eq.s32.totalorder %s30, 0
    %p408 = por %p406, %p407
    %p409 = scmp.ne.s32.totalorder %s397, %s398
    %p410 = scmp.eq.s32.totalorder %s31, 1
    %p411 = por %p409, %p410
    %p413 = scmp.ne.s32.totalorder %s398, %s412
    %p414 = scmp.eq.s32.totalorder %s31, 0
    %p415 = por %p413, %p414
    %s417 = sadd.s32 %s416, 1
    %p420 = scmp.eq.s32.totalorder %s25, 1
    %p421 = scmp.ne.s32.totalorder %s416, %s418
    %p422 = scmp.eq.s32.totalorder %s25, 0
    %p423 = por %p421, %p422
    %p424 = scmp.ne.s32.totalorder %s416, %s418
    %p425 = scmp.eq.s32.totalorder %s30, 1
    %p426 = por %p424, %p425
    %p427 = scmp.ne.s32.totalorder %s418, %s419
    %p428 = scmp.eq.s32.totalorder %s30, 0
    %p429 = por %p427, %p428
    %p430 = scmp.ne.s32.totalorder %s418, %s419
    %p431 = scmp.eq.s32.totalorder %s31, 1
    %p432 = por %p430, %p431
    %p434 = scmp.ne.s32.totalorder %s419, %s433
    %p435 = scmp.eq.s32.totalorder %s31, 0
    %p436 = por %p434, %p435
    %s437 = ssub.s32 %s25, %s32
    %p438 = scmp.eq.s32.totalorder %s437, 0
    %s440 = sadd.s32 %s439, 1
    %s441 = scalar_select %p438, %s439, %s440
    %p444 = pneg %p438
    %p445 = scmp.eq.s32.totalorder %s25, 1
    %p446 = por %p444, %p445
    %p447 = scmp.ne.s32.totalorder %s439, %s442
    %p448 = scmp.eq.s32.totalorder %s25, 0
    %p449 = por %p447, %p448
    %p450 = scmp.ne.s32.totalorder %s439, %s442
    %p451 = scmp.eq.s32.totalorder %s30, 1
    %p452 = por %p450, %p451
    %p453 = scmp.ne.s32.totalorder %s442, %s443
    %p454 = scmp.eq.s32.totalorder %s30, 0
    %p455 = por %p453, %p454
    %p456 = scmp.ne.s32.totalorder %s442, %s443
    %p457 = scmp.eq.s32.totalorder %s31, 1
    %p458 = por %p456, %p457
    %p460 = scmp.ne.s32.totalorder %s443, %s459
    %p461 = scmp.eq.s32.totalorder %s31, 0
    %p462 = por %p460, %p461
    %p463 = scmp.le.s32.totalorder 1, %s25
    %p464 = scmp.lt.s32.totalorder %s25, 3
    %p465 = pnand %p463, %p464
    %p466 = pneg %p465
    // Predicated region
    $region9: #{dense_block_fwd.1} parent=5 // pred_check
      _
    $region10: #{dense_block_fwd.1} parent=5 // pred_check_branch
      %468 = sbr.rel (%p465) target = $region12
    $region11: #{dense_block_fwd.1} parent=5 // pred_region
      %s469 = ssub.s32 %s25, 1
      // Predicated region
      $region13: #{dense_block_fwd.1} parent=11 // pred_check
        %p470 = pneg %p72
      $region14: #{dense_block_fwd.1} parent=11 // pred_check_branch
        %472 = sbr.rel (%p470) target = $region16
      $region15: #{dense_block_fwd.1} parent=11 // pred_region
        _
      $region16: #{dense_block_fwd.1} parent=11 // pred_fallthru
        _
      // Predicated region
      $region17: #{dense_block_fwd.1} parent=11 // pred_check
        %p473 = pneg %p93
      $region18: #{dense_block_fwd.1} parent=11 // pred_check_branch
        %475 = sbr.rel (%p473) target = $region20
      $region19: #{dense_block_fwd.1} parent=11 // pred_region
        _
      $region20: #{dense_block_fwd.1} parent=11 // pred_fallthru
        _
      // Predicated region
      $region21: #{dense_block_fwd.1} parent=11 // pred_check
        %p476 = pneg %p114
      $region22: #{dense_block_fwd.1} parent=11 // pred_check_branch
        %478 = sbr.rel (%p476) target = $region24
      $region23: #{dense_block_fwd.1} parent=11 // pred_region
        _
      $region24: #{dense_block_fwd.1} parent=11 // pred_fallthru
        _
      // Predicated region
      $region25: #{dense_block_fwd.1} parent=11 // pred_check
        %p479 = pneg %p135
      $region26: #{dense_block_fwd.1} parent=11 // pred_check_branch
        %481 = sbr.rel (%p479) target = $region28
      $region27: #{dense_block_fwd.1} parent=11 // pred_region
        _
      $region28: #{dense_block_fwd.1} parent=11 // pred_fallthru
        _
      // Predicated region
      $region29: #{dense_block_fwd.1} parent=11 // pred_check
        %p482 = pneg %p156
      $region30: #{dense_block_fwd.1} parent=11 // pred_check_branch
        %484 = sbr.rel (%p482) target = $region32
      $region31: #{dense_block_fwd.1} parent=11 // pred_region
        _
      $region32: #{dense_block_fwd.1} parent=11 // pred_fallthru
        _
      // Predicated region
      $region33: #{dense_block_fwd.1} parent=11 // pred_check
        %p485 = pneg %p177
      $region34: #{dense_block_fwd.1} parent=11 // pred_check_branch
        %487 = sbr.rel (%p485) target = $region36
      $region35: #{dense_block_fwd.1} parent=11 // pred_region
        _
      $region36: #{dense_block_fwd.1} parent=11 // pred_fallthru
        _
      // Predicated region
      $region37: #{dense_block_fwd.1} parent=11 // pred_check
        %p488 = pneg %p198
      $region38: #{dense_block_fwd.1} parent=11 // pred_check_branch
        %490 = sbr.rel (%p488) target = $region40
      $region39: #{dense_block_fwd.1} parent=11 // pred_region
        _
      $region40: #{dense_block_fwd.1} parent=11 // pred_fallthru
        _
      // Predicated region
      $region41: #{dense_block_fwd.1} parent=11 // pred_check
        %p491 = pneg %p219
      $region42: #{dense_block_fwd.1} parent=11 // pred_check_branch
        %493 = sbr.rel (%p491) target = $region44
      $region43: #{dense_block_fwd.1} parent=11 // pred_region
        _
      $region44: #{dense_block_fwd.1} parent=11 // pred_fallthru
        _
      // Predicated region
      $region45: #{dense_block_fwd.1} parent=11 // pred_check
        %p494 = pneg %p240
      $region46: #{dense_block_fwd.1} parent=11 // pred_check_branch
        %496 = sbr.rel (%p494) target = $region48
      $region47: #{dense_block_fwd.1} parent=11 // pred_region
        _
      $region48: #{dense_block_fwd.1} parent=11 // pred_fallthru
        _
      // Predicated region
      $region49: #{dense_block_fwd.1} parent=11 // pred_check
        %p497 = pneg %p261
      $region50: #{dense_block_fwd.1} parent=11 // pred_check_branch
        %499 = sbr.rel (%p497) target = $region52
      $region51: #{dense_block_fwd.1} parent=11 // pred_region
        _
      $region52: #{dense_block_fwd.1} parent=11 // pred_fallthru
        _
      // Predicated region
      $region53: #{dense_block_fwd.1} parent=11 // pred_check
        %p500 = pneg %p282
      $region54: #{dense_block_fwd.1} parent=11 // pred_check_branch
        %502 = sbr.rel (%p500) target = $region56
      $region55: #{dense_block_fwd.1} parent=11 // pred_region
        _
      $region56: #{dense_block_fwd.1} parent=11 // pred_fallthru
        _
      // Predicated region
      $region57: #{dense_block_fwd.1} parent=11 // pred_check
        %p503 = pneg %p303
      $region58: #{dense_block_fwd.1} parent=11 // pred_check_branch
        %505 = sbr.rel (%p503) target = $region60
      $region59: #{dense_block_fwd.1} parent=11 // pred_region
        _
      $region60: #{dense_block_fwd.1} parent=11 // pred_fallthru
        _
      // Predicated region
      $region61: #{dense_block_fwd.1} parent=11 // pred_check
        %p506 = pneg %p324
      $region62: #{dense_block_fwd.1} parent=11 // pred_check_branch
        %508 = sbr.rel (%p506) target = $region64
      $region63: #{dense_block_fwd.1} parent=11 // pred_region
        _
      $region64: #{dense_block_fwd.1} parent=11 // pred_fallthru
        _
      // Predicated region
      $region65: #{dense_block_fwd.1} parent=11 // pred_check
        %p509 = pneg %p345
      $region66: #{dense_block_fwd.1} parent=11 // pred_check_branch
        %511 = sbr.rel (%p509) target = $region68
      $region67: #{dense_block_fwd.1} parent=11 // pred_region
        _
      $region68: #{dense_block_fwd.1} parent=11 // pred_fallthru
        _
      // Predicated region
      $region69: #{dense_block_fwd.1} parent=11 // pred_check
        %p512 = pneg %p366
      $region70: #{dense_block_fwd.1} parent=11 // pred_check_branch
        %514 = sbr.rel (%p512) target = $region72
      $region71: #{dense_block_fwd.1} parent=11 // pred_region
        _
      $region72: #{dense_block_fwd.1} parent=11 // pred_fallthru
        _
      // Predicated region
      $region73: #{dense_block_fwd.1} parent=11 // pred_check
        %p515 = pneg %p387
      $region74: #{dense_block_fwd.1} parent=11 // pred_check_branch
        %517 = sbr.rel (%p515) target = $region76
      $region75: #{dense_block_fwd.1} parent=11 // pred_region
        _
      $region76: #{dense_block_fwd.1} parent=11 // pred_fallthru
        _
      // Predicated region
      $region77: #{dense_block_fwd.1} parent=11 // pred_check
        %p518 = pneg %p408
      $region78: #{dense_block_fwd.1} parent=11 // pred_check_branch
        %520 = sbr.rel (%p518) target = $region80
      $region79: #{dense_block_fwd.1} parent=11 // pred_region
        _
      $region80: #{dense_block_fwd.1} parent=11 // pred_fallthru
        _
      // Predicated region
      $region81: #{dense_block_fwd.1} parent=11 // pred_check
        %p521 = pneg %p429
      $region82: #{dense_block_fwd.1} parent=11 // pred_check_branch
        %523 = sbr.rel (%p521) target = $region84
      $region83: #{dense_block_fwd.1} parent=11 // pred_region
        _
      $region84: #{dense_block_fwd.1} parent=11 // pred_fallthru
        _
    $region12: #{dense_block_fwd.1} parent=5 // pred_fallthru
      _
    %p524 = scmp.lt.s32.totalorder %s25, 2
    // Predicated region
    $region85: #{dense_block_fwd.1} parent=5 // pred_check
      %p525 = pneg %p524
    $region86: #{dense_block_fwd.1} parent=5 // pred_check_branch
      %527 = sbr.rel (%p525) target = $region88
    $region87: #{dense_block_fwd.1} parent=5 // pred_region
      // Predicated region
      $region89: #{dense_block_fwd.1} parent=87 // pred_check
        %p528 = pneg %p45
      $region90: #{dense_block_fwd.1} parent=87 // pred_check_branch
        %530 = sbr.rel (%p528) target = $region92
      $region91: #{dense_block_fwd.1} parent=87 // pred_region
        %p531 = scmp.lt.s32.totalorder %s25, 1
        %s532 = scalar_select %p531, %s25, 1
        %s533 = smul.addr %s532, 4
        %s534 = smul.addr %s533, 8
        %s535 = scalar_lea.vmem %s0, %s534
      $region92: #{dense_block_fwd.1} parent=87 // pred_fallthru
        _
    $region88: #{dense_block_fwd.1} parent=5 // pred_fallthru
      _
    %p536 = scmp.le.s32.totalorder 1, %s25
    %p537 = scmp.lt.s32.totalorder %s25, 3
    %p538 = pnand %p536, %p537
    %p539 = pneg %p538
    // Predicated region
    $region93: #{dense_block_fwd.1} parent=5 // pred_check
      _
    $region94: #{dense_block_fwd.1} parent=5 // pred_check_branch
      %541 = sbr.rel (%p538) target = $region96
    $region95: #{dense_block_fwd.1} parent=5 // pred_region
      %s542 = ssub.s32 %s25, 1
      %p543 = scmp.lt.s32.totalorder %s30, 1
      %s544 = scalar_select %p543, %s30, 1
      %s545 = smul.addr %s544, 4
      %s546 = smul.addr %s545, 8
      %s547 = scalar_lea.vmem %s0, %s546
      %p548 = pneg %p51
      %p549 = pneg %p48
      %p550 = pneg %p72
      %p551 = pneg %p69
      %p552 = pneg %p93
      %p553 = pneg %p90
      %p554 = pneg %p114
      %p555 = pneg %p111
      %p556 = pneg %p135
      %p557 = pneg %p132
      %p558 = pneg %p156
      %p559 = pneg %p153
      %p560 = pneg %p177
      %p561 = pneg %p174
      %p562 = pneg %p198
      %p563 = pneg %p195
      %p564 = pneg %p219
      %p565 = pneg %p216
      %p566 = pneg %p240
      %p567 = pneg %p237
      %p568 = pneg %p261
      %p569 = pneg %p258
      %p570 = pneg %p282
      %p571 = pneg %p279
      %p572 = pneg %p303
      %p573 = pneg %p300
      %p574 = pneg %p324
      %p575 = pneg %p321
      %p576 = pneg %p345
      %p577 = pneg %p342
      %p578 = pneg %p366
      %p579 = pneg %p363
      %p580 = pneg %p387
      %p581 = pneg %p384
      %p582 = pneg %p408
      %p583 = pneg %p405
      %p584 = pneg %p429
      %p585 = pneg %p426
      %p586 = pneg %p455
      %p587 = pneg %p452
      %p588 = scmp.lt.s32.totalorder %s30, 1
      %s589 = scalar_select %p588, %s30, 1
      %s590 = smul.addr %s589, 12
      %s591 = smul.addr %s590, 8
      %s592 = scalar_lea.vmem %s19, %s591
      %p593 = scmp.lt.s32.totalorder %s30, 1
      %s594 = scalar_select %p593, %s30, 1
      %s595 = smul.addr %s594, 4
      %s596 = smul.addr %s595, 8
      %s597 = scalar_lea.vmem %s0, %s596
      %p598 = scmp.lt.s32.totalorder %s30, 1
      %s599 = scalar_select %p598, %s30, 1
      %s600 = smul.addr %s599, 12
      %s601 = smul.addr %s600, 8
      %s602 = scalar_lea.vmem %s19, %s601
      %v604 = vld [vmem:[%s597] sm:$0xff]
      %v605 = vld [vmem:[%s597 + $0x8] sm:$0xff]
      %v606 = vld [vmem:[%s597 + $0x10] sm:$0xf]
      %v607 = vld [vmem:[%s597 + $0x18] sm:$0xf]
      %608 = vst [vmem:[%s602] sm:$0xff] %v604
      %609 = vst [vmem:[%s602 + $0x8] sm:$0xff] %v605
      %610 = vst [vmem:[%s602 + $0x10] sm:$0xf] %v606
      %611 = vst [vmem:[%s602 + $0x18] sm:$0xf] %v607
      %v612 = vlaneseq
      %v613 = vand.u32 %v612, 127
      %v614 = vadd.s32 %v613, 128
      %vm615 = vcmp.lt.s32.totalorder %v613, 0
      %v616 = vsub.s32 0, %v613
      %v617 = vsel %vm615, %v616, %v613
      %v618 = vshrl.u32 %v617, 4
      %v619 = vand.u32 %v617, 15
      %v620 = vsub.s32 0, %v619
      %v621 = vsel %vm615, %v620, %v619
      %vm622 = vcmp.lt.s32.totalorder %v614, 0
      %v623 = vsub.s32 0, %v614
      %v624 = vsel %vm622, %v623, %v614
      %v625 = vshrl.u32 %v624, 4
      %v626 = vand.u32 %v624, 15
      %v627 = vsub.s32 0, %v626
      %v628 = vsel %vm622, %v627, %v626
      %vm629 = vcmp.ne.s32.totalorder %v621, 0
      %vm630 = vcmp.ne.s32.totalorder %v628, 0
      %vm631 = vcmp.lt.s32.totalorder %v621, 0
      %vm632 = vcmp.lt.s32.totalorder %v628, 0
      %vm633 = vmand %vm631, %vm629
      %vm634 = vmand %vm632, %vm630
      %v635 = vadd.s32 %v621, 16
      %v636 = vadd.s32 %v628, 16
      %v637 = vsel %vm633, %v635, %v621
      %v638 = vsel %vm634, %v636, %v628
      %vm639 = vcmp.ne.s32.totalorder %v637, 0
      %vm640 = vcmp.ne.s32.totalorder %v638, 0
      %v641 = vsel %vm639, 1, 0
      %v642 = vsel %vm640, 1, 0
      %v643 = vcvt.s32.f32 %v641
      %v644 = vcvt.s32.f32 %v642
      %vm645 = vcmp.ne.s32.totalorder %v637, 15
      %vm646 = vcmp.ne.s32.totalorder %v638, 15
      %v647 = vsel %vm645, 1, 0
      %v648 = vsel %vm646, 1, 0
      %v649 = vcvt.s32.f32 %v647
      %v650 = vcvt.s32.f32 %v648
      %v651 = vld [vmem:[%s602] sm:$0xff]
      %v652 = vld [vmem:[%s602 + $0x8] sm:$0xff]
      %v653 = vld [vmem:[%s602 + $0x10] sm:$0xf]
      %v654 = vld [vmem:[%s602 + $0x18] sm:$0xf]
      %v655 = vld [vmem:[%s1] sm:$0xff]
      %v656 = vld [vmem:[%s1 + $0x8] sm:$0xf]
      %658 = vset.pattern.permute.xlu0 0
      %659 = vperm.xlu0 %658, %v655
      %v660 = vpop.permute.xlu0 %659
      %663 = vset.pattern.permute.xlu0 0
      %664 = vperm.xlu0 %663, %v656
      %v665 = vpop.permute.xlu0 %664
      %v667 = vmul.f32 %v651, %v660
      %v668 = vmul.f32 %v652, %v660
      %v669 = vmul.f32 %v653, %v665
      %v670 = vmul.f32 %v654, %v665
      %v671 = vld [vmem:[%s2] sm:$0xff]
      %v672 = vld [vmem:[%s2 + $0x8] sm:$0xf]
      %674 = vset.pattern.permute.xlu0 0
      %675 = vperm.xlu0 %674, %v671
      %v676 = vpop.permute.xlu0 %675
      %679 = vset.pattern.permute.xlu0 0
      %680 = vperm.xlu0 %679, %v672
      %v681 = vpop.permute.xlu0 %680
      %v683 = vadd.f32 %v667, %v676
      %v684 = vadd.f32 %v668, %v676
      %v685 = vadd.f32 %v669, %v681
      %v686 = vadd.f32 %v670, %v681
      %v687 = vmax.f32 %v683, 0.0
      %v688 = vmax.f32 %v684, 0.0
      %v689 = vmax.f32 %v685, 0.0
      %v690 = vmax.f32 %v686, 0.0
      %v691 = vld [vmem:[%s3] sm:$0xf]
      %v692 = vld [vmem:[%s3 + $0x4] sm:$0xf]
      %v693 = vld [vmem:[%s3 + $0x8] sm:$0xf]
      %v694 = vld [vmem:[%s3 + $0xc] sm:$0xf]
      %v695 = vld [vmem:[%s3 + $0x10] sm:$0xf]
      %v696 = vld [vmem:[%s3 + $0x14] sm:$0xf]
      %v697 = vpack.c.bf16 %v689, %v687
      %v698 = vpack.c.bf16 %v690, %v688
      %v705 = vunpack.c.l.b16 %v691
      %v706 = vunpack.c.l.b16 %v692
      %v707 = vunpack.c.l.b16 %v693
      %v708 = vunpack.c.l.b16 %v694
      %v709 = vunpack.c.l.b16 %v695
      %v710 = vunpack.c.l.b16 %v696
      %v711 = vpack.c.b16 %v706, %v705
      %v712 = vpack.c.b16 %v708, %v707
      %v713 = vpack.c.b16 %v710, %v709
      %vm714 = vcmask 97280
      %v716 = vsel %vm714, %v711, 0
      %v719 = vsel %vm714, %v712, 0
      %v722 = vsel %vm714, %v713, 0
      %vm724 = vcmask 1045504
      %v726 = vsel %vm724, %v697, 0
      %v729 = vsel %vm724, %v698, 0
      %731 = vmatpush.bf16.msra.mxu0 0
      %732 = vmatpush.bf16.msra.mxu0 0
      %733 = vmatpush.bf16.msra.mxu0 0
      %734 = vmatpush.bf16.msra.mxu0 0
      %735 = vmatpush.bf16.msra.mxu0 0
      %736 = vmatpush.bf16.msra.mxu0 0
      %737 = vmatpush.bf16.msra.mxu0 0
      %738 = vmatpush.bf16.msra.mxu0 %v726
      %739 = vmatmul.bf16.gmra.mxu0 %v716
      %v740 = vpop.f32.mrf.mxu0
      %v741 = vadd.f32 0.0, %v740
      %v742 = vpop.f32.mrf.mxu0
      %v743 = vadd.f32 0.0, %v742
      %744 = vmatmul.bf16.gmra.mxu0 %v719
      %v745 = vpop.f32.mrf.mxu0
      %v746 = vadd.f32 0.0, %v745
      %v747 = vpop.f32.mrf.mxu0
      %v748 = vadd.f32 0.0, %v747
      %749 = vmatmul.bf16.gmra.mxu0 %v722
      %v750 = vpop.f32.mrf.mxu0
      %v751 = vadd.f32 0.0, %v750
      %v752 = vpop.f32.mrf.mxu0
      %v753 = vadd.f32 0.0, %v752
      %754 = vdwg.mxu0
      %755 = vmatpush.bf16.msra.mxu0 0
      %756 = vmatpush.bf16.msra.mxu0 0
      %757 = vmatpush.bf16.msra.mxu0 0
      %758 = vmatpush.bf16.msra.mxu0 0
      %759 = vmatpush.bf16.msra.mxu0 0
      %760 = vmatpush.bf16.msra.mxu0 0
      %761 = vmatpush.bf16.msra.mxu0 0
      %762 = vmatpush.bf16.msra.mxu0 %v729
      %763 = vmatmul.bf16.gmra.mxu0 %v716
      %v764 = vpop.f32.mrf.mxu0
      %v765 = vadd.f32 0.0, %v764
      %v766 = vpop.f32.mrf.mxu0
      %v767 = vadd.f32 0.0, %v766
      %768 = vmatmul.bf16.gmra.mxu0 %v719
      %v769 = vpop.f32.mrf.mxu0
      %v770 = vadd.f32 0.0, %v769
      %v771 = vpop.f32.mrf.mxu0
      %v772 = vadd.f32 0.0, %v771
      %773 = vmatmul.bf16.gmra.mxu0 %v722
      %v774 = vpop.f32.mrf.mxu0
      %v775 = vadd.f32 0.0, %v774
      %v776 = vpop.f32.mrf.mxu0
      %v777 = vadd.f32 0.0, %v776
      %778 = vdwg.mxu0
      %v779 = vld [vmem:[%s4] sm:$0xff]
      %v780 = vld [vmem:[%s4 + $0x8] sm:$0xff]
      %v781 = vld [vmem:[%s4 + $0x10] sm:$0xff]
      %v782 = vld [vmem:[%s4 + $0x18] sm:$0xff]
      %v783 = vld [vmem:[%s4 + $0x20] sm:$0xff]
      %v784 = vld [vmem:[%s4 + $0x28] sm:$0xff]
      %786 = vset.pattern.permute.xlu0 0
      %787 = vperm.xlu0 %786, %v779
      %v788 = vpop.permute.xlu0 %787
      %791 = vset.pattern.permute.xlu0 0
      %792 = vperm.xlu0 %791, %v780
      %v793 = vpop.permute.xlu0 %792
      %796 = vset.pattern.permute.xlu0 0
      %797 = vperm.xlu0 %796, %v781
      %v798 = vpop.permute.xlu0 %797
      %801 = vset.pattern.permute.xlu0 0
      %802 = vperm.xlu0 %801, %v782
      %v803 = vpop.permute.xlu0 %802
      %806 = vset.pattern.permute.xlu0 0
      %807 = vperm.xlu0 %806, %v783
      %v808 = vpop.permute.xlu0 %807
      %811 = vset.pattern.permute.xlu0 0
      %812 = vperm.xlu0 %811, %v784
      %v813 = vpop.permute.xlu0 %812
      %v815 = vmul.f32 %v741, %v788
      %v816 = vmul.f32 %v765, %v788
      %v817 = vmul.f32 %v743, %v793
      %v818 = vmul.f32 %v767, %v793
      %v819 = vmul.f32 %v746, %v798
      %v820 = vmul.f32 %v770, %v798
      %v821 = vmul.f32 %v748, %v803
      %v822 = vmul.f32 %v772, %v803
      %v823 = vmul.f32 %v751, %v808
      %v824 = vmul.f32 %v775, %v808
      %v825 = vmul.f32 %v753, %v813
      %v826 = vmul.f32 %v777, %v813
      %v827 = vld [vmem:[%s5] sm:$0xff]
      %v828 = vld [vmem:[%s5 + $0x8] sm:$0xff]
      %v829 = vld [vmem:[%s5 + $0x10] sm:$0xff]
      %v830 = vld [vmem:[%s5 + $0x18] sm:$0xff]
      %v831 = vld [vmem:[%s5 + $0x20] sm:$0xff]
      %v832 = vld [vmem:[%s5 + $0x28] sm:$0xff]
      %834 = vset.pattern.permute.xlu0 0
      %835 = vperm.xlu0 %834, %v827
      %v836 = vpop.permute.xlu0 %835
      %839 = vset.pattern.permute.xlu0 0
      %840 = vperm.xlu0 %839, %v828
      %v841 = vpop.permute.xlu0 %840
      %844 = vset.pattern.permute.xlu0 0
      %845 = vperm.xlu0 %844, %v829
      %v846 = vpop.permute.xlu0 %845
      %849 = vset.pattern.permute.xlu0 0
      %850 = vperm.xlu0 %849, %v830
      %v851 = vpop.permute.xlu0 %850
      %854 = vset.pattern.permute.xlu0 0
      %855 = vperm.xlu0 %854, %v831
      %v856 = vpop.permute.xlu0 %855
      %859 = vset.pattern.permute.xlu0 0
      %860 = vperm.xlu0 %859, %v832
      %v861 = vpop.permute.xlu0 %860
      %v863 = vadd.f32 %v815, %v836
      %v864 = vadd.f32 %v816, %v836
      %v865 = vadd.f32 %v817, %v841
      %v866 = vadd.f32 %v818, %v841
      %v867 = vadd.f32 %v819, %v846
      %v868 = vadd.f32 %v820, %v846
      %v869 = vadd.f32 %v821, %v851
      %v870 = vadd.f32 %v822, %v851
      %v871 = vadd.f32 %v823, %v856
      %v872 = vadd.f32 %v824, %v856
      %v873 = vadd.f32 %v825, %v861
      %v874 = vadd.f32 %v826, %v861
      %v875 = vmax.f32 %v863, 0.0
      %v876 = vmax.f32 %v864, 0.0
      %v877 = vmax.f32 %v865, 0.0
      %v878 = vmax.f32 %v866, 0.0
      %v879 = vmax.f32 %v867, 0.0
      %v880 = vmax.f32 %v868, 0.0
      %v881 = vmax.f32 %v869, 0.0
      %v882 = vmax.f32 %v870, 0.0
      %v883 = vmax.f32 %v871, 0.0
      %v884 = vmax.f32 %v872, 0.0
      %v885 = vmax.f32 %v873, 0.0
      %v886 = vmax.f32 %v874, 0.0
      %v887 = vld [vmem:[%s6] sm:$0xf]
      %v888 = vld [vmem:[%s6 + $0x4] sm:$0x3]
      %v889 = vpack.c.bf16 0.0, 0.0
      %v890 = vpack.c.bf16 %v877, %v875
      %v891 = vpack.c.bf16 %v878, %v876
      %v892 = vpack.c.bf16 %v881, %v879
      %v893 = vpack.c.bf16 %v882, %v880
      %v894 = vpack.c.bf16 %v885, %v883
      %v895 = vpack.c.bf16 %v886, %v884
      %v898 = vunpack.c.l.b16 %v887
      %v899 = vunpack.c.l.b16 %v888
      %v900 = vpack.c.b16 %v899, %v898
      %908 = vrot.lane.b32.xlu0 %v889, 17
      %v909 = vpop.permute.xlu0 %908
      %910 = vrot.lane.b32.xlu0 %v890, 17
      %v911 = vpop.permute.xlu0 %910
      %912 = vrot.lane.b32.xlu0 %v891, 17
      %v913 = vpop.permute.xlu0 %912
      %914 = vrot.lane.b32.xlu0 %v892, 17
      %v915 = vpop.permute.xlu0 %914
      %916 = vrot.lane.b32.xlu0 %v893, 17
      %v917 = vpop.permute.xlu0 %916
      %918 = vrot.lane.b32.xlu0 %v894, 17
      %v919 = vpop.permute.xlu0 %918
      %920 = vrot.lane.b32.xlu0 %v895, 17
      %v921 = vpop.permute.xlu0 %920
      %vm922 = vcmask 138240
      %v923 = vsel %vm922, %v909, %v911
      %v924 = vsel %vm922, %v911, %v913
      %v925 = vsel %vm922, %v909, %v915
      %v926 = vsel %vm922, %v915, %v917
      %v927 = vsel %vm922, %v909, %v919
      %v928 = vsel %vm922, %v919, %v921
      %vm935 = vcmask 392192
      %v937 = vsel %vm935, %v900, 0
      %939 = vmatpush.bf16.msra.mxu0 0
      %940 = vmatpush.bf16.msra.mxu0 0
      %941 = vmatpush.bf16.msra.mxu0 0
      %942 = vmatpush.bf16.msra.mxu0 0
      %943 = vmatpush.bf16.msra.mxu0 0
      %944 = vmatpush.bf16.msra.mxu0 %v927
      %945 = vmatpush.bf16.msra.mxu0 %v925
      %946 = vmatpush.bf16.msra.mxu0 %v923
      %947 = vmatmul.bf16.gmra.mxu0 %v937
      %v948 = vpop.f32.mrf.mxu0
      %v949 = vadd.f32 0.0, %v948
      %v950 = vpop.f32.mrf.mxu0
      %v951 = vadd.f32 0.0, %v950
      %952 = vdwg.mxu0
      %953 = vmatpush.bf16.msra.mxu0 0
      %954 = vmatpush.bf16.msra.mxu0 0
      %955 = vmatpush.bf16.msra.mxu0 0
      %956 = vmatpush.bf16.msra.mxu0 0
      %957 = vmatpush.bf16.msra.mxu0 0
      %958 = vmatpush.bf16.msra.mxu0 %v928
      %959 = vmatpush.bf16.msra.mxu0 %v926
      %960 = vmatpush.bf16.msra.mxu0 %v924
      %961 = vmatmul.bf16.gmra.mxu0 %v937
      %v962 = vpop.f32.mrf.mxu0
      %v963 = vadd.f32 0.0, %v962
      %v964 = vpop.f32.mrf.mxu0
      %v965 = vadd.f32 0.0, %v964
      %966 = vdwg.mxu0
      %v967 = vmul.f32 %v949, %v643
      %v968 = vmul.f32 %v963, %v644
      %v969 = vmul.f32 %v951, %v643
      %v970 = vmul.f32 %v965, %v644
      %v971 = vadd.f32 %v967, 0.0
      %v972 = vadd.f32 %v968, 0.0
      %v973 = vadd.f32 %v969, 0.0
      %v974 = vadd.f32 %v970, 0.0
      %s975 = scalar_lea.vmem %s6, 8
      %v976 = vld [vmem:[%s975] sm:$0xf]
      %v977 = vld [vmem:[%s975 + $0x4] sm:$0x3]
      %v980 = vunpack.c.l.b16 %v976
      %v981 = vunpack.c.l.b16 %v977
      %v982 = vpack.c.b16 %v981, %v980
      %983 = vrot.lane.b32.xlu0 %v889, 16
      %v984 = vpop.permute.xlu0 %983
      %985 = vrot.lane.b32.xlu0 %v890, 16
      %v986 = vpop.permute.xlu0 %985
      %987 = vrot.lane.b32.xlu0 %v891, 16
      %v988 = vpop.permute.xlu0 %987
      %989 = vrot.lane.b32.xlu0 %v892, 16
      %v990 = vpop.permute.xlu0 %989
      %991 = vrot.lane.b32.xlu0 %v893, 16
      %v992 = vpop.permute.xlu0 %991
      %993 = vrot.lane.b32.xlu0 %v894, 16
      %v994 = vpop.permute.xlu0 %993
      %995 = vrot.lane.b32.xlu0 %v895, 16
      %v996 = vpop.permute.xlu0 %995
      %vm997 = vcmask 130048
      %v998 = vsel %vm997, %v984, %v986
      %v999 = vsel %vm997, %v986, %v988
      %v1000 = vsel %vm997, %v984, %v990
      %v1001 = vsel %vm997, %v990, %v992
      %v1002 = vsel %vm997, %v984, %v994
      %v1003 = vsel %vm997, %v994, %v996
      %v1011 = vsel %vm935, %v982, 0
      %1013 = vmatpush.bf16.msra.mxu0 0
      %1014 = vmatpush.bf16.msra.mxu0 0
      %1015 = vmatpush.bf16.msra.mxu0 0
      %1016 = vmatpush.bf16.msra.mxu0 0
      %1017 = vmatpush.bf16.msra.mxu0 0
      %1018 = vmatpush.bf16.msra.mxu0 %v1002
      %1019 = vmatpush.bf16.msra.mxu0 %v1000
      %1020 = vmatpush.bf16.msra.mxu0 %v998
      %1021 = vmatmul.bf16.gmra.mxu0 %v1011
      %v1022 = vpop.f32.mrf.mxu0
      %v1023 = vadd.f32 0.0, %v1022
      %v1024 = vpop.f32.mrf.mxu0
      %v1025 = vadd.f32 0.0, %v1024
      %1026 = vdwg.mxu0
      %1027 = vmatpush.bf16.msra.mxu0 0
      %1028 = vmatpush.bf16.msra.mxu0 0
      %1029 = vmatpush.bf16.msra.mxu0 0
      %1030 = vmatpush.bf16.msra.mxu0 0
      %1031 = vmatpush.bf16.msra.mxu0 0
      %1032 = vmatpush.bf16.msra.mxu0 %v1003
      %1033 = vmatpush.bf16.msra.mxu0 %v1001
      %1034 = vmatpush.bf16.msra.mxu0 %v999
      %1035 = vmatmul.bf16.gmra.mxu0 %v1011
      %v1036 = vpop.f32.mrf.mxu0
      %v1037 = vadd.f32 0.0, %v1036
      %v1038 = vpop.f32.mrf.mxu0
      %v1039 = vadd.f32 0.0, %v1038
      %1040 = vdwg.mxu0
      %v1041 = vadd.f32 %v971, %v1023
      %v1042 = vadd.f32 %v972, %v1037
      %v1043 = vadd.f32 %v973, %v1025
      %v1044 = vadd.f32 %v974, %v1039
      %s1045 = scalar_lea.vmem %s6, 16
      %v1046 = vld [vmem:[%s1045] sm:$0xf]
      %v1047 = vld [vmem:[%s1045 + $0x4] sm:$0x3]
      %v1050 = vunpack.c.l.b16 %v1046
      %v1051 = vunpack.c.l.b16 %v1047
      %v1052 = vpack.c.b16 %v1051, %v1050
      %1053 = vrot.lane.b32.xlu0 %v889, 15
      %v1054 = vpop.permute.xlu0 %1053
      %1055 = vrot.lane.b32.xlu0 %v890, 15
      %v1056 = vpop.permute.xlu0 %1055
      %1057 = vrot.lane.b32.xlu0 %v891, 15
      %v1058 = vpop.permute.xlu0 %1057
      %1059 = vrot.lane.b32.xlu0 %v892, 15
      %v1060 = vpop.permute.xlu0 %1059
      %1061 = vrot.lane.b32.xlu0 %v893, 15
      %v1062 = vpop.permute.xlu0 %1061
      %1063 = vrot.lane.b32.xlu0 %v894, 15
      %v1064 = vpop.permute.xlu0 %1063
      %1065 = vrot.lane.b32.xlu0 %v895, 15
      %v1066 = vpop.permute.xlu0 %1065
      %vm1067 = vcmask 121856
      %v1068 = vsel %vm1067, %v1054, %v1056
      %v1069 = vsel %vm1067, %v1056, %v1058
      %v1070 = vsel %vm1067, %v1054, %v1060
      %v1071 = vsel %vm1067, %v1060, %v1062
      %v1072 = vsel %vm1067, %v1054, %v1064
      %v1073 = vsel %vm1067, %v1064, %v1066
      %v1081 = vsel %vm935, %v1052, 0
      %1083 = vmatpush.bf16.msra.mxu0 0
      %1084 = vmatpush.bf16.msra.mxu0 0
      %1085 = vmatpush.bf16.msra.mxu0 0
      %1086 = vmatpush.bf16.msra.mxu0 0
      %1087 = vmatpush.bf16.msra.mxu0 0
      %1088 = vmatpush.bf16.msra.mxu0 %v1072
      %1089 = vmatpush.bf16.msra.mxu0 %v1070
      %1090 = vmatpush.bf16.msra.mxu0 %v1068
      %1091 = vmatmul.bf16.gmra.mxu0 %v1081
      %v1092 = vpop.f32.mrf.mxu0
      %v1093 = vadd.f32 0.0, %v1092
      %v1094 = vpop.f32.mrf.mxu0
      %v1095 = vadd.f32 0.0, %v1094
      %1096 = vdwg.mxu0
      %1097 = vmatpush.bf16.msra.mxu0 0
      %1098 = vmatpush.bf16.msra.mxu0 0
      %1099 = vmatpush.bf16.msra.mxu0 0
      %1100 = vmatpush.bf16.msra.mxu0 0
      %1101 = vmatpush.bf16.msra.mxu0 0
      %1102 = vmatpush.bf16.msra.mxu0 %v1073
      %1103 = vmatpush.bf16.msra.mxu0 %v1071
      %1104 = vmatpush.bf16.msra.mxu0 %v1069
      %1105 = vmatmul.bf16.gmra.mxu0 %v1081
      %v1106 = vpop.f32.mrf.mxu0
      %v1107 = vadd.f32 0.0, %v1106
      %v1108 = vpop.f32.mrf.mxu0
      %v1109 = vadd.f32 0.0, %v1108
      %1110 = vdwg.mxu0
      %v1111 = vmul.f32 %v1093, %v649
      %v1112 = vmul.f32 %v1107, %v650
      %v1113 = vmul.f32 %v1095, %v649
      %v1114 = vmul.f32 %v1109, %v650
      %v1115 = vadd.f32 %v1041, %v1111
      %v1116 = vadd.f32 %v1042, %v1112
      %v1117 = vadd.f32 %v1043, %v1113
      %v1118 = vadd.f32 %v1044, %v1114
      %s1119 = scalar_lea.vmem %s6, 24
      %v1120 = vld [vmem:[%s1119] sm:$0xf]
      %v1121 = vld [vmem:[%s1119 + $0x4] sm:$0x3]
      %v1124 = vunpack.c.l.b16 %v1120
      %v1125 = vunpack.c.l.b16 %v1121
      %v1126 = vpack.c.b16 %v1125, %v1124
      %1127 = vrot.lane.b32.xlu0 %v889, 1
      %v1128 = vpop.permute.xlu0 %1127
      %1129 = vrot.lane.b32.xlu0 %v890, 1
      %v1130 = vpop.permute.xlu0 %1129
      %1131 = vrot.lane.b32.xlu0 %v891, 1
      %v1132 = vpop.permute.xlu0 %1131
      %1133 = vrot.lane.b32.xlu0 %v892, 1
      %v1134 = vpop.permute.xlu0 %1133
      %1135 = vrot.lane.b32.xlu0 %v893, 1
      %v1136 = vpop.permute.xlu0 %1135
      %1137 = vrot.lane.b32.xlu0 %v894, 1
      %v1138 = vpop.permute.xlu0 %1137
      %1139 = vrot.lane.b32.xlu0 %v895, 1
      %v1140 = vpop.permute.xlu0 %1139
      %vm1141 = vcmask 7168
      %v1142 = vsel %vm1141, %v1128, %v1130
      %v1143 = vsel %vm1141, %v1130, %v1132
      %v1144 = vsel %vm1141, %v1128, %v1134
      %v1145 = vsel %vm1141, %v1134, %v1136
      %v1146 = vsel %vm1141, %v1128, %v1138
      %v1147 = vsel %vm1141, %v1138, %v1140
      %v1155 = vsel %vm935, %v1126, 0
      %1157 = vmatpush.bf16.msra.mxu0 0
      %1158 = vmatpush.bf16.msra.mxu0 0
      %1159 = vmatpush.bf16.msra.mxu0 0
      %1160 = vmatpush.bf16.msra.mxu0 0
      %1161 = vmatpush.bf16.msra.mxu0 0
      %1162 = vmatpush.bf16.msra.mxu0 %v1146
      %1163 = vmatpush.bf16.msra.mxu0 %v1144
      %1164 = vmatpush.bf16.msra.mxu0 %v1142
      %1165 = vmatmul.bf16.gmra.mxu0 %v1155
      %v1166 = vpop.f32.mrf.mxu0
      %v1167 = vadd.f32 0.0, %v1166
      %v1168 = vpop.f32.mrf.mxu0
      %v1169 = vadd.f32 0.0, %v1168
      %1170 = vdwg.mxu0
      %1171 = vmatpush.bf16.msra.mxu0 0
      %1172 = vmatpush.bf16.msra.mxu0 0
      %1173 = vmatpush.bf16.msra.mxu0 0
      %1174 = vmatpush.bf16.msra.mxu0 0
      %1175 = vmatpush.bf16.msra.mxu0 0
      %1176 = vmatpush.bf16.msra.mxu0 %v1147
      %1177 = vmatpush.bf16.msra.mxu0 %v1145
      %1178 = vmatpush.bf16.msra.mxu0 %v1143
      %1179 = vmatmul.bf16.gmra.mxu0 %v1155
      %v1180 = vpop.f32.mrf.mxu0
      %v1181 = vadd.f32 0.0, %v1180
      %v1182 = vpop.f32.mrf.mxu0
      %v1183 = vadd.f32 0.0, %v1182
      %1184 = vdwg.mxu0
      %v1185 = vmul.f32 %v1167, %v643
      %v1186 = vmul.f32 %v1181, %v644
      %v1187 = vmul.f32 %v1169, %v643
      %v1188 = vmul.f32 %v1183, %v644
      %v1189 = vadd.f32 %v1115, %v1185
      %v1190 = vadd.f32 %v1116, %v1186
      %v1191 = vadd.f32 %v1117, %v1187
      %v1192 = vadd.f32 %v1118, %v1188
      %s1193 = scalar_lea.vmem %s6, 32
      %v1194 = vld [vmem:[%s1193] sm:$0xf]
      %v1195 = vld [vmem:[%s1193 + $0x4] sm:$0x3]
      %v1198 = vunpack.c.l.b16 %v1194
      %v1199 = vunpack.c.l.b16 %v1195
      %v1200 = vpack.c.b16 %v1199, %v1198
      %v1202 = vsel %vm935, %v1200, 0
      %1204 = vmatpush.bf16.msra.mxu0 0
      %1205 = vmatpush.bf16.msra.mxu0 0
      %1206 = vmatpush.bf16.msra.mxu0 0
      %1207 = vmatpush.bf16.msra.mxu0 0
      %1208 = vmatpush.bf16.msra.mxu0 0
      %1209 = vmatpush.bf16.msra.mxu0 %v894
      %1210 = vmatpush.bf16.msra.mxu0 %v892
      %1211 = vmatpush.bf16.msra.mxu0 %v890
      %1212 = vmatmul.bf16.gmra.mxu0 %v1202
      %v1213 = vpop.f32.mrf.mxu0
      %v1214 = vadd.f32 0.0, %v1213
      %v1215 = vpop.f32.mrf.mxu0
      %v1216 = vadd.f32 0.0, %v1215
      %1217 = vdwg.mxu0
      %1218 = vmatpush.bf16.msra.mxu0 0
      %1219 = vmatpush.bf16.msra.mxu0 0
      %1220 = vmatpush.bf16.msra.mxu0 0
      %1221 = vmatpush.bf16.msra.mxu0 0
      %1222 = vmatpush.bf16.msra.mxu0 0
      %1223 = vmatpush.bf16.msra.mxu0 %v895
      %1224 = vmatpush.bf16.msra.mxu0 %v893
      %1225 = vmatpush.bf16.msra.mxu0 %v891
      %1226 = vmatmul.bf16.gmra.mxu0 %v1202
      %v1227 = vpop.f32.mrf.mxu0
      %v1228 = vadd.f32 0.0, %v1227
      %v1229 = vpop.f32.mrf.mxu0
      %v1230 = vadd.f32 0.0, %v1229
      %1231 = vdwg.mxu0
      %v1232 = vadd.f32 %v1189, %v1214
      %v1233 = vadd.f32 %v1190, %v1228
      %v1234 = vadd.f32 %v1191, %v1216
      %v1235 = vadd.f32 %v1192, %v1230
      %s1236 = scalar_lea.vmem %s6, 40
      %v1237 = vld [vmem:[%s1236] sm:$0xf]
      %v1238 = vld [vmem:[%s1236 + $0x4] sm:$0x3]
      %v1241 = vunpack.c.l.b16 %v1237
      %v1242 = vunpack.c.l.b16 %v1238
      %v1243 = vpack.c.b16 %v1242, %v1241
      %1244 = vrot.lane.b32.xlu0 %v890, 127
      %v1245 = vpop.permute.xlu0 %1244
      %1246 = vrot.lane.b32.xlu0 %v891, 127
      %v1247 = vpop.permute.xlu0 %1246
      %1248 = vrot.lane.b32.xlu0 %v889, 127
      %v1249 = vpop.permute.xlu0 %1248
      %1250 = vrot.lane.b32.xlu0 %v892, 127
      %v1251 = vpop.permute.xlu0 %1250
      %1252 = vrot.lane.b32.xlu0 %v893, 127
      %v1253 = vpop.permute.xlu0 %1252
      %1254 = vrot.lane.b32.xlu0 %v894, 127
      %v1255 = vpop.permute.xlu0 %1254
      %1256 = vrot.lane.b32.xlu0 %v895, 127
      %v1257 = vpop.permute.xlu0 %1256
      %vm1258 = vcmask 1039360
      %v1259 = vsel %vm1258, %v1245, %v1247
      %v1260 = vsel %vm1258, %v1247, %v1249
      %v1261 = vsel %vm1258, %v1251, %v1253
      %v1262 = vsel %vm1258, %v1253, %v1249
      %v1263 = vsel %vm1258, %v1255, %v1257
      %v1264 = vsel %vm1258, %v1257, %v1249
      %v1272 = vsel %vm935, %v1243, 0
      %1274 = vmatpush.bf16.msra.mxu0 0
      %1275 = vmatpush.bf16.msra.mxu0 0
      %1276 = vmatpush.bf16.msra.mxu0 0
      %1277 = vmatpush.bf16.msra.mxu0 0
      %1278 = vmatpush.bf16.msra.mxu0 0
      %1279 = vmatpush.bf16.msra.mxu0 %v1263
      %1280 = vmatpush.bf16.msra.mxu0 %v1261
      %1281 = vmatpush.bf16.msra.mxu0 %v1259
      %1282 = vmatmul.bf16.gmra.mxu0 %v1272
      %v1283 = vpop.f32.mrf.mxu0
      %v1284 = vadd.f32 0.0, %v1283
      %v1285 = vpop.f32.mrf.mxu0
      %v1286 = vadd.f32 0.0, %v1285
      %1287 = vdwg.mxu0
      %1288 = vmatpush.bf16.msra.mxu0 0
      %1289 = vmatpush.bf16.msra.mxu0 0
      %1290 = vmatpush.bf16.msra.mxu0 0
      %1291 = vmatpush.bf16.msra.mxu0 0
      %1292 = vmatpush.bf16.msra.mxu0 0
      %1293 = vmatpush.bf16.msra.mxu0 %v1264
      %1294 = vmatpush.bf16.msra.mxu0 %v1262
      %1295 = vmatpush.bf16.msra.mxu0 %v1260
      %1296 = vmatmul.bf16.gmra.mxu0 %v1272
      %v1297 = vpop.f32.mrf.mxu0
      %v1298 = vadd.f32 0.0, %v1297
      %v1299 = vpop.f32.mrf.mxu0
      %v1300 = vadd.f32 0.0, %v1299
      %1301 = vdwg.mxu0
      %v1302 = vmul.f32 %v1284, %v649
      %v1303 = vmul.f32 %v1298, %v650
      %v1304 = vmul.f32 %v1286, %v649
      %v1305 = vmul.f32 %v1300, %v650
      %v1306 = vadd.f32 %v1232, %v1302
      %v1307 = vadd.f32 %v1233, %v1303
      %v1308 = vadd.f32 %v1234, %v1304
      %v1309 = vadd.f32 %v1235, %v1305
      %s1310 = scalar_lea.vmem %s6, 48
      %v1311 = vld [vmem:[%s1310] sm:$0xf]
      %v1312 = vld [vmem:[%s1310 + $0x4] sm:$0x3]
      %v1315 = vunpack.c.l.b16 %v1311
      %v1316 = vunpack.c.l.b16 %v1312
      %v1317 = vpack.c.b16 %v1316, %v1315
      %1318 = vrot.lane.b32.xlu0 %v890, 113
      %v1319 = vpop.permute.xlu0 %1318
      %1320 = vrot.lane.b32.xlu0 %v891, 113
      %v1321 = vpop.permute.xlu0 %1320
      %1322 = vrot.lane.b32.xlu0 %v889, 113
      %v1323 = vpop.permute.xlu0 %1322
      %1324 = vrot.lane.b32.xlu0 %v892, 113
      %v1325 = vpop.permute.xlu0 %1324
      %1326 = vrot.lane.b32.xlu0 %v893, 113
      %v1327 = vpop.permute.xlu0 %1326
      %1328 = vrot.lane.b32.xlu0 %v894, 113
      %v1329 = vpop.permute.xlu0 %1328
      %1330 = vrot.lane.b32.xlu0 %v895, 113
      %v1331 = vpop.permute.xlu0 %1330
      %vm1332 = vcmask 924672
      %v1333 = vsel %vm1332, %v1319, %v1321
      %v1334 = vsel %vm1332, %v1321, %v1323
      %v1335 = vsel %vm1332, %v1325, %v1327
      %v1336 = vsel %vm1332, %v1327, %v1323
      %v1337 = vsel %vm1332, %v1329, %v1331
      %v1338 = vsel %vm1332, %v1331, %v1323
      %v1346 = vsel %vm935, %v1317, 0
      %1348 = vmatpush.bf16.msra.mxu0 0
      %1349 = vmatpush.bf16.msra.mxu0 0
      %1350 = vmatpush.bf16.msra.mxu0 0
      %1351 = vmatpush.bf16.msra.mxu0 0
      %1352 = vmatpush.bf16.msra.mxu0 0
      %1353 = vmatpush.bf16.msra.mxu0 %v1337
      %1354 = vmatpush.bf16.msra.mxu0 %v1335
      %1355 = vmatpush.bf16.msra.mxu0 %v1333
      %1356 = vmatmul.bf16.gmra.mxu0 %v1346
      %v1357 = vpop.f32.mrf.mxu0
      %v1358 = vadd.f32 0.0, %v1357
      %v1359 = vpop.f32.mrf.mxu0
      %v1360 = vadd.f32 0.0, %v1359
      %1361 = vdwg.mxu0
      %1362 = vmatpush.bf16.msra.mxu0 0
      %1363 = vmatpush.bf16.msra.mxu0 0
      %1364 = vmatpush.bf16.msra.mxu0 0
      %1365 = vmatpush.bf16.msra.mxu0 0
      %1366 = vmatpush.bf16.msra.mxu0 0
      %1367 = vmatpush.bf16.msra.mxu0 %v1338
      %1368 = vmatpush.bf16.msra.mxu0 %v1336
      %1369 = vmatpush.bf16.msra.mxu0 %v1334
      %1370 = vmatmul.bf16.gmra.mxu0 %v1346
      %v1371 = vpop.f32.mrf.mxu0
      %v1372 = vadd.f32 0.0, %v1371
      %v1373 = vpop.f32.mrf.mxu0
      %v1374 = vadd.f32 0.0, %v1373
      %1375 = vdwg.mxu0
      %v1376 = vmul.f32 %v1358, %v643
      %v1377 = vmul.f32 %v1372, %v644
      %v1378 = vmul.f32 %v1360, %v643
      %v1379 = vmul.f32 %v1374, %v644
      %v1380 = vadd.f32 %v1306, %v1376
      %v1381 = vadd.f32 %v1307, %v1377
      %v1382 = vadd.f32 %v1308, %v1378
      %v1383 = vadd.f32 %v1309, %v1379
      %s1384 = scalar_lea.vmem %s6, 56
      %v1385 = vld [vmem:[%s1384] sm:$0xf]
      %v1386 = vld [vmem:[%s1384 + $0x4] sm:$0x3]
      %v1389 = vunpack.c.l.b16 %v1385
      %v1390 = vunpack.c.l.b16 %v1386
      %v1391 = vpack.c.b16 %v1390, %v1389
      %1392 = vrot.lane.b32.xlu0 %v890, 112
      %v1393 = vpop.permute.xlu0 %1392
      %1394 = vrot.lane.b32.xlu0 %v891, 112
      %v1395 = vpop.permute.xlu0 %1394
      %1396 = vrot.lane.b32.xlu0 %v889, 112
      %v1397 = vpop.permute.xlu0 %1396
      %1398 = vrot.lane.b32.xlu0 %v892, 112
      %v1399 = vpop.permute.xlu0 %1398
      %1400 = vrot.lane.b32.xlu0 %v893, 112
      %v1401 = vpop.permute.xlu0 %1400
      %1402 = vrot.lane.b32.xlu0 %v894, 112
      %v1403 = vpop.permute.xlu0 %1402
      %1404 = vrot.lane.b32.xlu0 %v895, 112
      %v1405 = vpop.permute.xlu0 %1404
      %vm1406 = vcmask 916480
      %v1407 = vsel %vm1406, %v1393, %v1395
      %v1408 = vsel %vm1406, %v1395, %v1397
      %v1409 = vsel %vm1406, %v1399, %v1401
      %v1410 = vsel %vm1406, %v1401, %v1397
      %v1411 = vsel %vm1406, %v1403, %v1405
      %v1412 = vsel %vm1406, %v1405, %v1397
      %v1420 = vsel %vm935, %v1391, 0
      %1422 = vmatpush.bf16.msra.mxu0 0
      %1423 = vmatpush.bf16.msra.mxu0 0
      %1424 = vmatpush.bf16.msra.mxu0 0
      %1425 = vmatpush.bf16.msra.mxu0 0
      %1426 = vmatpush.bf16.msra.mxu0 0
      %1427 = vmatpush.bf16.msra.mxu0 %v1411
      %1428 = vmatpush.bf16.msra.mxu0 %v1409
      %1429 = vmatpush.bf16.msra.mxu0 %v1407
      %1430 = vmatmul.bf16.gmra.mxu0 %v1420
      %v1431 = vpop.f32.mrf.mxu0
      %v1432 = vadd.f32 0.0, %v1431
      %v1433 = vpop.f32.mrf.mxu0
      %v1434 = vadd.f32 0.0, %v1433
      %1435 = vdwg.mxu0
      %1436 = vmatpush.bf16.msra.mxu0 0
      %1437 = vmatpush.bf16.msra.mxu0 0
      %1438 = vmatpush.bf16.msra.mxu0 0
      %1439 = vmatpush.bf16.msra.mxu0 0
      %1440 = vmatpush.bf16.msra.mxu0 0
      %1441 = vmatpush.bf16.msra.mxu0 %v1412
      %1442 = vmatpush.bf16.msra.mxu0 %v1410
      %1443 = vmatpush.bf16.msra.mxu0 %v1408
      %1444 = vmatmul.bf16.gmra.mxu0 %v1420
      %v1445 = vpop.f32.mrf.mxu0
      %v1446 = vadd.f32 0.0, %v1445
      %v1447 = vpop.f32.mrf.mxu0
      %v1448 = vadd.f32 0.0, %v1447
      %1449 = vdwg.mxu0
      %v1450 = vadd.f32 %v1380, %v1432
      %v1451 = vadd.f32 %v1381, %v1446
      %v1452 = vadd.f32 %v1382, %v1434
      %v1453 = vadd.f32 %v1383, %v1448
      %s1454 = scalar_lea.vmem %s6, 64
      %v1455 = vld [vmem:[%s1454] sm:$0xf]
      %v1456 = vld [vmem:[%s1454 + $0x4] sm:$0x3]
      %v1459 = vunpack.c.l.b16 %v1455
      %v1460 = vunpack.c.l.b16 %v1456
      %v1461 = vpack.c.b16 %v1460, %v1459
      %1462 = vrot.lane.b32.xlu0 %v890, 111
      %v1463 = vpop.permute.xlu0 %1462
      %1464 = vrot.lane.b32.xlu0 %v891, 111
      %v1465 = vpop.permute.xlu0 %1464
      %1466 = vrot.lane.b32.xlu0 %v889, 111
      %v1467 = vpop.permute.xlu0 %1466
      %1468 = vrot.lane.b32.xlu0 %v892, 111
      %v1469 = vpop.permute.xlu0 %1468
      %1470 = vrot.lane.b32.xlu0 %v893, 111
      %v1471 = vpop.permute.xlu0 %1470
      %1472 = vrot.lane.b32.xlu0 %v894, 111
      %v1473 = vpop.permute.xlu0 %1472
      %1474 = vrot.lane.b32.xlu0 %v895, 111
      %v1475 = vpop.permute.xlu0 %1474
      %vm1476 = vcmask 908288
      %v1477 = vsel %vm1476, %v1463, %v1465
      %v1478 = vsel %vm1476, %v1465, %v1467
      %v1479 = vsel %vm1476, %v1469, %v1471
      %v1480 = vsel %vm1476, %v1471, %v1467
      %v1481 = vsel %vm1476, %v1473, %v1475
      %v1482 = vsel %vm1476, %v1475, %v1467
      %v1490 = vsel %vm935, %v1461, 0
      %1492 = vmatpush.bf16.msra.mxu0 0
      %1493 = vmatpush.bf16.msra.mxu0 0
      %1494 = vmatpush.bf16.msra.mxu0 0
      %1495 = vmatpush.bf16.msra.mxu0 0
      %1496 = vmatpush.bf16.msra.mxu0 0
      %1497 = vmatpush.bf16.msra.mxu0 %v1481
      %1498 = vmatpush.bf16.msra.mxu0 %v1479
      %1499 = vmatpush.bf16.msra.mxu0 %v1477
      %1500 = vmatmul.bf16.gmra.mxu0 %v1490
      %v1501 = vpop.f32.mrf.mxu0
      %v1502 = vadd.f32 0.0, %v1501
      %v1503 = vpop.f32.mrf.mxu0
      %v1504 = vadd.f32 0.0, %v1503
      %1505 = vdwg.mxu0
      %1506 = vmatpush.bf16.msra.mxu0 0
      %1507 = vmatpush.bf16.msra.mxu0 0
      %1508 = vmatpush.bf16.msra.mxu0 0
      %1509 = vmatpush.bf16.msra.mxu0 0
      %1510 = vmatpush.bf16.msra.mxu0 0
      %1511 = vmatpush.bf16.msra.mxu0 %v1482
      %1512 = vmatpush.bf16.msra.mxu0 %v1480
      %1513 = vmatpush.bf16.msra.mxu0 %v1478
      %1514 = vmatmul.bf16.gmra.mxu0 %v1490
      %v1515 = vpop.f32.mrf.mxu0
      %v1516 = vadd.f32 0.0, %v1515
      %v1517 = vpop.f32.mrf.mxu0
      %v1518 = vadd.f32 0.0, %v1517
      %1519 = vdwg.mxu0
      %v1520 = vmul.f32 %v1502, %v649
      %v1521 = vmul.f32 %v1516, %v650
      %v1522 = vmul.f32 %v1504, %v649
      %v1523 = vmul.f32 %v1518, %v650
      %v1524 = vadd.f32 %v1450, %v1520
      %v1525 = vadd.f32 %v1451, %v1521
      %v1526 = vadd.f32 %v1452, %v1522
      %v1527 = vadd.f32 %v1453, %v1523
      %vm1532 = vcmask 1043456
      %v1533 = vrot.slane %v1524, 4
      %v1534 = vrot.slane %v1525, 4
      %v1535 = vrot.slane %v1526, 4
      %v1536 = vsel %vm1532, %v1533, %v1535
      %v1537 = vrot.slane %v1527, 4
      %v1538 = vsel %vm1532, %v1534, %v1537
      %1543 = vst [vmem:[%s602 + $0x10] sm:$0xf0] %v1533
      %1544 = vst [vmem:[%s602 + $0x18] sm:$0xf0] %v1534
      %1545 = vst [vmem:[%s602 + $0x20] sm:$0xff] %v1536
      %1546 = vst [vmem:[%s602 + $0x28] sm:$0xff] %v1538
      %v1547 = vld [vmem:[%s602] sm:$0xff]
      %v1548 = vld [vmem:[%s602 + $0x8] sm:$0xff]
      %v1549 = vld [vmem:[%s602 + $0x10] sm:$0xff]
      %v1550 = vld [vmem:[%s602 + $0x18] sm:$0xff]
      %v1551 = vld [vmem:[%s602 + $0x20] sm:$0xff]
      %v1552 = vld [vmem:[%s602 + $0x28] sm:$0xff]
      %v1553 = vld [vmem:[%s7] sm:$0xff]
      %v1554 = vld [vmem:[%s7 + $0x8] sm:$0xff]
      %v1555 = vld [vmem:[%s7 + $0x10] sm:$0xff]
      %1557 = vset.pattern.permute.xlu0 0
      %1558 = vperm.xlu0 %1557, %v1553
      %v1559 = vpop.permute.xlu0 %1558
      %1562 = vset.pattern.permute.xlu0 0
      %1563 = vperm.xlu0 %1562, %v1554
      %v1564 = vpop.permute.xlu0 %1563
      %1567 = vset.pattern.permute.xlu0 0
      %1568 = vperm.xlu0 %1567, %v1555
      %v1569 = vpop.permute.xlu0 %1568
      %v1571 = vmul.f32 %v1547, %v1559
      %v1572 = vmul.f32 %v1548, %v1559
      %v1573 = vmul.f32 %v1549, %v1564
      %v1574 = vmul.f32 %v1550, %v1564
      %v1575 = vmul.f32 %v1551, %v1569
      %v1576 = vmul.f32 %v1552, %v1569
      %v1577 = vld [vmem:[%s8] sm:$0xff]
      %v1578 = vld [vmem:[%s8 + $0x8] sm:$0xff]
      %v1579 = vld [vmem:[%s8 + $0x10] sm:$0xff]
      %1581 = vset.pattern.permute.xlu0 0
      %1582 = vperm.xlu0 %1581, %v1577
      %v1583 = vpop.permute.xlu0 %1582
      %1586 = vset.pattern.permute.xlu0 0
      %1587 = vperm.xlu0 %1586, %v1578
      %v1588 = vpop.permute.xlu0 %1587
      %1591 = vset.pattern.permute.xlu0 0
      %1592 = vperm.xlu0 %1591, %v1579
      %v1593 = vpop.permute.xlu0 %1592
      %v1595 = vadd.f32 %v1571, %v1583
      %v1596 = vadd.f32 %v1572, %v1583
      %v1597 = vadd.f32 %v1573, %v1588
      %v1598 = vadd.f32 %v1574, %v1588
      %v1599 = vadd.f32 %v1575, %v1593
      %v1600 = vadd.f32 %v1576, %v1593
      %v1601 = vmax.f32 %v1595, 0.0
      %v1602 = vmax.f32 %v1596, 0.0
      %v1603 = vmax.f32 %v1597, 0.0
      %v1604 = vmax.f32 %v1598, 0.0
      %v1605 = vmax.f32 %v1599, 0.0
      %v1606 = vmax.f32 %v1600, 0.0
      %v1607 = vld [vmem:[%s9] sm:$0xf]
      %v1608 = vld [vmem:[%s9 + $0x4] sm:$0xf]
      %v1609 = vld [vmem:[%s9 + $0x8] sm:$0xf]
      %v1610 = vld [vmem:[%s9 + $0xc] sm:$0xf]
      %v1611 = vld [vmem:[%s9 + $0x10] sm:$0xf]
      %v1612 = vld [vmem:[%s9 + $0x14] sm:$0xf]
      %v1613 = vpack.c.bf16 %v1603, %v1601
      %v1614 = vpack.c.bf16 %v1604, %v1602
      %v1615 = vpack.c.bf16 %v1605, %v1605
      %v1616 = vpack.c.bf16 %v1606, %v1606
      %v1623 = vunpack.c.l.b16 %v1607
      %v1624 = vunpack.c.l.b16 %v1608
      %v1625 = vunpack.c.l.b16 %v1609
      %v1626 = vunpack.c.l.b16 %v1610
      %v1627 = vunpack.c.l.b16 %v1611
      %v1628 = vunpack.c.l.b16 %v1612
      %v1629 = vpack.c.b16 %v1624, %v1623
      %v1630 = vpack.c.b16 %v1626, %v1625
      %v1631 = vpack.c.b16 %v1628, %v1627
      %vm1632 = vcmask 195584
      %v1634 = vsel %vm1632, %v1629, 0
      %v1637 = vsel %vm1632, %v1630, 0
      %v1640 = vsel %vm1632, %v1631, 0
      %v1643 = vsel %vm1532, %v1615, 0
      %v1646 = vsel %vm1532, %v1616, 0
      %1648 = vmatpush.bf16.msra.mxu0 0
      %1649 = vmatpush.bf16.msra.mxu0 0
      %1650 = vmatpush.bf16.msra.mxu0 0
      %1651 = vmatpush.bf16.msra.mxu0 0
      %1652 = vmatpush.bf16.msra.mxu0 0
      %1653 = vmatpush.bf16.msra.mxu0 0
      %1654 = vmatpush.bf16.msra.mxu0 %v1643
      %1655 = vmatpush.bf16.msra.mxu0 %v1613
      %1656 = vmatmul.bf16.gmra.mxu0 %v1634
      %v1657 = vpop.f32.mrf.mxu0
      %v1658 = vadd.f32 0.0, %v1657
      %v1659 = vpop.f32.mrf.mxu0
      %v1660 = vadd.f32 0.0, %v1659
      %1661 = vmatmul.bf16.gmra.mxu0 %v1637
      %v1662 = vpop.f32.mrf.mxu0
      %v1663 = vadd.f32 0.0, %v1662
      %v1664 = vpop.f32.mrf.mxu0
      %v1665 = vadd.f32 0.0, %v1664
      %1666 = vmatmul.bf16.gmra.mxu0 %v1640
      %v1667 = vpop.f32.mrf.mxu0
      %v1668 = vadd.f32 0.0, %v1667
      %v1669 = vpop.f32.mrf.mxu0
      %v1670 = vadd.f32 0.0, %v1669
      %1671 = vdwg.mxu0
      %1672 = vmatpush.bf16.msra.mxu0 0
      %1673 = vmatpush.bf16.msra.mxu0 0
      %1674 = vmatpush.bf16.msra.mxu0 0
      %1675 = vmatpush.bf16.msra.mxu0 0
      %1676 = vmatpush.bf16.msra.mxu0 0
      %1677 = vmatpush.bf16.msra.mxu0 0
      %1678 = vmatpush.bf16.msra.mxu0 %v1646
      %1679 = vmatpush.bf16.msra.mxu0 %v1614
      %1680 = vmatmul.bf16.gmra.mxu0 %v1634
      %v1681 = vpop.f32.mrf.mxu0
      %v1682 = vadd.f32 0.0, %v1681
      %v1683 = vpop.f32.mrf.mxu0
      %v1684 = vadd.f32 0.0, %v1683
      %1685 = vmatmul.bf16.gmra.mxu0 %v1637
      %v1686 = vpop.f32.mrf.mxu0
      %v1687 = vadd.f32 0.0, %v1686
      %v1688 = vpop.f32.mrf.mxu0
      %v1689 = vadd.f32 0.0, %v1688
      %1690 = vmatmul.bf16.gmra.mxu0 %v1640
      %v1691 = vpop.f32.mrf.mxu0
      %v1692 = vadd.f32 0.0, %v1691
      %v1693 = vpop.f32.mrf.mxu0
      %v1694 = vadd.f32 0.0, %v1693
      %1695 = vdwg.mxu0
      %v1696 = vld [vmem:[%s10] sm:$0xff]
      %v1697 = vld [vmem:[%s10 + $0x8] sm:$0xff]
      %v1698 = vld [vmem:[%s10 + $0x10] sm:$0xff]
      %v1699 = vld [vmem:[%s10 + $0x18] sm:$0xff]
      %v1700 = vld [vmem:[%s10 + $0x20] sm:$0xff]
      %v1701 = vld [vmem:[%s10 + $0x28] sm:$0xff]
      %1703 = vset.pattern.permute.xlu0 0
      %1704 = vperm.xlu0 %1703, %v1696
      %v1705 = vpop.permute.xlu0 %1704
      %1708 = vset.pattern.permute.xlu0 0
      %1709 = vperm.xlu0 %1708, %v1697
      %v1710 = vpop.permute.xlu0 %1709
      %1713 = vset.pattern.permute.xlu0 0
      %1714 = vperm.xlu0 %1713, %v1698
      %v1715 = vpop.permute.xlu0 %1714
      %1718 = vset.pattern.permute.xlu0 0
      %1719 = vperm.xlu0 %1718, %v1699
      %v1720 = vpop.permute.xlu0 %1719
      %1723 = vset.pattern.permute.xlu0 0
      %1724 = vperm.xlu0 %1723, %v1700
      %v1725 = vpop.permute.xlu0 %1724
      %1728 = vset.pattern.permute.xlu0 0
      %1729 = vperm.xlu0 %1728, %v1701
      %v1730 = vpop.permute.xlu0 %1729
      %v1732 = vmul.f32 %v1658, %v1705
      %v1733 = vmul.f32 %v1682, %v1705
      %v1734 = vmul.f32 %v1660, %v1710
      %v1735 = vmul.f32 %v1684, %v1710
      %v1736 = vmul.f32 %v1663, %v1715
      %v1737 = vmul.f32 %v1687, %v1715
      %v1738 = vmul.f32 %v1665, %v1720
      %v1739 = vmul.f32 %v1689, %v1720
      %v1740 = vmul.f32 %v1668, %v1725
      %v1741 = vmul.f32 %v1692, %v1725
      %v1742 = vmul.f32 %v1670, %v1730
      %v1743 = vmul.f32 %v1694, %v1730
      %v1744 = vld [vmem:[%s11] sm:$0xff]
      %v1745 = vld [vmem:[%s11 + $0x8] sm:$0xff]
      %v1746 = vld [vmem:[%s11 + $0x10] sm:$0xff]
      %v1747 = vld [vmem:[%s11 + $0x18] sm:$0xff]
      %v1748 = vld [vmem:[%s11 + $0x20] sm:$0xff]
      %v1749 = vld [vmem:[%s11 + $0x28] sm:$0xff]
      %1751 = vset.pattern.permute.xlu0 0
      %1752 = vperm.xlu0 %1751, %v1744
      %v1753 = vpop.permute.xlu0 %1752
      %1756 = vset.pattern.permute.xlu0 0
      %1757 = vperm.xlu0 %1756, %v1745
      %v1758 = vpop.permute.xlu0 %1757
      %1761 = vset.pattern.permute.xlu0 0
      %1762 = vperm.xlu0 %1761, %v1746
      %v1763 = vpop.permute.xlu0 %1762
      %1766 = vset.pattern.permute.xlu0 0
      %1767 = vperm.xlu0 %1766, %v1747
      %v1768 = vpop.permute.xlu0 %1767
      %1771 = vset.pattern.permute.xlu0 0
      %1772 = vperm.xlu0 %1771, %v1748
      %v1773 = vpop.permute.xlu0 %1772
      %1776 = vset.pattern.permute.xlu0 0
      %1777 = vperm.xlu0 %1776, %v1749
      %v1778 = vpop.permute.xlu0 %1777
      %v1780 = vadd.f32 %v1732, %v1753
      %v1781 = vadd.f32 %v1733, %v1753
      %v1782 = vadd.f32 %v1734, %v1758
      %v1783 = vadd.f32 %v1735, %v1758
      %v1784 = vadd.f32 %v1736, %v1763
      %v1785 = vadd.f32 %v1737, %v1763
      %v1786 = vadd.f32 %v1738, %v1768
      %v1787 = vadd.f32 %v1739, %v1768
      %v1788 = vadd.f32 %v1740, %v1773
      %v1789 = vadd.f32 %v1741, %v1773
      %v1790 = vadd.f32 %v1742, %v1778
      %v1791 = vadd.f32 %v1743, %v1778
      %v1792 = vmax.f32 %v1780, 0.0
      %v1793 = vmax.f32 %v1781, 0.0
      %v1794 = vmax.f32 %v1782, 0.0
      %v1795 = vmax.f32 %v1783, 0.0
      %v1796 = vmax.f32 %v1784, 0.0
      %v1797 = vmax.f32 %v1785, 0.0
      %v1798 = vmax.f32 %v1786, 0.0
      %v1799 = vmax.f32 %v1787, 0.0
      %v1800 = vmax.f32 %v1788, 0.0
      %v1801 = vmax.f32 %v1789, 0.0
      %v1802 = vmax.f32 %v1790, 0.0
      %v1803 = vmax.f32 %v1791, 0.0
      %v1804 = vld [vmem:[%s12] sm:$0xf]
      %v1805 = vld [vmem:[%s12 + $0x4] sm:$0x3]
      %v1806 = vpack.c.bf16 %v1794, %v1792
      %v1807 = vpack.c.bf16 %v1795, %v1793
      %v1808 = vpack.c.bf16 %v1798, %v1796
      %v1809 = vpack.c.bf16 %v1799, %v1797
      %v1810 = vpack.c.bf16 %v1802, %v1800
      %v1811 = vpack.c.bf16 %v1803, %v1801
      %v1814 = vunpack.c.l.b16 %v1804
      %v1815 = vunpack.c.l.b16 %v1805
      %v1816 = vpack.c.b16 %v1815, %v1814
      %1823 = vrot.lane.b32.xlu0 %v1806, 17
      %v1824 = vpop.permute.xlu0 %1823
      %1825 = vrot.lane.b32.xlu0 %v1807, 17
      %v1826 = vpop.permute.xlu0 %1825
      %1827 = vrot.lane.b32.xlu0 %v1808, 17
      %v1828 = vpop.permute.xlu0 %1827
      %1829 = vrot.lane.b32.xlu0 %v1809, 17
      %v1830 = vpop.permute.xlu0 %1829
      %1831 = vrot.lane.b32.xlu0 %v1810, 17
      %v1832 = vpop.permute.xlu0 %1831
      %1833 = vrot.lane.b32.xlu0 %v1811, 17
      %v1834 = vpop.permute.xlu0 %1833
      %v1835 = vsel %vm922, %v909, %v1824
      %v1836 = vsel %vm922, %v1824, %v1826
      %v1837 = vsel %vm922, %v909, %v1828
      %v1838 = vsel %vm922, %v1828, %v1830
      %v1839 = vsel %vm922, %v909, %v1832
      %v1840 = vsel %vm922, %v1832, %v1834
      %v1848 = vsel %vm935, %v1816, 0
      %1850 = vmatpush.bf16.msra.mxu0 0
      %1851 = vmatpush.bf16.msra.mxu0 0
      %1852 = vmatpush.bf16.msra.mxu0 0
      %1853 = vmatpush.bf16.msra.mxu0 0
      %1854 = vmatpush.bf16.msra.mxu0 0
      %1855 = vmatpush.bf16.msra.mxu0 %v1839
      %1856 = vmatpush.bf16.msra.mxu0 %v1837
      %1857 = vmatpush.bf16.msra.mxu0 %v1835
      %1858 = vmatmul.bf16.gmra.mxu0 %v1848
      %v1859 = vpop.f32.mrf.mxu0
      %v1860 = vadd.f32 0.0, %v1859
      %v1861 = vpop.f32.mrf.mxu0
      %v1862 = vadd.f32 0.0, %v1861
      %1863 = vdwg.mxu0
      %1864 = vmatpush.bf16.msra.mxu0 0
      %1865 = vmatpush.bf16.msra.mxu0 0
      %1866 = vmatpush.bf16.msra.mxu0 0
      %1867 = vmatpush.bf16.msra.mxu0 0
      %1868 = vmatpush.bf16.msra.mxu0 0
      %1869 = vmatpush.bf16.msra.mxu0 %v1840
      %1870 = vmatpush.bf16.msra.mxu0 %v1838
      %1871 = vmatpush.bf16.msra.mxu0 %v1836
      %1872 = vmatmul.bf16.gmra.mxu0 %v1848
      %v1873 = vpop.f32.mrf.mxu0
      %v1874 = vadd.f32 0.0, %v1873
      %v1875 = vpop.f32.mrf.mxu0
      %v1876 = vadd.f32 0.0, %v1875
      %1877 = vdwg.mxu0
      %v1878 = vmul.f32 %v1860, %v643
      %v1879 = vmul.f32 %v1874, %v644
      %v1880 = vmul.f32 %v1862, %v643
      %v1881 = vmul.f32 %v1876, %v644
      %v1882 = vadd.f32 %v1878, 0.0
      %v1883 = vadd.f32 %v1879, 0.0
      %v1884 = vadd.f32 %v1880, 0.0
      %v1885 = vadd.f32 %v1881, 0.0
      %s1886 = scalar_lea.vmem %s12, 8
      %v1887 = vld [vmem:[%s1886] sm:$0xf]
      %v1888 = vld [vmem:[%s1886 + $0x4] sm:$0x3]
      %v1891 = vunpack.c.l.b16 %v1887
      %v1892 = vunpack.c.l.b16 %v1888
      %v1893 = vpack.c.b16 %v1892, %v1891
      %1894 = vrot.lane.b32.xlu0 %v1806, 16
      %v1895 = vpop.permute.xlu0 %1894
      %1896 = vrot.lane.b32.xlu0 %v1807, 16
      %v1897 = vpop.permute.xlu0 %1896
      %1898 = vrot.lane.b32.xlu0 %v1808, 16
      %v1899 = vpop.permute.xlu0 %1898
      %1900 = vrot.lane.b32.xlu0 %v1809, 16
      %v1901 = vpop.permute.xlu0 %1900
      %1902 = vrot.lane.b32.xlu0 %v1810, 16
      %v1903 = vpop.permute.xlu0 %1902
      %1904 = vrot.lane.b32.xlu0 %v1811, 16
      %v1905 = vpop.permute.xlu0 %1904
      %v1906 = vsel %vm997, %v984, %v1895
      %v1907 = vsel %vm997, %v1895, %v1897
      %v1908 = vsel %vm997, %v984, %v1899
      %v1909 = vsel %vm997, %v1899, %v1901
      %v1910 = vsel %vm997, %v984, %v1903
      %v1911 = vsel %vm997, %v1903, %v1905
      %v1919 = vsel %vm935, %v1893, 0
      %1921 = vmatpush.bf16.msra.mxu0 0
      %1922 = vmatpush.bf16.msra.mxu0 0
      %1923 = vmatpush.bf16.msra.mxu0 0
      %1924 = vmatpush.bf16.msra.mxu0 0
      %1925 = vmatpush.bf16.msra.mxu0 0
      %1926 = vmatpush.bf16.msra.mxu0 %v1910
      %1927 = vmatpush.bf16.msra.mxu0 %v1908
      %1928 = vmatpush.bf16.msra.mxu0 %v1906
      %1929 = vmatmul.bf16.gmra.mxu0 %v1919
      %v1930 = vpop.f32.mrf.mxu0
      %v1931 = vadd.f32 0.0, %v1930
      %v1932 = vpop.f32.mrf.mxu0
      %v1933 = vadd.f32 0.0, %v1932
      %1934 = vdwg.mxu0
      %1935 = vmatpush.bf16.msra.mxu0 0
      %1936 = vmatpush.bf16.msra.mxu0 0
      %1937 = vmatpush.bf16.msra.mxu0 0
      %1938 = vmatpush.bf16.msra.mxu0 0
      %1939 = vmatpush.bf16.msra.mxu0 0
      %1940 = vmatpush.bf16.msra.mxu0 %v1911
      %1941 = vmatpush.bf16.msra.mxu0 %v1909
      %1942 = vmatpush.bf16.msra.mxu0 %v1907
      %1943 = vmatmul.bf16.gmra.mxu0 %v1919
      %v1944 = vpop.f32.mrf.mxu0
      %v1945 = vadd.f32 0.0, %v1944
      %v1946 = vpop.f32.mrf.mxu0
      %v1947 = vadd.f32 0.0, %v1946
      %1948 = vdwg.mxu0
      %v1949 = vadd.f32 %v1882, %v1931
      %v1950 = vadd.f32 %v1883, %v1945
      %v1951 = vadd.f32 %v1884, %v1933
      %v1952 = vadd.f32 %v1885, %v1947
      %s1953 = scalar_lea.vmem %s12, 16
      %v1954 = vld [vmem:[%s1953] sm:$0xf]
      %v1955 = vld [vmem:[%s1953 + $0x4] sm:$0x3]
      %v1958 = vunpack.c.l.b16 %v1954
      %v1959 = vunpack.c.l.b16 %v1955
      %v1960 = vpack.c.b16 %v1959, %v1958
      %1961 = vrot.lane.b32.xlu0 %v1806, 15
      %v1962 = vpop.permute.xlu0 %1961
      %1963 = vrot.lane.b32.xlu0 %v1807, 15
      %v1964 = vpop.permute.xlu0 %1963
      %1965 = vrot.lane.b32.xlu0 %v1808, 15
      %v1966 = vpop.permute.xlu0 %1965
      %1967 = vrot.lane.b32.xlu0 %v1809, 15
      %v1968 = vpop.permute.xlu0 %1967
      %1969 = vrot.lane.b32.xlu0 %v1810, 15
      %v1970 = vpop.permute.xlu0 %1969
      %1971 = vrot.lane.b32.xlu0 %v1811, 15
      %v1972 = vpop.permute.xlu0 %1971
      %v1973 = vsel %vm1067, %v1054, %v1962
      %v1974 = vsel %vm1067, %v1962, %v1964
      %v1975 = vsel %vm1067, %v1054, %v1966
      %v1976 = vsel %vm1067, %v1966, %v1968
      %v1977 = vsel %vm1067, %v1054, %v1970
      %v1978 = vsel %vm1067, %v1970, %v1972
      %v1986 = vsel %vm935, %v1960, 0
      %1988 = vmatpush.bf16.msra.mxu0 0
      %1989 = vmatpush.bf16.msra.mxu0 0
      %1990 = vmatpush.bf16.msra.mxu0 0
      %1991 = vmatpush.bf16.msra.mxu0 0
      %1992 = vmatpush.bf16.msra.mxu0 0
      %1993 = vmatpush.bf16.msra.mxu0 %v1977
      %1994 = vmatpush.bf16.msra.mxu0 %v1975
      %1995 = vmatpush.bf16.msra.mxu0 %v1973
      %1996 = vmatmul.bf16.gmra.mxu0 %v1986
      %v1997 = vpop.f32.mrf.mxu0
      %v1998 = vadd.f32 0.0, %v1997
      %v1999 = vpop.f32.mrf.mxu0
      %v2000 = vadd.f32 0.0, %v1999
      %2001 = vdwg.mxu0
      %2002 = vmatpush.bf16.msra.mxu0 0
      %2003 = vmatpush.bf16.msra.mxu0 0
      %2004 = vmatpush.bf16.msra.mxu0 0
      %2005 = vmatpush.bf16.msra.mxu0 0
      %2006 = vmatpush.bf16.msra.mxu0 0
      %2007 = vmatpush.bf16.msra.mxu0 %v1978
      %2008 = vmatpush.bf16.msra.mxu0 %v1976
      %2009 = vmatpush.bf16.msra.mxu0 %v1974
      %2010 = vmatmul.bf16.gmra.mxu0 %v1986
      %v2011 = vpop.f32.mrf.mxu0
      %v2012 = vadd.f32 0.0, %v2011
      %v2013 = vpop.f32.mrf.mxu0
      %v2014 = vadd.f32 0.0, %v2013
      %2015 = vdwg.mxu0
      %v2016 = vmul.f32 %v1998, %v649
      %v2017 = vmul.f32 %v2012, %v650
      %v2018 = vmul.f32 %v2000, %v649
      %v2019 = vmul.f32 %v2014, %v650
      %v2020 = vadd.f32 %v1949, %v2016
      %v2021 = vadd.f32 %v1950, %v2017
      %v2022 = vadd.f32 %v1951, %v2018
      %v2023 = vadd.f32 %v1952, %v2019
      %s2024 = scalar_lea.vmem %s12, 24
      %v2025 = vld [vmem:[%s2024] sm:$0xf]
      %v2026 = vld [vmem:[%s2024 + $0x4] sm:$0x3]
      %v2029 = vunpack.c.l.b16 %v2025
      %v2030 = vunpack.c.l.b16 %v2026
      %v2031 = vpack.c.b16 %v2030, %v2029
      %2032 = vrot.lane.b32.xlu0 %v1806, 1
      %v2033 = vpop.permute.xlu0 %2032
      %2034 = vrot.lane.b32.xlu0 %v1807, 1
      %v2035 = vpop.permute.xlu0 %2034
      %2036 = vrot.lane.b32.xlu0 %v1808, 1
      %v2037 = vpop.permute.xlu0 %2036
      %2038 = vrot.lane.b32.xlu0 %v1809, 1
      %v2039 = vpop.permute.xlu0 %2038
      %2040 = vrot.lane.b32.xlu0 %v1810, 1
      %v2041 = vpop.permute.xlu0 %2040
      %2042 = vrot.lane.b32.xlu0 %v1811, 1
      %v2043 = vpop.permute.xlu0 %2042
      %v2044 = vsel %vm1141, %v1128, %v2033
      %v2045 = vsel %vm1141, %v2033, %v2035
      %v2046 = vsel %vm1141, %v1128, %v2037
      %v2047 = vsel %vm1141, %v2037, %v2039
      %v2048 = vsel %vm1141, %v1128, %v2041
      %v2049 = vsel %vm1141, %v2041, %v2043
      %v2057 = vsel %vm935, %v2031, 0
      %2059 = vmatpush.bf16.msra.mxu0 0
      %2060 = vmatpush.bf16.msra.mxu0 0
      %2061 = vmatpush.bf16.msra.mxu0 0
      %2062 = vmatpush.bf16.msra.mxu0 0
      %2063 = vmatpush.bf16.msra.mxu0 0
      %2064 = vmatpush.bf16.msra.mxu0 %v2048
      %2065 = vmatpush.bf16.msra.mxu0 %v2046
      %2066 = vmatpush.bf16.msra.mxu0 %v2044
      %2067 = vmatmul.bf16.gmra.mxu0 %v2057
      %v2068 = vpop.f32.mrf.mxu0
      %v2069 = vadd.f32 0.0, %v2068
      %v2070 = vpop.f32.mrf.mxu0
      %v2071 = vadd.f32 0.0, %v2070
      %2072 = vdwg.mxu0
      %2073 = vmatpush.bf16.msra.mxu0 0
      %2074 = vmatpush.bf16.msra.mxu0 0
      %2075 = vmatpush.bf16.msra.mxu0 0
      %2076 = vmatpush.bf16.msra.mxu0 0
      %2077 = vmatpush.bf16.msra.mxu0 0
      %2078 = vmatpush.bf16.msra.mxu0 %v2049
      %2079 = vmatpush.bf16.msra.mxu0 %v2047
      %2080 = vmatpush.bf16.msra.mxu0 %v2045
      %2081 = vmatmul.bf16.gmra.mxu0 %v2057
      %v2082 = vpop.f32.mrf.mxu0
      %v2083 = vadd.f32 0.0, %v2082
      %v2084 = vpop.f32.mrf.mxu0
      %v2085 = vadd.f32 0.0, %v2084
      %2086 = vdwg.mxu0
      %v2087 = vmul.f32 %v2069, %v643
      %v2088 = vmul.f32 %v2083, %v644
      %v2089 = vmul.f32 %v2071, %v643
      %v2090 = vmul.f32 %v2085, %v644
      %v2091 = vadd.f32 %v2020, %v2087
      %v2092 = vadd.f32 %v2021, %v2088
      %v2093 = vadd.f32 %v2022, %v2089
      %v2094 = vadd.f32 %v2023, %v2090
      %s2095 = scalar_lea.vmem %s12, 32
      %v2096 = vld [vmem:[%s2095] sm:$0xf]
      %v2097 = vld [vmem:[%s2095 + $0x4] sm:$0x3]
      %v2100 = vunpack.c.l.b16 %v2096
      %v2101 = vunpack.c.l.b16 %v2097
      %v2102 = vpack.c.b16 %v2101, %v2100
      %v2104 = vsel %vm935, %v2102, 0
      %2106 = vmatpush.bf16.msra.mxu0 0
      %2107 = vmatpush.bf16.msra.mxu0 0
      %2108 = vmatpush.bf16.msra.mxu0 0
      %2109 = vmatpush.bf16.msra.mxu0 0
      %2110 = vmatpush.bf16.msra.mxu0 0
      %2111 = vmatpush.bf16.msra.mxu0 %v1810
      %2112 = vmatpush.bf16.msra.mxu0 %v1808
      %2113 = vmatpush.bf16.msra.mxu0 %v1806
      %2114 = vmatmul.bf16.gmra.mxu0 %v2104
      %v2115 = vpop.f32.mrf.mxu0
      %v2116 = vadd.f32 0.0, %v2115
      %v2117 = vpop.f32.mrf.mxu0
      %v2118 = vadd.f32 0.0, %v2117
      %2119 = vdwg.mxu0
      %2120 = vmatpush.bf16.msra.mxu0 0
      %2121 = vmatpush.bf16.msra.mxu0 0
      %2122 = vmatpush.bf16.msra.mxu0 0
      %2123 = vmatpush.bf16.msra.mxu0 0
      %2124 = vmatpush.bf16.msra.mxu0 0
      %2125 = vmatpush.bf16.msra.mxu0 %v1811
      %2126 = vmatpush.bf16.msra.mxu0 %v1809
      %2127 = vmatpush.bf16.msra.mxu0 %v1807
      %2128 = vmatmul.bf16.gmra.mxu0 %v2104
      %v2129 = vpop.f32.mrf.mxu0
      %v2130 = vadd.f32 0.0, %v2129
      %v2131 = vpop.f32.mrf.mxu0
      %v2132 = vadd.f32 0.0, %v2131
      %2133 = vdwg.mxu0
      %v2134 = vadd.f32 %v2091, %v2116
      %v2135 = vadd.f32 %v2092, %v2130
      %v2136 = vadd.f32 %v2093, %v2118
      %v2137 = vadd.f32 %v2094, %v2132
      %s2138 = scalar_lea.vmem %s12, 40
      %v2139 = vld [vmem:[%s2138] sm:$0xf]
      %v2140 = vld [vmem:[%s2138 + $0x4] sm:$0x3]
      %v2143 = vunpack.c.l.b16 %v2139
      %v2144 = vunpack.c.l.b16 %v2140
      %v2145 = vpack.c.b16 %v2144, %v2143
      %2146 = vrot.lane.b32.xlu0 %v1806, 127
      %v2147 = vpop.permute.xlu0 %2146
      %2148 = vrot.lane.b32.xlu0 %v1807, 127
      %v2149 = vpop.permute.xlu0 %2148
      %2150 = vrot.lane.b32.xlu0 %v1808, 127
      %v2151 = vpop.permute.xlu0 %2150
      %2152 = vrot.lane.b32.xlu0 %v1809, 127
      %v2153 = vpop.permute.xlu0 %2152
      %2154 = vrot.lane.b32.xlu0 %v1810, 127
      %v2155 = vpop.permute.xlu0 %2154
      %2156 = vrot.lane.b32.xlu0 %v1811, 127
      %v2157 = vpop.permute.xlu0 %2156
      %v2158 = vsel %vm1258, %v2147, %v2149
      %v2159 = vsel %vm1258, %v2149, %v1249
      %v2160 = vsel %vm1258, %v2151, %v2153
      %v2161 = vsel %vm1258, %v2153, %v1249
      %v2162 = vsel %vm1258, %v2155, %v2157
      %v2163 = vsel %vm1258, %v2157, %v1249
      %v2171 = vsel %vm935, %v2145, 0
      %2173 = vmatpush.bf16.msra.mxu0 0
      %2174 = vmatpush.bf16.msra.mxu0 0
      %2175 = vmatpush.bf16.msra.mxu0 0
      %2176 = vmatpush.bf16.msra.mxu0 0
      %2177 = vmatpush.bf16.msra.mxu0 0
      %2178 = vmatpush.bf16.msra.mxu0 %v2162
      %2179 = vmatpush.bf16.msra.mxu0 %v2160
      %2180 = vmatpush.bf16.msra.mxu0 %v2158
      %2181 = vmatmul.bf16.gmra.mxu0 %v2171
      %v2182 = vpop.f32.mrf.mxu0
      %v2183 = vadd.f32 0.0, %v2182
      %v2184 = vpop.f32.mrf.mxu0
      %v2185 = vadd.f32 0.0, %v2184
      %2186 = vdwg.mxu0
      %2187 = vmatpush.bf16.msra.mxu0 0
      %2188 = vmatpush.bf16.msra.mxu0 0
      %2189 = vmatpush.bf16.msra.mxu0 0
      %2190 = vmatpush.bf16.msra.mxu0 0
      %2191 = vmatpush.bf16.msra.mxu0 0
      %2192 = vmatpush.bf16.msra.mxu0 %v2163
      %2193 = vmatpush.bf16.msra.mxu0 %v2161
      %2194 = vmatpush.bf16.msra.mxu0 %v2159
      %2195 = vmatmul.bf16.gmra.mxu0 %v2171
      %v2196 = vpop.f32.mrf.mxu0
      %v2197 = vadd.f32 0.0, %v2196
      %v2198 = vpop.f32.mrf.mxu0
      %v2199 = vadd.f32 0.0, %v2198
      %2200 = vdwg.mxu0
      %v2201 = vmul.f32 %v2183, %v649
      %v2202 = vmul.f32 %v2197, %v650
      %v2203 = vmul.f32 %v2185, %v649
      %v2204 = vmul.f32 %v2199, %v650
      %v2205 = vadd.f32 %v2134, %v2201
      %v2206 = vadd.f32 %v2135, %v2202
      %v2207 = vadd.f32 %v2136, %v2203
      %v2208 = vadd.f32 %v2137, %v2204
      %s2209 = scalar_lea.vmem %s12, 48
      %v2210 = vld [vmem:[%s2209] sm:$0xf]
      %v2211 = vld [vmem:[%s2209 + $0x4] sm:$0x3]
      %v2214 = vunpack.c.l.b16 %v2210
      %v2215 = vunpack.c.l.b16 %v2211
      %v2216 = vpack.c.b16 %v2215, %v2214
      %2217 = vrot.lane.b32.xlu0 %v1806, 113
      %v2218 = vpop.permute.xlu0 %2217
      %2219 = vrot.lane.b32.xlu0 %v1807, 113
      %v2220 = vpop.permute.xlu0 %2219
      %2221 = vrot.lane.b32.xlu0 %v1808, 113
      %v2222 = vpop.permute.xlu0 %2221
      %2223 = vrot.lane.b32.xlu0 %v1809, 113
      %v2224 = vpop.permute.xlu0 %2223
      %2225 = vrot.lane.b32.xlu0 %v1810, 113
      %v2226 = vpop.permute.xlu0 %2225
      %2227 = vrot.lane.b32.xlu0 %v1811, 113
      %v2228 = vpop.permute.xlu0 %2227
      %v2229 = vsel %vm1332, %v2218, %v2220
      %v2230 = vsel %vm1332, %v2220, %v1323
      %v2231 = vsel %vm1332, %v2222, %v2224
      %v2232 = vsel %vm1332, %v2224, %v1323
      %v2233 = vsel %vm1332, %v2226, %v2228
      %v2234 = vsel %vm1332, %v2228, %v1323
      %v2242 = vsel %vm935, %v2216, 0
      %2244 = vmatpush.bf16.msra.mxu0 0
      %2245 = vmatpush.bf16.msra.mxu0 0
      %2246 = vmatpush.bf16.msra.mxu0 0
      %2247 = vmatpush.bf16.msra.mxu0 0
      %2248 = vmatpush.bf16.msra.mxu0 0
      %2249 = vmatpush.bf16.msra.mxu0 %v2233
      %2250 = vmatpush.bf16.msra.mxu0 %v2231
      %2251 = vmatpush.bf16.msra.mxu0 %v2229
      %2252 = vmatmul.bf16.gmra.mxu0 %v2242
      %v2253 = vpop.f32.mrf.mxu0
      %v2254 = vadd.f32 0.0, %v2253
      %v2255 = vpop.f32.mrf.mxu0
      %v2256 = vadd.f32 0.0, %v2255
      %2257 = vdwg.mxu0
      %2258 = vmatpush.bf16.msra.mxu0 0
      %2259 = vmatpush.bf16.msra.mxu0 0
      %2260 = vmatpush.bf16.msra.mxu0 0
      %2261 = vmatpush.bf16.msra.mxu0 0
      %2262 = vmatpush.bf16.msra.mxu0 0
      %2263 = vmatpush.bf16.msra.mxu0 %v2234
      %2264 = vmatpush.bf16.msra.mxu0 %v2232
      %2265 = vmatpush.bf16.msra.mxu0 %v2230
      %2266 = vmatmul.bf16.gmra.mxu0 %v2242
      %v2267 = vpop.f32.mrf.mxu0
      %v2268 = vadd.f32 0.0, %v2267
      %v2269 = vpop.f32.mrf.mxu0
      %v2270 = vadd.f32 0.0, %v2269
      %2271 = vdwg.mxu0
      %v2272 = vmul.f32 %v2254, %v643
      %v2273 = vmul.f32 %v2268, %v644
      %v2274 = vmul.f32 %v2256, %v643
      %v2275 = vmul.f32 %v2270, %v644
      %v2276 = vadd.f32 %v2205, %v2272
      %v2277 = vadd.f32 %v2206, %v2273
      %v2278 = vadd.f32 %v2207, %v2274
      %v2279 = vadd.f32 %v2208, %v2275
      %s2280 = scalar_lea.vmem %s12, 56
      %v2281 = vld [vmem:[%s2280] sm:$0xf]
      %v2282 = vld [vmem:[%s2280 + $0x4] sm:$0x3]
      %v2285 = vunpack.c.l.b16 %v2281
      %v2286 = vunpack.c.l.b16 %v2282
      %v2287 = vpack.c.b16 %v2286, %v2285
      %2288 = vrot.lane.b32.xlu0 %v1806, 112
      %v2289 = vpop.permute.xlu0 %2288
      %2290 = vrot.lane.b32.xlu0 %v1807, 112
      %v2291 = vpop.permute.xlu0 %2290
      %2292 = vrot.lane.b32.xlu0 %v1808, 112
      %v2293 = vpop.permute.xlu0 %2292
      %2294 = vrot.lane.b32.xlu0 %v1809, 112
      %v2295 = vpop.permute.xlu0 %2294
      %2296 = vrot.lane.b32.xlu0 %v1810, 112
      %v2297 = vpop.permute.xlu0 %2296
      %2298 = vrot.lane.b32.xlu0 %v1811, 112
      %v2299 = vpop.permute.xlu0 %2298
      %v2300 = vsel %vm1406, %v2289, %v2291
      %v2301 = vsel %vm1406, %v2291, %v1397
      %v2302 = vsel %vm1406, %v2293, %v2295
      %v2303 = vsel %vm1406, %v2295, %v1397
      %v2304 = vsel %vm1406, %v2297, %v2299
      %v2305 = vsel %vm1406, %v2299, %v1397
      %v2313 = vsel %vm935, %v2287, 0
      %2315 = vmatpush.bf16.msra.mxu0 0
      %2316 = vmatpush.bf16.msra.mxu0 0
      %2317 = vmatpush.bf16.msra.mxu0 0
      %2318 = vmatpush.bf16.msra.mxu0 0
      %2319 = vmatpush.bf16.msra.mxu0 0
      %2320 = vmatpush.bf16.msra.mxu0 %v2304
      %2321 = vmatpush.bf16.msra.mxu0 %v2302
      %2322 = vmatpush.bf16.msra.mxu0 %v2300
      %2323 = vmatmul.bf16.gmra.mxu0 %v2313
      %v2324 = vpop.f32.mrf.mxu0
      %v2325 = vadd.f32 0.0, %v2324
      %v2326 = vpop.f32.mrf.mxu0
      %v2327 = vadd.f32 0.0, %v2326
      %2328 = vdwg.mxu0
      %2329 = vmatpush.bf16.msra.mxu0 0
      %2330 = vmatpush.bf16.msra.mxu0 0
      %2331 = vmatpush.bf16.msra.mxu0 0
      %2332 = vmatpush.bf16.msra.mxu0 0
      %2333 = vmatpush.bf16.msra.mxu0 0
      %2334 = vmatpush.bf16.msra.mxu0 %v2305
      %2335 = vmatpush.bf16.msra.mxu0 %v2303
      %2336 = vmatpush.bf16.msra.mxu0 %v2301
      %2337 = vmatmul.bf16.gmra.mxu0 %v2313
      %v2338 = vpop.f32.mrf.mxu0
      %v2339 = vadd.f32 0.0, %v2338
      %v2340 = vpop.f32.mrf.mxu0
      %v2341 = vadd.f32 0.0, %v2340
      %2342 = vdwg.mxu0
      %v2343 = vadd.f32 %v2276, %v2325
      %v2344 = vadd.f32 %v2277, %v2339
      %v2345 = vadd.f32 %v2278, %v2327
      %v2346 = vadd.f32 %v2279, %v2341
      %s2347 = scalar_lea.vmem %s12, 64
      %v2348 = vld [vmem:[%s2347] sm:$0xf]
      %v2349 = vld [vmem:[%s2347 + $0x4] sm:$0x3]
      %v2352 = vunpack.c.l.b16 %v2348
      %v2353 = vunpack.c.l.b16 %v2349
      %v2354 = vpack.c.b16 %v2353, %v2352
      %2355 = vrot.lane.b32.xlu0 %v1806, 111
      %v2356 = vpop.permute.xlu0 %2355
      %2357 = vrot.lane.b32.xlu0 %v1807, 111
      %v2358 = vpop.permute.xlu0 %2357
      %2359 = vrot.lane.b32.xlu0 %v1808, 111
      %v2360 = vpop.permute.xlu0 %2359
      %2361 = vrot.lane.b32.xlu0 %v1809, 111
      %v2362 = vpop.permute.xlu0 %2361
      %2363 = vrot.lane.b32.xlu0 %v1810, 111
      %v2364 = vpop.permute.xlu0 %2363
      %2365 = vrot.lane.b32.xlu0 %v1811, 111
      %v2366 = vpop.permute.xlu0 %2365
      %v2367 = vsel %vm1476, %v2356, %v2358
      %v2368 = vsel %vm1476, %v2358, %v1467
      %v2369 = vsel %vm1476, %v2360, %v2362
      %v2370 = vsel %vm1476, %v2362, %v1467
      %v2371 = vsel %vm1476, %v2364, %v2366
      %v2372 = vsel %vm1476, %v2366, %v1467
      %v2380 = vsel %vm935, %v2354, 0
      %2382 = vmatpush.bf16.msra.mxu0 0
      %2383 = vmatpush.bf16.msra.mxu0 0
      %2384 = vmatpush.bf16.msra.mxu0 0
      %2385 = vmatpush.bf16.msra.mxu0 0
      %2386 = vmatpush.bf16.msra.mxu0 0
      %2387 = vmatpush.bf16.msra.mxu0 %v2371
      %2388 = vmatpush.bf16.msra.mxu0 %v2369
      %2389 = vmatpush.bf16.msra.mxu0 %v2367
      %2390 = vmatmul.bf16.gmra.mxu0 %v2380
      %v2391 = vpop.f32.mrf.mxu0
      %v2392 = vadd.f32 0.0, %v2391
      %v2393 = vpop.f32.mrf.mxu0
      %v2394 = vadd.f32 0.0, %v2393
      %2395 = vdwg.mxu0
      %2396 = vmatpush.bf16.msra.mxu0 0
      %2397 = vmatpush.bf16.msra.mxu0 0
      %2398 = vmatpush.bf16.msra.mxu0 0
      %2399 = vmatpush.bf16.msra.mxu0 0
      %2400 = vmatpush.bf16.msra.mxu0 0
      %2401 = vmatpush.bf16.msra.mxu0 %v2372
      %2402 = vmatpush.bf16.msra.mxu0 %v2370
      %2403 = vmatpush.bf16.msra.mxu0 %v2368
      %2404 = vmatmul.bf16.gmra.mxu0 %v2380
      %v2405 = vpop.f32.mrf.mxu0
      %v2406 = vadd.f32 0.0, %v2405
      %v2407 = vpop.f32.mrf.mxu0
      %v2408 = vadd.f32 0.0, %v2407
      %2409 = vdwg.mxu0
      %v2410 = vmul.f32 %v2392, %v649
      %v2411 = vmul.f32 %v2406, %v650
      %v2412 = vmul.f32 %v2394, %v649
      %v2413 = vmul.f32 %v2408, %v650
      %v2414 = vadd.f32 %v2343, %v2410
      %v2415 = vadd.f32 %v2344, %v2411
      %v2416 = vadd.f32 %v2345, %v2412
      %v2417 = vadd.f32 %v2346, %v2413
      %2418 = vst [vmem:[%s602 + $0x30] sm:$0xff] %v2414
      %2419 = vst [vmem:[%s602 + $0x38] sm:$0xff] %v2415
      %2420 = vst [vmem:[%s602 + $0x40] sm:$0xf] %v2416
      %2421 = vst [vmem:[%s602 + $0x48] sm:$0xf] %v2417
      %v2422 = vld [vmem:[%s602] sm:$0xff]
      %v2423 = vld [vmem:[%s602 + $0x8] sm:$0xff]
      %v2424 = vld [vmem:[%s602 + $0x10] sm:$0xff]
      %v2425 = vld [vmem:[%s602 + $0x18] sm:$0xff]
      %v2426 = vld [vmem:[%s602 + $0x20] sm:$0xff]
      %v2427 = vld [vmem:[%s602 + $0x28] sm:$0xff]
      %v2428 = vld [vmem:[%s602 + $0x30] sm:$0xff]
      %v2429 = vld [vmem:[%s602 + $0x38] sm:$0xff]
      %v2430 = vld [vmem:[%s602 + $0x40] sm:$0xf]
      %v2431 = vld [vmem:[%s602 + $0x48] sm:$0xf]
      %v2432 = vld [vmem:[%s13] sm:$0xff]
      %v2433 = vld [vmem:[%s13 + $0x8] sm:$0xff]
      %v2434 = vld [vmem:[%s13 + $0x10] sm:$0xff]
      %v2435 = vld [vmem:[%s13 + $0x18] sm:$0xff]
      %v2436 = vld [vmem:[%s13 + $0x20] sm:$0xf]
      %2438 = vset.pattern.permute.xlu0 0
      %2439 = vperm.xlu0 %2438, %v2432
      %v2440 = vpop.permute.xlu0 %2439
      %2443 = vset.pattern.permute.xlu0 0
      %2444 = vperm.xlu0 %2443, %v2433
      %v2445 = vpop.permute.xlu0 %2444
      %2448 = vset.pattern.permute.xlu0 0
      %2449 = vperm.xlu0 %2448, %v2434
      %v2450 = vpop.permute.xlu0 %2449
      %2453 = vset.pattern.permute.xlu0 0
      %2454 = vperm.xlu0 %2453, %v2435
      %v2455 = vpop.permute.xlu0 %2454
      %2458 = vset.pattern.permute.xlu0 0
      %2459 = vperm.xlu0 %2458, %v2436
      %v2460 = vpop.permute.xlu0 %2459
      %v2462 = vmul.f32 %v2422, %v2440
      %v2463 = vmul.f32 %v2423, %v2440
      %v2464 = vmul.f32 %v2424, %v2445
      %v2465 = vmul.f32 %v2425, %v2445
      %v2466 = vmul.f32 %v2426, %v2450
      %v2467 = vmul.f32 %v2427, %v2450
      %v2468 = vmul.f32 %v2428, %v2455
      %v2469 = vmul.f32 %v2429, %v2455
      %v2470 = vmul.f32 %v2430, %v2460
      %v2471 = vmul.f32 %v2431, %v2460
      %v2472 = vld [vmem:[%s14] sm:$0xff]
      %v2473 = vld [vmem:[%s14 + $0x8] sm:$0xff]
      %v2474 = vld [vmem:[%s14 + $0x10] sm:$0xff]
      %v2475 = vld [vmem:[%s14 + $0x18] sm:$0xff]
      %v2476 = vld [vmem:[%s14 + $0x20] sm:$0xf]
      %2478 = vset.pattern.permute.xlu0 0
      %2479 = vperm.xlu0 %2478, %v2472
      %v2480 = vpop.permute.xlu0 %2479
      %2483 = vset.pattern.permute.xlu0 0
      %2484 = vperm.xlu0 %2483, %v2473
      %v2485 = vpop.permute.xlu0 %2484
      %2488 = vset.pattern.permute.xlu0 0
      %2489 = vperm.xlu0 %2488, %v2474
      %v2490 = vpop.permute.xlu0 %2489
      %2493 = vset.pattern.permute.xlu0 0
      %2494 = vperm.xlu0 %2493, %v2475
      %v2495 = vpop.permute.xlu0 %2494
      %2498 = vset.pattern.permute.xlu0 0
      %2499 = vperm.xlu0 %2498, %v2476
      %v2500 = vpop.permute.xlu0 %2499
      %v2502 = vadd.f32 %v2462, %v2480
      %v2503 = vadd.f32 %v2463, %v2480
      %v2504 = vadd.f32 %v2464, %v2485
      %v2505 = vadd.f32 %v2465, %v2485
      %v2506 = vadd.f32 %v2466, %v2490
      %v2507 = vadd.f32 %v2467, %v2490
      %v2508 = vadd.f32 %v2468, %v2495
      %v2509 = vadd.f32 %v2469, %v2495
      %v2510 = vadd.f32 %v2470, %v2500
      %v2511 = vadd.f32 %v2471, %v2500
      %v2512 = vmax.f32 %v2502, 0.0
      %v2513 = vmax.f32 %v2503, 0.0
      %v2514 = vmax.f32 %v2504, 0.0
      %v2515 = vmax.f32 %v2505, 0.0
      %v2516 = vmax.f32 %v2506, 0.0
      %v2517 = vmax.f32 %v2507, 0.0
      %v2518 = vmax.f32 %v2508, 0.0
      %v2519 = vmax.f32 %v2509, 0.0
      %v2520 = vmax.f32 %v2510, 0.0
      %v2521 = vmax.f32 %v2511, 0.0
      %v2522 = vld [vmem:[%s15] sm:$0xf]
      %v2523 = vld [vmem:[%s15 + $0x4] sm:$0xf]
      %v2524 = vld [vmem:[%s15 + $0x8] sm:$0xf]
      %v2525 = vld [vmem:[%s15 + $0xc] sm:$0xf]
      %v2526 = vld [vmem:[%s15 + $0x10] sm:$0xf]
      %v2527 = vld [vmem:[%s15 + $0x14] sm:$0xf]
      %v2528 = vpack.c.bf16 %v2514, %v2512
      %v2529 = vpack.c.bf16 %v2515, %v2513
      %v2530 = vpack.c.bf16 %v2518, %v2516
      %v2531 = vpack.c.bf16 %v2519, %v2517
      %v2532 = vpack.c.bf16 %v2520, %v2520
      %v2533 = vpack.c.bf16 %v2521, %v2521
      %v2540 = vunpack.c.l.b16 %v2522
      %v2541 = vunpack.c.l.b16 %v2523
      %v2542 = vunpack.c.l.b16 %v2524
      %v2543 = vunpack.c.l.b16 %v2525
      %v2544 = vunpack.c.l.b16 %v2526
      %v2545 = vunpack.c.l.b16 %v2527
      %v2546 = vpack.c.b16 %v2541, %v2540
      %v2547 = vpack.c.b16 %v2543, %v2542
      %v2548 = vpack.c.b16 %v2545, %v2544
      %vm2549 = vcmask 293888
      %v2551 = vsel %vm2549, %v2546, 0
      %v2554 = vsel %vm2549, %v2547, 0
      %v2557 = vsel %vm2549, %v2548, 0
      %vm2559 = vcmask 1041408
      %v2561 = vsel %vm2559, %v2532, 0
      %v2564 = vsel %vm2559, %v2533, 0
      %2566 = vmatpush.bf16.msra.mxu0 0
      %2567 = vmatpush.bf16.msra.mxu0 0
      %2568 = vmatpush.bf16.msra.mxu0 0
      %2569 = vmatpush.bf16.msra.mxu0 0
      %2570 = vmatpush.bf16.msra.mxu0 0
      %2571 = vmatpush.bf16.msra.mxu0 %v2561
      %2572 = vmatpush.bf16.msra.mxu0 %v2530
      %2573 = vmatpush.bf16.msra.mxu0 %v2528
      %2574 = vmatmul.bf16.gmra.mxu0 %v2551
      %v2575 = vpop.f32.mrf.mxu0
      %v2576 = vadd.f32 0.0, %v2575
      %v2577 = vpop.f32.mrf.mxu0
      %v2578 = vadd.f32 0.0, %v2577
      %2579 = vmatmul.bf16.gmra.mxu0 %v2554
      %v2580 = vpop.f32.mrf.mxu0
      %v2581 = vadd.f32 0.0, %v2580
      %v2582 = vpop.f32.mrf.mxu0
      %v2583 = vadd.f32 0.0, %v2582
      %2584 = vmatmul.bf16.gmra.mxu0 %v2557
      %v2585 = vpop.f32.mrf.mxu0
      %v2586 = vadd.f32 0.0, %v2585
      %v2587 = vpop.f32.mrf.mxu0
      %v2588 = vadd.f32 0.0, %v2587
      %2589 = vdwg.mxu0
      %2590 = vmatpush.bf16.msra.mxu0 0
      %2591 = vmatpush.bf16.msra.mxu0 0
      %2592 = vmatpush.bf16.msra.mxu0 0
      %2593 = vmatpush.bf16.msra.mxu0 0
      %2594 = vmatpush.bf16.msra.mxu0 0
      %2595 = vmatpush.bf16.msra.mxu0 %v2564
      %2596 = vmatpush.bf16.msra.mxu0 %v2531
      %2597 = vmatpush.bf16.msra.mxu0 %v2529
      %2598 = vmatmul.bf16.gmra.mxu0 %v2551
      %v2599 = vpop.f32.mrf.mxu0
      %v2600 = vadd.f32 0.0, %v2599
      %v2601 = vpop.f32.mrf.mxu0
      %v2602 = vadd.f32 0.0, %v2601
      %2603 = vmatmul.bf16.gmra.mxu0 %v2554
      %v2604 = vpop.f32.mrf.mxu0
      %v2605 = vadd.f32 0.0, %v2604
      %v2606 = vpop.f32.mrf.mxu0
      %v2607 = vadd.f32 0.0, %v2606
      %2608 = vmatmul.bf16.gmra.mxu0 %v2557
      %v2609 = vpop.f32.mrf.mxu0
      %v2610 = vadd.f32 0.0, %v2609
      %v2611 = vpop.f32.mrf.mxu0
      %v2612 = vadd.f32 0.0, %v2611
      %2613 = vdwg.mxu0
      %v2614 = vld [vmem:[%s16] sm:$0xff]
      %v2615 = vld [vmem:[%s16 + $0x8] sm:$0xff]
      %v2616 = vld [vmem:[%s16 + $0x10] sm:$0xff]
      %v2617 = vld [vmem:[%s16 + $0x18] sm:$0xff]
      %v2618 = vld [vmem:[%s16 + $0x20] sm:$0xff]
      %v2619 = vld [vmem:[%s16 + $0x28] sm:$0xff]
      %2621 = vset.pattern.permute.xlu0 0
      %2622 = vperm.xlu0 %2621, %v2614
      %v2623 = vpop.permute.xlu0 %2622
      %2626 = vset.pattern.permute.xlu0 0
      %2627 = vperm.xlu0 %2626, %v2615
      %v2628 = vpop.permute.xlu0 %2627
      %2631 = vset.pattern.permute.xlu0 0
      %2632 = vperm.xlu0 %2631, %v2616
      %v2633 = vpop.permute.xlu0 %2632
      %2636 = vset.pattern.permute.xlu0 0
      %2637 = vperm.xlu0 %2636, %v2617
      %v2638 = vpop.permute.xlu0 %2637
      %2641 = vset.pattern.permute.xlu0 0
      %2642 = vperm.xlu0 %2641, %v2618
      %v2643 = vpop.permute.xlu0 %2642
      %2646 = vset.pattern.permute.xlu0 0
      %2647 = vperm.xlu0 %2646, %v2619
      %v2648 = vpop.permute.xlu0 %2647
      %v2650 = vmul.f32 %v2576, %v2623
      %v2651 = vmul.f32 %v2600, %v2623
      %v2652 = vmul.f32 %v2578, %v2628
      %v2653 = vmul.f32 %v2602, %v2628
      %v2654 = vmul.f32 %v2581, %v2633
      %v2655 = vmul.f32 %v2605, %v2633
      %v2656 = vmul.f32 %v2583, %v2638
      %v2657 = vmul.f32 %v2607, %v2638
      %v2658 = vmul.f32 %v2586, %v2643
      %v2659 = vmul.f32 %v2610, %v2643
      %v2660 = vmul.f32 %v2588, %v2648
      %v2661 = vmul.f32 %v2612, %v2648
      %v2662 = vld [vmem:[%s17] sm:$0xff]
      %v2663 = vld [vmem:[%s17 + $0x8] sm:$0xff]
      %v2664 = vld [vmem:[%s17 + $0x10] sm:$0xff]
      %v2665 = vld [vmem:[%s17 + $0x18] sm:$0xff]
      %v2666 = vld [vmem:[%s17 + $0x20] sm:$0xff]
      %v2667 = vld [vmem:[%s17 + $0x28] sm:$0xff]
      %2669 = vset.pattern.permute.xlu0 0
      %2670 = vperm.xlu0 %2669, %v2662
      %v2671 = vpop.permute.xlu0 %2670
      %2674 = vset.pattern.permute.xlu0 0
      %2675 = vperm.xlu0 %2674, %v2663
      %v2676 = vpop.permute.xlu0 %2675
      %2679 = vset.pattern.permute.xlu0 0
      %2680 = vperm.xlu0 %2679, %v2664
      %v2681 = vpop.permute.xlu0 %2680
      %2684 = vset.pattern.permute.xlu0 0
      %2685 = vperm.xlu0 %2684, %v2665
      %v2686 = vpop.permute.xlu0 %2685
      %2689 = vset.pattern.permute.xlu0 0
      %2690 = vperm.xlu0 %2689, %v2666
      %v2691 = vpop.permute.xlu0 %2690
      %2694 = vset.pattern.permute.xlu0 0
      %2695 = vperm.xlu0 %2694, %v2667
      %v2696 = vpop.permute.xlu0 %2695
      %v2698 = vadd.f32 %v2650, %v2671
      %v2699 = vadd.f32 %v2651, %v2671
      %v2700 = vadd.f32 %v2652, %v2676
      %v2701 = vadd.f32 %v2653, %v2676
      %v2702 = vadd.f32 %v2654, %v2681
      %v2703 = vadd.f32 %v2655, %v2681
      %v2704 = vadd.f32 %v2656, %v2686
      %v2705 = vadd.f32 %v2657, %v2686
      %v2706 = vadd.f32 %v2658, %v2691
      %v2707 = vadd.f32 %v2659, %v2691
      %v2708 = vadd.f32 %v2660, %v2696
      %v2709 = vadd.f32 %v2661, %v2696
      %v2710 = vmax.f32 %v2698, 0.0
      %v2711 = vmax.f32 %v2699, 0.0
      %v2712 = vmax.f32 %v2700, 0.0
      %v2713 = vmax.f32 %v2701, 0.0
      %v2714 = vmax.f32 %v2702, 0.0
      %v2715 = vmax.f32 %v2703, 0.0
      %v2716 = vmax.f32 %v2704, 0.0
      %v2717 = vmax.f32 %v2705, 0.0
      %v2718 = vmax.f32 %v2706, 0.0
      %v2719 = vmax.f32 %v2707, 0.0
      %v2720 = vmax.f32 %v2708, 0.0
      %v2721 = vmax.f32 %v2709, 0.0
      %v2722 = vld [vmem:[%s18] sm:$0xf]
      %v2723 = vld [vmem:[%s18 + $0x4] sm:$0x3]
      %v2724 = vpack.c.bf16 %v2712, %v2710
      %v2725 = vpack.c.bf16 %v2713, %v2711
      %v2726 = vpack.c.bf16 %v2716, %v2714
      %v2727 = vpack.c.bf16 %v2717, %v2715
      %v2728 = vpack.c.bf16 %v2720, %v2718
      %v2729 = vpack.c.bf16 %v2721, %v2719
      %v2732 = vunpack.c.l.b16 %v2722
      %v2733 = vunpack.c.l.b16 %v2723
      %v2734 = vpack.c.b16 %v2733, %v2732
      %2741 = vrot.lane.b32.xlu0 %v2724, 17
      %v2742 = vpop.permute.xlu0 %2741
      %2743 = vrot.lane.b32.xlu0 %v2725, 17
      %v2744 = vpop.permute.xlu0 %2743
      %2745 = vrot.lane.b32.xlu0 %v2726, 17
      %v2746 = vpop.permute.xlu0 %2745
      %2747 = vrot.lane.b32.xlu0 %v2727, 17
      %v2748 = vpop.permute.xlu0 %2747
      %2749 = vrot.lane.b32.xlu0 %v2728, 17
      %v2750 = vpop.permute.xlu0 %2749
      %2751 = vrot.lane.b32.xlu0 %v2729, 17
      %v2752 = vpop.permute.xlu0 %2751
      %v2753 = vsel %vm922, %v909, %v2742
      %v2754 = vsel %vm922, %v2742, %v2744
      %v2755 = vsel %vm922, %v909, %v2746
      %v2756 = vsel %vm922, %v2746, %v2748
      %v2757 = vsel %vm922, %v909, %v2750
      %v2758 = vsel %vm922, %v2750, %v2752
      %v2766 = vsel %vm935, %v2734, 0
      %2768 = vmatpush.bf16.msra.mxu0 0
      %2769 = vmatpush.bf16.msra.mxu0 0
      %2770 = vmatpush.bf16.msra.mxu0 0
      %2771 = vmatpush.bf16.msra.mxu0 0
      %2772 = vmatpush.bf16.msra.mxu0 0
      %2773 = vmatpush.bf16.msra.mxu0 %v2757
      %2774 = vmatpush.bf16.msra.mxu0 %v2755
      %2775 = vmatpush.bf16.msra.mxu0 %v2753
      %2776 = vmatmul.bf16.gmra.mxu0 %v2766
      %v2777 = vpop.f32.mrf.mxu0
      %v2778 = vadd.f32 0.0, %v2777
      %v2779 = vpop.f32.mrf.mxu0
      %v2780 = vadd.f32 0.0, %v2779
      %2781 = vdwg.mxu0
      %2782 = vmatpush.bf16.msra.mxu0 0
      %2783 = vmatpush.bf16.msra.mxu0 0
      %2784 = vmatpush.bf16.msra.mxu0 0
      %2785 = vmatpush.bf16.msra.mxu0 0
      %2786 = vmatpush.bf16.msra.mxu0 0
      %2787 = vmatpush.bf16.msra.mxu0 %v2758
      %2788 = vmatpush.bf16.msra.mxu0 %v2756
      %2789 = vmatpush.bf16.msra.mxu0 %v2754
      %2790 = vmatmul.bf16.gmra.mxu0 %v2766
      %v2791 = vpop.f32.mrf.mxu0
      %v2792 = vadd.f32 0.0, %v2791
      %v2793 = vpop.f32.mrf.mxu0
      %v2794 = vadd.f32 0.0, %v2793
      %2795 = vdwg.mxu0
      %v2796 = vmul.f32 %v2778, %v643
      %v2797 = vmul.f32 %v2792, %v644
      %v2798 = vmul.f32 %v2780, %v643
      %v2799 = vmul.f32 %v2794, %v644
      %v2800 = vadd.f32 %v2796, 0.0
      %v2801 = vadd.f32 %v2797, 0.0
      %v2802 = vadd.f32 %v2798, 0.0
      %v2803 = vadd.f32 %v2799, 0.0
      %s2804 = scalar_lea.vmem %s18, 8
      %v2805 = vld [vmem:[%s2804] sm:$0xf]
      %v2806 = vld [vmem:[%s2804 + $0x4] sm:$0x3]
      %v2809 = vunpack.c.l.b16 %v2805
      %v2810 = vunpack.c.l.b16 %v2806
      %v2811 = vpack.c.b16 %v2810, %v2809
      %2812 = vrot.lane.b32.xlu0 %v2724, 16
      %v2813 = vpop.permute.xlu0 %2812
      %2814 = vrot.lane.b32.xlu0 %v2725, 16
      %v2815 = vpop.permute.xlu0 %2814
      %2816 = vrot.lane.b32.xlu0 %v2726, 16
      %v2817 = vpop.permute.xlu0 %2816
      %2818 = vrot.lane.b32.xlu0 %v2727, 16
      %v2819 = vpop.permute.xlu0 %2818
      %2820 = vrot.lane.b32.xlu0 %v2728, 16
      %v2821 = vpop.permute.xlu0 %2820
      %2822 = vrot.lane.b32.xlu0 %v2729, 16
      %v2823 = vpop.permute.xlu0 %2822
      %v2824 = vsel %vm997, %v984, %v2813
      %v2825 = vsel %vm997, %v2813, %v2815
      %v2826 = vsel %vm997, %v984, %v2817
      %v2827 = vsel %vm997, %v2817, %v2819
      %v2828 = vsel %vm997, %v984, %v2821
      %v2829 = vsel %vm997, %v2821, %v2823
      %v2837 = vsel %vm935, %v2811, 0
      %2839 = vmatpush.bf16.msra.mxu0 0
      %2840 = vmatpush.bf16.msra.mxu0 0
      %2841 = vmatpush.bf16.msra.mxu0 0
      %2842 = vmatpush.bf16.msra.mxu0 0
      %2843 = vmatpush.bf16.msra.mxu0 0
      %2844 = vmatpush.bf16.msra.mxu0 %v2828
      %2845 = vmatpush.bf16.msra.mxu0 %v2826
      %2846 = vmatpush.bf16.msra.mxu0 %v2824
      %2847 = vmatmul.bf16.gmra.mxu0 %v2837
      %v2848 = vpop.f32.mrf.mxu0
      %v2849 = vadd.f32 0.0, %v2848
      %v2850 = vpop.f32.mrf.mxu0
      %v2851 = vadd.f32 0.0, %v2850
      %2852 = vdwg.mxu0
      %2853 = vmatpush.bf16.msra.mxu0 0
      %2854 = vmatpush.bf16.msra.mxu0 0
      %2855 = vmatpush.bf16.msra.mxu0 0
      %2856 = vmatpush.bf16.msra.mxu0 0
      %2857 = vmatpush.bf16.msra.mxu0 0
      %2858 = vmatpush.bf16.msra.mxu0 %v2829
      %2859 = vmatpush.bf16.msra.mxu0 %v2827
      %2860 = vmatpush.bf16.msra.mxu0 %v2825
      %2861 = vmatmul.bf16.gmra.mxu0 %v2837
      %v2862 = vpop.f32.mrf.mxu0
      %v2863 = vadd.f32 0.0, %v2862
      %v2864 = vpop.f32.mrf.mxu0
      %v2865 = vadd.f32 0.0, %v2864
      %2866 = vdwg.mxu0
      %v2867 = vadd.f32 %v2800, %v2849
      %v2868 = vadd.f32 %v2801, %v2863
      %v2869 = vadd.f32 %v2802, %v2851
      %v2870 = vadd.f32 %v2803, %v2865
      %s2871 = scalar_lea.vmem %s18, 16
      %v2872 = vld [vmem:[%s2871] sm:$0xf]
      %v2873 = vld [vmem:[%s2871 + $0x4] sm:$0x3]
      %v2876 = vunpack.c.l.b16 %v2872
      %v2877 = vunpack.c.l.b16 %v2873
      %v2878 = vpack.c.b16 %v2877, %v2876
      %2879 = vrot.lane.b32.xlu0 %v2724, 15
      %v2880 = vpop.permute.xlu0 %2879
      %2881 = vrot.lane.b32.xlu0 %v2725, 15
      %v2882 = vpop.permute.xlu0 %2881
      %2883 = vrot.lane.b32.xlu0 %v2726, 15
      %v2884 = vpop.permute.xlu0 %2883
      %2885 = vrot.lane.b32.xlu0 %v2727, 15
      %v2886 = vpop.permute.xlu0 %2885
      %2887 = vrot.lane.b32.xlu0 %v2728, 15
      %v2888 = vpop.permute.xlu0 %2887
      %2889 = vrot.lane.b32.xlu0 %v2729, 15
      %v2890 = vpop.permute.xlu0 %2889
      %v2891 = vsel %vm1067, %v1054, %v2880
      %v2892 = vsel %vm1067, %v2880, %v2882
      %v2893 = vsel %vm1067, %v1054, %v2884
      %v2894 = vsel %vm1067, %v2884, %v2886
      %v2895 = vsel %vm1067, %v1054, %v2888
      %v2896 = vsel %vm1067, %v2888, %v2890
      %v2904 = vsel %vm935, %v2878, 0
      %2906 = vmatpush.bf16.msra.mxu0 0
      %2907 = vmatpush.bf16.msra.mxu0 0
      %2908 = vmatpush.bf16.msra.mxu0 0
      %2909 = vmatpush.bf16.msra.mxu0 0
      %2910 = vmatpush.bf16.msra.mxu0 0
      %2911 = vmatpush.bf16.msra.mxu0 %v2895
      %2912 = vmatpush.bf16.msra.mxu0 %v2893
      %2913 = vmatpush.bf16.msra.mxu0 %v2891
      %2914 = vmatmul.bf16.gmra.mxu0 %v2904
      %v2915 = vpop.f32.mrf.mxu0
      %v2916 = vadd.f32 0.0, %v2915
      %v2917 = vpop.f32.mrf.mxu0
      %v2918 = vadd.f32 0.0, %v2917
      %2919 = vdwg.mxu0
      %2920 = vmatpush.bf16.msra.mxu0 0
      %2921 = vmatpush.bf16.msra.mxu0 0
      %2922 = vmatpush.bf16.msra.mxu0 0
      %2923 = vmatpush.bf16.msra.mxu0 0
      %2924 = vmatpush.bf16.msra.mxu0 0
      %2925 = vmatpush.bf16.msra.mxu0 %v2896
      %2926 = vmatpush.bf16.msra.mxu0 %v2894
      %2927 = vmatpush.bf16.msra.mxu0 %v2892
      %2928 = vmatmul.bf16.gmra.mxu0 %v2904
      %v2929 = vpop.f32.mrf.mxu0
      %v2930 = vadd.f32 0.0, %v2929
      %v2931 = vpop.f32.mrf.mxu0
      %v2932 = vadd.f32 0.0, %v2931
      %2933 = vdwg.mxu0
      %v2934 = vmul.f32 %v2916, %v649
      %v2935 = vmul.f32 %v2930, %v650
      %v2936 = vmul.f32 %v2918, %v649
      %v2937 = vmul.f32 %v2932, %v650
      %v2938 = vadd.f32 %v2867, %v2934
      %v2939 = vadd.f32 %v2868, %v2935
      %v2940 = vadd.f32 %v2869, %v2936
      %v2941 = vadd.f32 %v2870, %v2937
      %s2942 = scalar_lea.vmem %s18, 24
      %v2943 = vld [vmem:[%s2942] sm:$0xf]
      %v2944 = vld [vmem:[%s2942 + $0x4] sm:$0x3]
      %v2947 = vunpack.c.l.b16 %v2943
      %v2948 = vunpack.c.l.b16 %v2944
      %v2949 = vpack.c.b16 %v2948, %v2947
      %2950 = vrot.lane.b32.xlu0 %v2724, 1
      %v2951 = vpop.permute.xlu0 %2950
      %2952 = vrot.lane.b32.xlu0 %v2725, 1
      %v2953 = vpop.permute.xlu0 %2952
      %2954 = vrot.lane.b32.xlu0 %v2726, 1
      %v2955 = vpop.permute.xlu0 %2954
      %2956 = vrot.lane.b32.xlu0 %v2727, 1
      %v2957 = vpop.permute.xlu0 %2956
      %2958 = vrot.lane.b32.xlu0 %v2728, 1
      %v2959 = vpop.permute.xlu0 %2958
      %2960 = vrot.lane.b32.xlu0 %v2729, 1
      %v2961 = vpop.permute.xlu0 %2960
      %v2962 = vsel %vm1141, %v1128, %v2951
      %v2963 = vsel %vm1141, %v2951, %v2953
      %v2964 = vsel %vm1141, %v1128, %v2955
      %v2965 = vsel %vm1141, %v2955, %v2957
      %v2966 = vsel %vm1141, %v1128, %v2959
      %v2967 = vsel %vm1141, %v2959, %v2961
      %v2975 = vsel %vm935, %v2949, 0
      %2977 = vmatpush.bf16.msra.mxu0 0
      %2978 = vmatpush.bf16.msra.mxu0 0
      %2979 = vmatpush.bf16.msra.mxu0 0
      %2980 = vmatpush.bf16.msra.mxu0 0
      %2981 = vmatpush.bf16.msra.mxu0 0
      %2982 = vmatpush.bf16.msra.mxu0 %v2966
      %2983 = vmatpush.bf16.msra.mxu0 %v2964
      %2984 = vmatpush.bf16.msra.mxu0 %v2962
      %2985 = vmatmul.bf16.gmra.mxu0 %v2975
      %v2986 = vpop.f32.mrf.mxu0
      %v2987 = vadd.f32 0.0, %v2986
      %v2988 = vpop.f32.mrf.mxu0
      %v2989 = vadd.f32 0.0, %v2988
      %2990 = vdwg.mxu0
      %2991 = vmatpush.bf16.msra.mxu0 0
      %2992 = vmatpush.bf16.msra.mxu0 0
      %2993 = vmatpush.bf16.msra.mxu0 0
      %2994 = vmatpush.bf16.msra.mxu0 0
      %2995 = vmatpush.bf16.msra.mxu0 0
      %2996 = vmatpush.bf16.msra.mxu0 %v2967
      %2997 = vmatpush.bf16.msra.mxu0 %v2965
      %2998 = vmatpush.bf16.msra.mxu0 %v2963
      %2999 = vmatmul.bf16.gmra.mxu0 %v2975
      %v3000 = vpop.f32.mrf.mxu0
      %v3001 = vadd.f32 0.0, %v3000
      %v3002 = vpop.f32.mrf.mxu0
      %v3003 = vadd.f32 0.0, %v3002
      %3004 = vdwg.mxu0
      %v3005 = vmul.f32 %v2987, %v643
      %v3006 = vmul.f32 %v3001, %v644
      %v3007 = vmul.f32 %v2989, %v643
      %v3008 = vmul.f32 %v3003, %v644
      %v3009 = vadd.f32 %v2938, %v3005
      %v3010 = vadd.f32 %v2939, %v3006
      %v3011 = vadd.f32 %v2940, %v3007
      %v3012 = vadd.f32 %v2941, %v3008
      %s3013 = scalar_lea.vmem %s18, 32
      %v3014 = vld [vmem:[%s3013] sm:$0xf]
      %v3015 = vld [vmem:[%s3013 + $0x4] sm:$0x3]
      %v3018 = vunpack.c.l.b16 %v3014
      %v3019 = vunpack.c.l.b16 %v3015
      %v3020 = vpack.c.b16 %v3019, %v3018
      %v3022 = vsel %vm935, %v3020, 0
      %3024 = vmatpush.bf16.msra.mxu0 0
      %3025 = vmatpush.bf16.msra.mxu0 0
      %3026 = vmatpush.bf16.msra.mxu0 0
      %3027 = vmatpush.bf16.msra.mxu0 0
      %3028 = vmatpush.bf16.msra.mxu0 0
      %3029 = vmatpush.bf16.msra.mxu0 %v2728
      %3030 = vmatpush.bf16.msra.mxu0 %v2726
      %3031 = vmatpush.bf16.msra.mxu0 %v2724
      %3032 = vmatmul.bf16.gmra.mxu0 %v3022
      %v3033 = vpop.f32.mrf.mxu0
      %v3034 = vadd.f32 0.0, %v3033
      %v3035 = vpop.f32.mrf.mxu0
      %v3036 = vadd.f32 0.0, %v3035
      %3037 = vdwg.mxu0
      %3038 = vmatpush.bf16.msra.mxu0 0
      %3039 = vmatpush.bf16.msra.mxu0 0
      %3040 = vmatpush.bf16.msra.mxu0 0
      %3041 = vmatpush.bf16.msra.mxu0 0
      %3042 = vmatpush.bf16.msra.mxu0 0
      %3043 = vmatpush.bf16.msra.mxu0 %v2729
      %3044 = vmatpush.bf16.msra.mxu0 %v2727
      %3045 = vmatpush.bf16.msra.mxu0 %v2725
      %3046 = vmatmul.bf16.gmra.mxu0 %v3022
      %v3047 = vpop.f32.mrf.mxu0
      %v3048 = vadd.f32 0.0, %v3047
      %v3049 = vpop.f32.mrf.mxu0
      %v3050 = vadd.f32 0.0, %v3049
      %3051 = vdwg.mxu0
      %v3052 = vadd.f32 %v3009, %v3034
      %v3053 = vadd.f32 %v3010, %v3048
      %v3054 = vadd.f32 %v3011, %v3036
      %v3055 = vadd.f32 %v3012, %v3050
      %s3056 = scalar_lea.vmem %s18, 40
      %v3057 = vld [vmem:[%s3056] sm:$0xf]
      %v3058 = vld [vmem:[%s3056 + $0x4] sm:$0x3]
      %v3061 = vunpack.c.l.b16 %v3057
      %v3062 = vunpack.c.l.b16 %v3058
      %v3063 = vpack.c.b16 %v3062, %v3061
      %3064 = vrot.lane.b32.xlu0 %v2724, 127
      %v3065 = vpop.permute.xlu0 %3064
      %3066 = vrot.lane.b32.xlu0 %v2725, 127
      %v3067 = vpop.permute.xlu0 %3066
      %3068 = vrot.lane.b32.xlu0 %v2726, 127
      %v3069 = vpop.permute.xlu0 %3068
      %3070 = vrot.lane.b32.xlu0 %v2727, 127
      %v3071 = vpop.permute.xlu0 %3070
      %3072 = vrot.lane.b32.xlu0 %v2728, 127
      %v3073 = vpop.permute.xlu0 %3072
      %3074 = vrot.lane.b32.xlu0 %v2729, 127
      %v3075 = vpop.permute.xlu0 %3074
      %v3076 = vsel %vm1258, %v3065, %v3067
      %v3077 = vsel %vm1258, %v3067, %v1249
      %v3078 = vsel %vm1258, %v3069, %v3071
      %v3079 = vsel %vm1258, %v3071, %v1249
      %v3080 = vsel %vm1258, %v3073, %v3075
      %v3081 = vsel %vm1258, %v3075, %v1249
      %v3089 = vsel %vm935, %v3063, 0
      %3091 = vmatpush.bf16.msra.mxu0 0
      %3092 = vmatpush.bf16.msra.mxu0 0
      %3093 = vmatpush.bf16.msra.mxu0 0
      %3094 = vmatpush.bf16.msra.mxu0 0
      %3095 = vmatpush.bf16.msra.mxu0 0
      %3096 = vmatpush.bf16.msra.mxu0 %v3080
      %3097 = vmatpush.bf16.msra.mxu0 %v3078
      %3098 = vmatpush.bf16.msra.mxu0 %v3076
      %3099 = vmatmul.bf16.gmra.mxu0 %v3089
      %v3100 = vpop.f32.mrf.mxu0
      %v3101 = vadd.f32 0.0, %v3100
      %v3102 = vpop.f32.mrf.mxu0
      %v3103 = vadd.f32 0.0, %v3102
      %3104 = vdwg.mxu0
      %3105 = vmatpush.bf16.msra.mxu0 0
      %3106 = vmatpush.bf16.msra.mxu0 0
      %3107 = vmatpush.bf16.msra.mxu0 0
      %3108 = vmatpush.bf16.msra.mxu0 0
      %3109 = vmatpush.bf16.msra.mxu0 0
      %3110 = vmatpush.bf16.msra.mxu0 %v3081
      %3111 = vmatpush.bf16.msra.mxu0 %v3079
      %3112 = vmatpush.bf16.msra.mxu0 %v3077
      %3113 = vmatmul.bf16.gmra.mxu0 %v3089
      %v3114 = vpop.f32.mrf.mxu0
      %v3115 = vadd.f32 0.0, %v3114
      %v3116 = vpop.f32.mrf.mxu0
      %v3117 = vadd.f32 0.0, %v3116
      %3118 = vdwg.mxu0
      %v3119 = vmul.f32 %v3101, %v649
      %v3120 = vmul.f32 %v3115, %v650
      %v3121 = vmul.f32 %v3103, %v649
      %v3122 = vmul.f32 %v3117, %v650
      %v3123 = vadd.f32 %v3052, %v3119
      %v3124 = vadd.f32 %v3053, %v3120
      %v3125 = vadd.f32 %v3054, %v3121
      %v3126 = vadd.f32 %v3055, %v3122
      %s3127 = scalar_lea.vmem %s18, 48
      %v3128 = vld [vmem:[%s3127] sm:$0xf]
      %v3129 = vld [vmem:[%s3127 + $0x4] sm:$0x3]
      %v3132 = vunpack.c.l.b16 %v3128
      %v3133 = vunpack.c.l.b16 %v3129
      %v3134 = vpack.c.b16 %v3133, %v3132
      %3135 = vrot.lane.b32.xlu0 %v2724, 113
      %v3136 = vpop.permute.xlu0 %3135
      %3137 = vrot.lane.b32.xlu0 %v2725, 113
      %v3138 = vpop.permute.xlu0 %3137
      %3139 = vrot.lane.b32.xlu0 %v2726, 113
      %v3140 = vpop.permute.xlu0 %3139
      %3141 = vrot.lane.b32.xlu0 %v2727, 113
      %v3142 = vpop.permute.xlu0 %3141
      %3143 = vrot.lane.b32.xlu0 %v2728, 113
      %v3144 = vpop.permute.xlu0 %3143
      %3145 = vrot.lane.b32.xlu0 %v2729, 113
      %v3146 = vpop.permute.xlu0 %3145
      %v3147 = vsel %vm1332, %v3136, %v3138
      %v3148 = vsel %vm1332, %v3138, %v1323
      %v3149 = vsel %vm1332, %v3140, %v3142
      %v3150 = vsel %vm1332, %v3142, %v1323
      %v3151 = vsel %vm1332, %v3144, %v3146
      %v3152 = vsel %vm1332, %v3146, %v1323
      %v3160 = vsel %vm935, %v3134, 0
      %3162 = vmatpush.bf16.msra.mxu0 0
      %3163 = vmatpush.bf16.msra.mxu0 0
      %3164 = vmatpush.bf16.msra.mxu0 0
      %3165 = vmatpush.bf16.msra.mxu0 0
      %3166 = vmatpush.bf16.msra.mxu0 0
      %3167 = vmatpush.bf16.msra.mxu0 %v3151
      %3168 = vmatpush.bf16.msra.mxu0 %v3149
      %3169 = vmatpush.bf16.msra.mxu0 %v3147
      %3170 = vmatmul.bf16.gmra.mxu0 %v3160
      %v3171 = vpop.f32.mrf.mxu0
      %v3172 = vadd.f32 0.0, %v3171
      %v3173 = vpop.f32.mrf.mxu0
      %v3174 = vadd.f32 0.0, %v3173
      %3175 = vdwg.mxu0
      %3176 = vmatpush.bf16.msra.mxu0 0
      %3177 = vmatpush.bf16.msra.mxu0 0
      %3178 = vmatpush.bf16.msra.mxu0 0
      %3179 = vmatpush.bf16.msra.mxu0 0
      %3180 = vmatpush.bf16.msra.mxu0 0
      %3181 = vmatpush.bf16.msra.mxu0 %v3152
      %3182 = vmatpush.bf16.msra.mxu0 %v3150
      %3183 = vmatpush.bf16.msra.mxu0 %v3148
      %3184 = vmatmul.bf16.gmra.mxu0 %v3160
      %v3185 = vpop.f32.mrf.mxu0
      %v3186 = vadd.f32 0.0, %v3185
      %v3187 = vpop.f32.mrf.mxu0
      %v3188 = vadd.f32 0.0, %v3187
      %3189 = vdwg.mxu0
      %v3190 = vmul.f32 %v3172, %v643
      %v3191 = vmul.f32 %v3186, %v644
      %v3192 = vmul.f32 %v3174, %v643
      %v3193 = vmul.f32 %v3188, %v644
      %v3194 = vadd.f32 %v3123, %v3190
      %v3195 = vadd.f32 %v3124, %v3191
      %v3196 = vadd.f32 %v3125, %v3192
      %v3197 = vadd.f32 %v3126, %v3193
      %s3198 = scalar_lea.vmem %s18, 56
      %v3199 = vld [vmem:[%s3198] sm:$0xf]
      %v3200 = vld [vmem:[%s3198 + $0x4] sm:$0x3]
      %v3203 = vunpack.c.l.b16 %v3199
      %v3204 = vunpack.c.l.b16 %v3200
      %v3205 = vpack.c.b16 %v3204, %v3203
      %3206 = vrot.lane.b32.xlu0 %v2724, 112
      %v3207 = vpop.permute.xlu0 %3206
      %3208 = vrot.lane.b32.xlu0 %v2725, 112
      %v3209 = vpop.permute.xlu0 %3208
      %3210 = vrot.lane.b32.xlu0 %v2726, 112
      %v3211 = vpop.permute.xlu0 %3210
      %3212 = vrot.lane.b32.xlu0 %v2727, 112
      %v3213 = vpop.permute.xlu0 %3212
      %3214 = vrot.lane.b32.xlu0 %v2728, 112
      %v3215 = vpop.permute.xlu0 %3214
      %3216 = vrot.lane.b32.xlu0 %v2729, 112
      %v3217 = vpop.permute.xlu0 %3216
      %v3218 = vsel %vm1406, %v3207, %v3209
      %v3219 = vsel %vm1406, %v3209, %v1397
      %v3220 = vsel %vm1406, %v3211, %v3213
      %v3221 = vsel %vm1406, %v3213, %v1397
      %v3222 = vsel %vm1406, %v3215, %v3217
      %v3223 = vsel %vm1406, %v3217, %v1397
      %v3231 = vsel %vm935, %v3205, 0
      %3233 = vmatpush.bf16.msra.mxu0 0
      %3234 = vmatpush.bf16.msra.mxu0 0
      %3235 = vmatpush.bf16.msra.mxu0 0
      %3236 = vmatpush.bf16.msra.mxu0 0
      %3237 = vmatpush.bf16.msra.mxu0 0
      %3238 = vmatpush.bf16.msra.mxu0 %v3222
      %3239 = vmatpush.bf16.msra.mxu0 %v3220
      %3240 = vmatpush.bf16.msra.mxu0 %v3218
      %3241 = vmatmul.bf16.gmra.mxu0 %v3231
      %v3242 = vpop.f32.mrf.mxu0
      %v3243 = vadd.f32 0.0, %v3242
      %v3244 = vpop.f32.mrf.mxu0
      %v3245 = vadd.f32 0.0, %v3244
      %3246 = vdwg.mxu0
      %3247 = vmatpush.bf16.msra.mxu0 0
      %3248 = vmatpush.bf16.msra.mxu0 0
      %3249 = vmatpush.bf16.msra.mxu0 0
      %3250 = vmatpush.bf16.msra.mxu0 0
      %3251 = vmatpush.bf16.msra.mxu0 0
      %3252 = vmatpush.bf16.msra.mxu0 %v3223
      %3253 = vmatpush.bf16.msra.mxu0 %v3221
      %3254 = vmatpush.bf16.msra.mxu0 %v3219
      %3255 = vmatmul.bf16.gmra.mxu0 %v3231
      %v3256 = vpop.f32.mrf.mxu0
      %v3257 = vadd.f32 0.0, %v3256
      %v3258 = vpop.f32.mrf.mxu0
      %v3259 = vadd.f32 0.0, %v3258
      %3260 = vdwg.mxu0
      %v3261 = vadd.f32 %v3194, %v3243
      %v3262 = vadd.f32 %v3195, %v3257
      %v3263 = vadd.f32 %v3196, %v3245
      %v3264 = vadd.f32 %v3197, %v3259
      %s3265 = scalar_lea.vmem %s18, 64
      %v3266 = vld [vmem:[%s3265] sm:$0xf]
      %v3267 = vld [vmem:[%s3265 + $0x4] sm:$0x3]
      %v3270 = vunpack.c.l.b16 %v3266
      %v3271 = vunpack.c.l.b16 %v3267
      %v3272 = vpack.c.b16 %v3271, %v3270
      %3273 = vrot.lane.b32.xlu0 %v2724, 111
      %v3274 = vpop.permute.xlu0 %3273
      %3275 = vrot.lane.b32.xlu0 %v2725, 111
      %v3276 = vpop.permute.xlu0 %3275
      %3277 = vrot.lane.b32.xlu0 %v2726, 111
      %v3278 = vpop.permute.xlu0 %3277
      %3279 = vrot.lane.b32.xlu0 %v2727, 111
      %v3280 = vpop.permute.xlu0 %3279
      %3281 = vrot.lane.b32.xlu0 %v2728, 111
      %v3282 = vpop.permute.xlu0 %3281
      %3283 = vrot.lane.b32.xlu0 %v2729, 111
      %v3284 = vpop.permute.xlu0 %3283
      %v3285 = vsel %vm1476, %v3274, %v3276
      %v3286 = vsel %vm1476, %v3276, %v1467
      %v3287 = vsel %vm1476, %v3278, %v3280
      %v3288 = vsel %vm1476, %v3280, %v1467
      %v3289 = vsel %vm1476, %v3282, %v3284
      %v3290 = vsel %vm1476, %v3284, %v1467
      %v3298 = vsel %vm935, %v3272, 0
      %3300 = vmatpush.bf16.msra.mxu0 0
      %3301 = vmatpush.bf16.msra.mxu0 0
      %3302 = vmatpush.bf16.msra.mxu0 0
      %3303 = vmatpush.bf16.msra.mxu0 0
      %3304 = vmatpush.bf16.msra.mxu0 0
      %3305 = vmatpush.bf16.msra.mxu0 %v3289
      %3306 = vmatpush.bf16.msra.mxu0 %v3287
      %3307 = vmatpush.bf16.msra.mxu0 %v3285
      %3308 = vmatmul.bf16.gmra.mxu0 %v3298
      %v3309 = vpop.f32.mrf.mxu0
      %v3310 = vadd.f32 0.0, %v3309
      %v3311 = vpop.f32.mrf.mxu0
      %v3312 = vadd.f32 0.0, %v3311
      %3313 = vdwg.mxu0
      %3314 = vmatpush.bf16.msra.mxu0 0
      %3315 = vmatpush.bf16.msra.mxu0 0
      %3316 = vmatpush.bf16.msra.mxu0 0
      %3317 = vmatpush.bf16.msra.mxu0 0
      %3318 = vmatpush.bf16.msra.mxu0 0
      %3319 = vmatpush.bf16.msra.mxu0 %v3290
      %3320 = vmatpush.bf16.msra.mxu0 %v3288
      %3321 = vmatpush.bf16.msra.mxu0 %v3286
      %3322 = vmatmul.bf16.gmra.mxu0 %v3298
      %v3323 = vpop.f32.mrf.mxu0
      %v3324 = vadd.f32 0.0, %v3323
      %v3325 = vpop.f32.mrf.mxu0
      %v3326 = vadd.f32 0.0, %v3325
      %3327 = vdwg.mxu0
      %v3328 = vmul.f32 %v3310, %v649
      %v3329 = vmul.f32 %v3324, %v650
      %v3330 = vmul.f32 %v3312, %v649
      %v3331 = vmul.f32 %v3326, %v650
      %v3332 = vadd.f32 %v3261, %v3328
      %v3333 = vadd.f32 %v3262, %v3329
      %v3334 = vadd.f32 %v3263, %v3330
      %v3335 = vadd.f32 %v3264, %v3331
      %v3340 = vrot.slane %v3332, 4
      %v3341 = vrot.slane %v3333, 4
      %v3342 = vrot.slane %v3334, 4
      %v3343 = vsel %vm1532, %v3340, %v3342
      %v3344 = vrot.slane %v3335, 4
      %v3345 = vsel %vm1532, %v3341, %v3344
      %3350 = vst [vmem:[%s602 + $0x40] sm:$0xf0] %v3340
      %3351 = vst [vmem:[%s602 + $0x48] sm:$0xf0] %v3341
      %3352 = vst [vmem:[%s602 + $0x50] sm:$0xff] %v3343
      %3353 = vst [vmem:[%s602 + $0x58] sm:$0xff] %v3345
      %p3354 = scmp.lt.s32.totalorder %s30, 1
      %s3355 = scalar_select %p3354, %s30, 1
      %s3356 = smul.addr %s3355, 12
      %s3357 = smul.addr %s3356, 8
      %s3358 = scalar_lea.vmem %s19, %s3357
      // Predicated region
      $region97: #{dense_block_fwd.1} parent=95 // pred_check
        %p3359 = pneg %p452
      $region98: #{dense_block_fwd.1} parent=95 // pred_check_branch
        %3361 = sbr.rel (%p3359) target = $region100
      $region99: #{dense_block_fwd.1} parent=95 // pred_region
        _
      $region100: #{dense_block_fwd.1} parent=95 // pred_fallthru
        _
    $region96: #{dense_block_fwd.1} parent=5 // pred_fallthru
      _
    %p3362 = scmp.le.s32.totalorder 2, %s25
    // Predicated region
    $region101: #{dense_block_fwd.1} parent=5 // pred_check
      %p3363 = pneg %p3362
    $region102: #{dense_block_fwd.1} parent=5 // pred_check_branch
      %3365 = sbr.rel (%p3363) target = $region104
    $region103: #{dense_block_fwd.1} parent=5 // pred_region
      %s3366 = ssub.s32 %s25, 2
      // Predicated region
      $region105: #{dense_block_fwd.1} parent=103 // pred_check
        %p3367 = pneg %p458
      $region106: #{dense_block_fwd.1} parent=103 // pred_check_branch
        %3369 = sbr.rel (%p3367) target = $region108
      $region107: #{dense_block_fwd.1} parent=103 // pred_region
        %p3370 = scmp.lt.s32.totalorder %s31, 1
        %s3371 = scalar_select %p3370, %s31, 1
        %s3372 = smul.addr %s3371, 12
        %s3373 = smul.addr %s3372, 8
        %s3374 = scalar_lea.vmem %s19, %s3373
      $region108: #{dense_block_fwd.1} parent=103 // pred_fallthru
        _
    $region104: #{dense_block_fwd.1} parent=5 // pred_fallthru
      _
  $region6: #{dense_block_fwd.1} parent=0 // loop_footer
    %s29 = sadd.s32 1, %s25
  $region7: #{dense_block_fwd.1} parent=0 // loop_footer_branch
    %24 = sbr.rel target = $region3
  $region8: #{dense_block_fwd.1} parent=0 // loop_exit
    _

</llo_original>
